<compile_context>
chip_gen: v6e
topology: v6e:2x2x1
jax: 0.10.0
libtpu: 0.0.40
codegen_flags: <defaults>
</compile_context>

<pallas_src>
import math

import jax
import jax.numpy as jnp
import numpy as np
from jax.experimental import pallas as pl
from jax.experimental.pallas import tpu as pltpu


_MEAN = np.array([0.485, 0.456, 0.406], np.float32)
_STD = np.array([0.229, 0.224, 0.225], np.float32)


def _act(x, kind):
    if kind == "linear":
        return x
    if kind == "relu":
        return jnp.maximum(x, 0.0)
    if kind == "hardswish":            # nn.Hardswish (timm act2 / block acts)
        return x * jnp.clip(x + 3.0, 0.0, 6.0) * (1.0 / 6.0)
    if kind == "hardsigmoid":          # SE gate
        return jnp.clip(x + 3.0, 0.0, 6.0) * (1.0 / 6.0)
    raise ValueError(kind)


# ---------------------------------------------------------------------------
# Single fused per-image kernel: stem matmul -> dw1 -> (pw1∘expand) -> dw2 ->
# SE -> (proj∘feat) -> global pool -> conv_head + hardswish -> L2 norm.
# All activations live on-chip as 2-D [rows, channels] tiles.
# ---------------------------------------------------------------------------
def _fused_forward_kernel(
    patches_ref, stem_w_ref, stem_b_ref,
    g1_ref, dw1_w_ref, dw1_b_ref,
    pwexp_w_ref, pwexp_b_ref,
    g2_ref, dw2_w_ref, dw2_b_ref,
    se1_w_ref, se1_b_ref, se2_w_ref, se2_b_ref,
    projfeat_w_ref, projfeat_b_ref,
    head_w_ref, head_b_ref,
    o_ref,
):
    def mm(x, w_ref, b_ref, act):
        # bf16 operands, f32 accumulation on the MXU; bias + activation in f32.
        acc = jnp.dot(x.astype(jnp.bfloat16), w_ref[...],
                      preferred_element_type=jnp.float32)
        return _act(acc + b_ref[...], act)

    def dwconv(x, g_ref, w_ref, b_ref, act):
        # 3x3 stride-2 depthwise conv: one per-image constant 0/1 gather matmul
        # (f32 -> exact activation copies, zero-padding encoded as all-zero
        # rows) yields all 9 taps; per-channel weights applied with a single
        # pre-broadcast multiply + leading-axis sum on the VPU.
        # TODO(synk): a slice/roll-based (VPU/XLU) tap formation would remove
        #             this from the MXU entirely; kept as an O(1)-in-batch
        #             matmul for robust Mosaic lowering.
        m_out = g_ref.shape[0] // 9
        taps = jnp.dot(g_ref[...], x, preferred_element_type=jnp.float32)
        taps = taps.reshape(9, m_out, x.shape[-1])
        acc = jnp.sum(taps * w_ref[...], axis=0) + b_ref[...]
        return _act(acc, act)

    # --- forward_features (one image) ---
    x = mm(patches_ref[0], stem_w_ref, stem_b_ref, "hardswish")   # [256, 16]
    x = dwconv(x, g1_ref, dw1_w_ref, dw1_b_ref, "relu")           # [64, 16]
    x = mm(x, pwexp_w_ref, pwexp_b_ref, "hardswish")              # [64, 48]  pw1∘expand
    x = dwconv(x, g2_ref, dw2_w_ref, dw2_b_ref, "hardswish")      # [16, 48]

    # squeeze-and-excite (per-image pool = sublane mean on the XLU)
    pooled = jnp.mean(x, axis=0, keepdims=True)                   # [1, 48]
    s = mm(pooled, se1_w_ref, se1_b_ref, "relu")                  # [1, 12]
    s = mm(s, se2_w_ref, se2_b_ref, "hardsigmoid")                # [1, 48]
    x = x * s                                                     # broadcast rescale

    x = mm(x, projfeat_w_ref, projfeat_b_ref, "hardswish")        # [16, 64]  proj∘feat

    # --- global_pool + conv_head (1x1) + act2 ---
    pooled = jnp.mean(x, axis=0, keepdims=True)                   # [1, 64]
    x = mm(pooled, head_w_ref, head_b_ref, "hardswish")           # [1, 128]

    # --- flatten + F.normalize(p=2, dim=1) via rsqrt (EUP) ---
    ss = jnp.sum(x * x, axis=1, keepdims=True)
    o_ref[0] = (x * jax.lax.rsqrt(jnp.maximum(ss, 1e-24))).astype(o_ref.dtype)


# ---------------------------------------------------------------------------
# Trace-time constants (numpy) + wrapper-side layout plumbing
# ---------------------------------------------------------------------------
def _dw_gather(h, w, stride=2):
    """Per-image 0/1 matrix mapping flattened [H*W] rows to [9*Ho*Wo] tap rows
    for a 3x3 / stride-2 / pad-1 depthwise conv.  Size is independent of B."""
    ho, wo = h // stride, w // stride
    g = np.zeros((9 * ho * wo, h * w), np.float32)
    for k in range(9):
        ki, kj = divmod(k, 3)
        for oh in range(ho):
            ih = stride * oh + ki - 1
            if not 0 <= ih < h:
                continue
            for ow in range(wo):
                iw = stride * ow + kj - 1
                if 0 <= iw < w:
                    g[k * ho * wo + oh * wo + ow, ih * w + iw] = 1.0
    return jnp.asarray(g, jnp.float32)


def _stem_patches(x_nchw):
    """Preprocess (x/255 + mean/std folded into one FMA) and 3x3 stride-2
    im2col, fused by XLA into one small gather over the raw image.
    Output: bf16 [B, Ho*Wo, 32] patches (27 real taps, K zero-padded to 32)."""
    b, c, h, w = x_nchw.shape
    scale = jnp.asarray(1.0 / (255.0 * _STD), jnp.float32)
    shift = jnp.asarray(-_MEAN / _STD, jnp.float32)
    x = jnp.transpose(x_nchw.astype(jnp.float32), (0, 2, 3, 1))      # NHWC
    x = x * scale + shift
    xp = jnp.pad(x, ((0, 0), (1, 1), (1, 1), (0, 0)))
    ho, wo = h // 2, w // 2
    cols = [xp[:, ki:ki + 2 * ho:2, kj:kj + 2 * wo:2, :]
            for ki in range(3) for kj in range(3)]                   # 9 x [B,ho,wo,C]
    patches = jnp.stack(cols, axis=3).reshape(b, ho * wo, 9 * c)     # [B, ho*wo, 27]
    patches = jnp.pad(patches, ((0, 0), (0, 0), (0, 32 - 9 * c)))
    return patches.astype(jnp.bfloat16)


# ---------------------------------------------------------------------------
# Model: parameters + forward
# ---------------------------------------------------------------------------
_PARAM_SHAPES = {
    "stem_w": (3, 3, 3, 16),  "stem_b": (16,),      # conv_stem 3x3 s2 + (folded BN) + hardswish
    "b1_dw_w": (3, 3, 16),    "b1_dw_b": (16,),     # DS block: dw 3x3 s2 relu
    "b1_pw_w": (16, 24),      "b1_pw_b": (24,),     #           pw linear
    "b2_exp_w": (24, 48),     "b2_exp_b": (48,),    # IR block: expand hardswish
    "b2_dw_w": (3, 3, 48),    "b2_dw_b": (48,),     #           dw 3x3 s2 hardswish
    "b2_se1_w": (48, 12),     "b2_se1_b": (12,),    #           SE squeeze (relu)
    "b2_se2_w": (12, 48),     "b2_se2_b": (48,),    #           SE excite (hardsigmoid)
    "b2_proj_w": (48, 32),    "b2_proj_b": (32,),   #           project linear
    "feat_w": (32, 64),       "feat_b": (64,),      # final feature conv (== 576-ch conv in mnv3)
    "head_w": (64, 128),      "head_b": (128,),     # conv_head 1x1 (== 1024-ch) + act2 hardswish
}


def init_params(key):
    keys = jax.random.split(key, len(_PARAM_SHAPES))
    params = {}
    for (name, shape), k in zip(_PARAM_SHAPES.items(), keys):
        if name.endswith("_b"):
            scale = 0.02
        else:
            fan_in = math.prod(shape[:-1])
            scale = 1.0 / math.sqrt(fan_in)
        params[name] = jax.random.normal(k, shape, jnp.float32) * scale
    return params


def timm_mobilenet_forward(params, x_nchw):
    p = params
    b, c, h, w = x_nchw.shape
    ho, wo = h // 2, w // 2                         # stem output grid (16x16)
    hw0 = ho * wo                                   # 256 rows/img after stem
    hw1 = (ho // 2) * (wo // 2)                     # 64 rows/img after dw1
    hw2 = (ho // 4) * (wo // 4)                     # 16 rows/img after dw2

    # Wrapper-side prep: pure layout plumbing + constant folding (XLA-fused).
    patches = _stem_patches(x_nchw)                                     # [B, 256, 32] bf16
    stem_w = jnp.pad(p["stem_w"].reshape(9 * c, 16),
                     ((0, 32 - 9 * c), (0, 0))).astype(jnp.bfloat16)
    g1 = _dw_gather(ho, wo)                         # dw1: 16x16 -> 8x8  ([576, 256] f32)
    g2 = _dw_gather(ho // 2, wo // 2)               # dw2:  8x8  -> 4x4  ([144,  64] f32)

    # Compose the linear (no-activation) 1x1 convs into their successors (exact).
    pwexp_w = (p["b1_pw_w"] @ p["b2_exp_w"]).astype(jnp.bfloat16)            # 16 -> 48
    pwexp_b = (p["b1_pw_b"] @ p["b2_exp_w"] + p["b2_exp_b"]).reshape(1, -1)
    projfeat_w = (p["b2_proj_w"] @ p["feat_w"]).astype(jnp.bfloat16)         # 48 -> 64
    projfeat_b = (p["b2_proj_b"] @ p["feat_w"] + p["feat_b"]).reshape(1, -1)

    def wb(name):
        return p[name].astype(jnp.bfloat16)

    def bias(name):
        return p[name].reshape(1, -1)

    dw1_w = p["b1_dw_w"].reshape(9, 1, 16)   # pre-broadcast shape (single in-kernel multiply)
    dw2_w = p["b2_dw_w"].reshape(9, 1, 48)

    n_out = p["head_w"].shape[1]
    operands = [
        patches, stem_w, bias("stem_b"),
        g1, dw1_w, bias("b1_dw_b"),
        pwexp_w, pwexp_b,
        g2, dw2_w, bias("b2_dw_b"),
        wb("b2_se1_w"), bias("b2_se1_b"), wb("b2_se2_w"), bias("b2_se2_b"),
        projfeat_w, projfeat_b,
        wb("head_w"), bias("head_b"),
    ]

    def resident(arr):
        # Full-array block, constant index map -> fetched once, stays in VMEM.
        zeros = (0,) * arr.ndim
        return pl.BlockSpec(arr.shape, lambda i, _z=zeros: _z)

    in_specs = [pl.BlockSpec((1, hw0, 32), lambda i: (i, 0, 0))]   # per-image patches
    in_specs += [resident(a) for a in operands[1:]]
    out_specs = pl.BlockSpec((1, 1, n_out), lambda i: (i, 0, 0))   # lane-dense [1,128] rows

    # TODO(synk): intermediate channel counts (16/48/64) underfill the 128-lane
    #             vreg; a lane-dense [rows, W*C] layout for the dw/SE stages
    #             would roughly double VPU efficiency there.
    flops = 2 * b * (hw0 * 32 * 16            # stem conv
                     + 9 * hw1 * hw0 * 16     # dw1 tap gather
                     + hw1 * 16 * 48          # pw1∘expand
                     + 9 * hw2 * hw1 * 48     # dw2 tap gather
                     + 48 * 12 + 12 * 48      # SE
                     + hw2 * 48 * 64          # proj∘feat
                     + 64 * n_out)            # conv_head
    bytes_accessed = b * n_out * 4 + sum(
        int(a.size) * a.dtype.itemsize for a in operands)

    out = pl.pallas_call(
        _fused_forward_kernel,
        out_shape=jax.ShapeDtypeStruct((b, 1, n_out), jnp.float32),
        grid=(b,),
        in_specs=in_specs,
        out_specs=out_specs,
        compiler_params=pltpu.CompilerParams(
            dimension_semantics=("parallel",)),
        cost_estimate=pl.CostEstimate(
            flops=int(flops), transcendentals=int(b),
            bytes_accessed=int(bytes_accessed)),
    )(*operands)
    return out.reshape(b, n_out)


if __name__ == "__main__":
    key = jax.random.PRNGKey(0)
    pkey, xkey = jax.random.split(key)
    params = init_params(pkey)
    # PyTorch-style NCHW image batch in [0, 255]
    x = jax.random.uniform(xkey, (2, 3, 32, 32), jnp.float32, 0.0, 255.0)

    out = jax.jit(timm_mobilenet_forward)(params, x)
    out = jax.block_until_ready(out)

    assert out.shape == (2, 128), out.shape
    assert out.dtype == jnp.float32
    assert bool(jnp.all(jnp.isfinite(out)))
    norms = jnp.linalg.norm(out, axis=1)
    assert bool(jnp.all(norms <= 1.0 + 1e-3))
    print("KERNEL_OK")
</pallas_src>

<mosaic_0001>
module attributes {stable_mosaic.version = 11 : i64} {
  func.func @_fused_forward_kernel(%arg0: i32, %arg1: memref<1x256x32xbf16, #tpu.memory_space<vmem>>, %arg2: memref<32x16xbf16, #tpu.memory_space<vmem>>, %arg3: memref<1x16xf32, #tpu.memory_space<vmem>>, %arg4: memref<576x256xf32, #tpu.memory_space<vmem>>, %arg5: memref<9x1x16xf32, #tpu.memory_space<vmem>>, %arg6: memref<1x16xf32, #tpu.memory_space<vmem>>, %arg7: memref<16x48xbf16, #tpu.memory_space<vmem>>, %arg8: memref<1x48xf32, #tpu.memory_space<vmem>>, %arg9: memref<144x64xf32, #tpu.memory_space<vmem>>, %arg10: memref<9x1x48xf32, #tpu.memory_space<vmem>>, %arg11: memref<1x48xf32, #tpu.memory_space<vmem>>, %arg12: memref<48x12xbf16, #tpu.memory_space<vmem>>, %arg13: memref<1x12xf32, #tpu.memory_space<vmem>>, %arg14: memref<12x48xbf16, #tpu.memory_space<vmem>>, %arg15: memref<1x48xf32, #tpu.memory_space<vmem>>, %arg16: memref<48x64xbf16, #tpu.memory_space<vmem>>, %arg17: memref<1x64xf32, #tpu.memory_space<vmem>>, %arg18: memref<64x128xbf16, #tpu.memory_space<vmem>>, %arg19: memref<1x128xf32, #tpu.memory_space<vmem>>, %arg20: memref<1x1x128xf32, #tpu.memory_space<vmem>>) attributes {dimension_semantics = [#tpu.dimension_semantics<parallel>], iteration_bounds = array<i64: 2>, scalar_prefetch = 0 : i64, scratch_operands = 0 : i64, tpu.core_type = #tpu.core_type<tc>, window_params = [{transform_indices = @transform_0, window_bounds = array<i64: 1, 256, 32>}, {pipeline_mode = #tpu.pipeline_mode<synchronous>, transform_indices = @transform_1, window_bounds = array<i64: 32, 16>}, {pipeline_mode = #tpu.pipeline_mode<synchronous>, transform_indices = @transform_2, window_bounds = array<i64: 1, 16>}, {pipeline_mode = #tpu.pipeline_mode<synchronous>, transform_indices = @transform_3, window_bounds = array<i64: 576, 256>}, {pipeline_mode = #tpu.pipeline_mode<synchronous>, transform_indices = @transform_4, window_bounds = array<i64: 9, 1, 16>}, {pipeline_mode = #tpu.pipeline_mode<synchronous>, transform_indices = @transform_5, window_bounds = array<i64: 1, 16>}, {pipeline_mode = #tpu.pipeline_mode<synchronous>, transform_indices = @transform_6, window_bounds = array<i64: 16, 48>}, {pipeline_mode = #tpu.pipeline_mode<synchronous>, transform_indices = @transform_7, window_bounds = array<i64: 1, 48>}, {pipeline_mode = #tpu.pipeline_mode<synchronous>, transform_indices = @transform_8, window_bounds = array<i64: 144, 64>}, {pipeline_mode = #tpu.pipeline_mode<synchronous>, transform_indices = @transform_9, window_bounds = array<i64: 9, 1, 48>}, {pipeline_mode = #tpu.pipeline_mode<synchronous>, transform_indices = @transform_10, window_bounds = array<i64: 1, 48>}, {pipeline_mode = #tpu.pipeline_mode<synchronous>, transform_indices = @transform_11, window_bounds = array<i64: 48, 12>}, {pipeline_mode = #tpu.pipeline_mode<synchronous>, transform_indices = @transform_12, window_bounds = array<i64: 1, 12>}, {pipeline_mode = #tpu.pipeline_mode<synchronous>, transform_indices = @transform_13, window_bounds = array<i64: 12, 48>}, {pipeline_mode = #tpu.pipeline_mode<synchronous>, transform_indices = @transform_14, window_bounds = array<i64: 1, 48>}, {pipeline_mode = #tpu.pipeline_mode<synchronous>, transform_indices = @transform_15, window_bounds = array<i64: 48, 64>}, {pipeline_mode = #tpu.pipeline_mode<synchronous>, transform_indices = @transform_16, window_bounds = array<i64: 1, 64>}, {pipeline_mode = #tpu.pipeline_mode<synchronous>, transform_indices = @transform_17, window_bounds = array<i64: 64, 128>}, {pipeline_mode = #tpu.pipeline_mode<synchronous>, transform_indices = @transform_18, window_bounds = array<i64: 1, 128>}, {transform_indices = @transform_19, window_bounds = array<i64: 1, 1, 128>}]} {
    %c0 = arith.constant 0 : index
    %c0_0 = arith.constant 0 : index
    %c0_1 = arith.constant 0 : index
    %0 = vector.load %arg1[%c0, %c0_0, %c0_1] : memref<1x256x32xbf16, #tpu.memory_space<vmem>>, vector<1x256x32xbf16>
    %1 = vector.shape_cast %0 : vector<1x256x32xbf16> to vector<256x32xbf16>
    %c0_2 = arith.constant 0 : index
    %c0_3 = arith.constant 0 : index
    %2 = vector.load %arg2[%c0_2, %c0_3] : memref<32x16xbf16, #tpu.memory_space<vmem>>, vector<32x16xbf16>
    %cst = arith.constant dense<0.000000e+00> : vector<256x16xf32>
    %3 = tpu.matmul %1, %2, %cst {dimension_numbers = #tpu.dot_dimension_numbers<[1], [0], [0], [1], [0, 0, 1, 1], [], []>} : vector<256x32xbf16>, vector<32x16xbf16>, vector<256x16xf32> -> vector<256x16xf32>
    %c0_4 = arith.constant 0 : index
    %c0_5 = arith.constant 0 : index
    %4 = vector.load %arg3[%c0_4, %c0_5] : memref<1x16xf32, #tpu.memory_space<vmem>>, vector<1x16xf32>
    %5 = vector.broadcast %4 : vector<1x16xf32> to vector<256x16xf32>
    %6 = arith.addf %3, %5 : vector<256x16xf32>
    %cst_6 = arith.constant 3.000000e+00 : f32
    %7 = vector.broadcast %cst_6 : f32 to vector<256x16xf32>
    %8 = arith.addf %6, %7 : vector<256x16xf32>
    %cst_7 = arith.constant 0.000000e+00 : f32
    %cst_8 = arith.constant 6.000000e+00 : f32
    %9 = vector.broadcast %cst_7 : f32 to vector<256x16xf32>
    %10 = arith.maximumf %9, %8 : vector<256x16xf32>
    %11 = vector.broadcast %cst_8 : f32 to vector<256x16xf32>
    %12 = arith.minimumf %11, %10 : vector<256x16xf32>
    %13 = arith.mulf %6, %12 : vector<256x16xf32>
    %cst_9 = arith.constant 0.166666672 : f32
    %14 = vector.broadcast %cst_9 : f32 to vector<256x16xf32>
    %15 = arith.mulf %13, %14 : vector<256x16xf32>
    %c0_10 = arith.constant 0 : index
    %c0_11 = arith.constant 0 : index
    %16 = vector.load %arg4[%c0_10, %c0_11] : memref<576x256xf32, #tpu.memory_space<vmem>>, vector<576x256xf32>
    %cst_12 = arith.constant dense<0.000000e+00> : vector<576x16xf32>
    %17 = tpu.matmul %16, %15, %cst_12 {dimension_numbers = #tpu.dot_dimension_numbers<[1], [0], [0], [1], [0, 0, 1, 1], [], []>} : vector<576x256xf32>, vector<256x16xf32>, vector<576x16xf32> -> vector<576x16xf32>
    %18 = vector.shape_cast %17 : vector<576x16xf32> to vector<9x64x16xf32>
    %c0_13 = arith.constant 0 : index
    %c0_14 = arith.constant 0 : index
    %c0_15 = arith.constant 0 : index
    %19 = vector.load %arg5[%c0_13, %c0_14, %c0_15] : memref<9x1x16xf32, #tpu.memory_space<vmem>>, vector<9x1x16xf32>
    %20 = vector.broadcast %19 : vector<9x1x16xf32> to vector<9x64x16xf32>
    %21 = arith.mulf %18, %20 : vector<9x64x16xf32>
    %cst_16 = arith.constant dense<0.000000e+00> : vector<64x16xf32>
    %22 = vector.multi_reduction <add>, %21, %cst_16 [0] : vector<9x64x16xf32> to vector<64x16xf32>
    %c0_17 = arith.constant 0 : index
    %c0_18 = arith.constant 0 : index
    %23 = vector.load %arg6[%c0_17, %c0_18] : memref<1x16xf32, #tpu.memory_space<vmem>>, vector<1x16xf32>
    %24 = vector.broadcast %23 : vector<1x16xf32> to vector<64x16xf32>
    %25 = arith.addf %22, %24 : vector<64x16xf32>
    %cst_19 = arith.constant 0.000000e+00 : f32
    %26 = vector.broadcast %cst_19 : f32 to vector<64x16xf32>
    %27 = arith.maximumf %25, %26 : vector<64x16xf32>
    %28 = arith.truncf %27 : vector<64x16xf32> to vector<64x16xbf16>
    %c0_20 = arith.constant 0 : index
    %c0_21 = arith.constant 0 : index
    %29 = vector.load %arg7[%c0_20, %c0_21] : memref<16x48xbf16, #tpu.memory_space<vmem>>, vector<16x48xbf16>
    %cst_22 = arith.constant dense<0.000000e+00> : vector<64x48xf32>
    %30 = tpu.matmul %28, %29, %cst_22 {dimension_numbers = #tpu.dot_dimension_numbers<[1], [0], [0], [1], [0, 0, 1, 1], [], []>} : vector<64x16xbf16>, vector<16x48xbf16>, vector<64x48xf32> -> vector<64x48xf32>
    %c0_23 = arith.constant 0 : index
    %c0_24 = arith.constant 0 : index
    %31 = vector.load %arg8[%c0_23, %c0_24] : memref<1x48xf32, #tpu.memory_space<vmem>>, vector<1x48xf32>
    %32 = vector.broadcast %31 : vector<1x48xf32> to vector<64x48xf32>
    %33 = arith.addf %30, %32 : vector<64x48xf32>
    %cst_25 = arith.constant 3.000000e+00 : f32
    %34 = vector.broadcast %cst_25 : f32 to vector<64x48xf32>
    %35 = arith.addf %33, %34 : vector<64x48xf32>
    %cst_26 = arith.constant 0.000000e+00 : f32
    %cst_27 = arith.constant 6.000000e+00 : f32
    %36 = vector.broadcast %cst_26 : f32 to vector<64x48xf32>
    %37 = arith.maximumf %36, %35 : vector<64x48xf32>
    %38 = vector.broadcast %cst_27 : f32 to vector<64x48xf32>
    %39 = arith.minimumf %38, %37 : vector<64x48xf32>
    %40 = arith.mulf %33, %39 : vector<64x48xf32>
    %cst_28 = arith.constant 0.166666672 : f32
    %41 = vector.broadcast %cst_28 : f32 to vector<64x48xf32>
    %42 = arith.mulf %40, %41 : vector<64x48xf32>
    %c0_29 = arith.constant 0 : index
    %c0_30 = arith.constant 0 : index
    %43 = vector.load %arg9[%c0_29, %c0_30] : memref<144x64xf32, #tpu.memory_space<vmem>>, vector<144x64xf32>
    %cst_31 = arith.constant dense<0.000000e+00> : vector<144x48xf32>
    %44 = tpu.matmul %43, %42, %cst_31 {dimension_numbers = #tpu.dot_dimension_numbers<[1], [0], [0], [1], [0, 0, 1, 1], [], []>} : vector<144x64xf32>, vector<64x48xf32>, vector<144x48xf32> -> vector<144x48xf32>
    %45 = vector.shape_cast %44 : vector<144x48xf32> to vector<9x16x48xf32>
    %c0_32 = arith.constant 0 : index
    %c0_33 = arith.constant 0 : index
    %c0_34 = arith.constant 0 : index
    %46 = vector.load %arg10[%c0_32, %c0_33, %c0_34] : memref<9x1x48xf32, #tpu.memory_space<vmem>>, vector<9x1x48xf32>
    %47 = vector.broadcast %46 : vector<9x1x48xf32> to vector<9x16x48xf32>
    %48 = arith.mulf %45, %47 : vector<9x16x48xf32>
    %cst_35 = arith.constant dense<0.000000e+00> : vector<16x48xf32>
    %49 = vector.multi_reduction <add>, %48, %cst_35 [0] : vector<9x16x48xf32> to vector<16x48xf32>
    %c0_36 = arith.constant 0 : index
    %c0_37 = arith.constant 0 : index
    %50 = vector.load %arg11[%c0_36, %c0_37] : memref<1x48xf32, #tpu.memory_space<vmem>>, vector<1x48xf32>
    %51 = vector.broadcast %50 : vector<1x48xf32> to vector<16x48xf32>
    %52 = arith.addf %49, %51 : vector<16x48xf32>
    %cst_38 = arith.constant 3.000000e+00 : f32
    %53 = vector.broadcast %cst_38 : f32 to vector<16x48xf32>
    %54 = arith.addf %52, %53 : vector<16x48xf32>
    %cst_39 = arith.constant 0.000000e+00 : f32
    %cst_40 = arith.constant 6.000000e+00 : f32
    %55 = vector.broadcast %cst_39 : f32 to vector<16x48xf32>
    %56 = arith.maximumf %55, %54 : vector<16x48xf32>
    %57 = vector.broadcast %cst_40 : f32 to vector<16x48xf32>
    %58 = arith.minimumf %57, %56 : vector<16x48xf32>
    %59 = arith.mulf %52, %58 : vector<16x48xf32>
    %cst_41 = arith.constant 0.166666672 : f32
    %60 = vector.broadcast %cst_41 : f32 to vector<16x48xf32>
    %61 = arith.mulf %59, %60 : vector<16x48xf32>
    %cst_42 = arith.constant dense<0.000000e+00> : vector<48xf32>
    %62 = vector.multi_reduction <add>, %61, %cst_42 [0] : vector<16x48xf32> to vector<48xf32>
    %63 = vector.shape_cast %62 : vector<48xf32> to vector<1x48xf32>
    %cst_43 = arith.constant 1.600000e+01 : f32
    %64 = vector.broadcast %cst_43 : f32 to vector<1x48xf32>
    %65 = arith.divf %63, %64 : vector<1x48xf32>
    %66 = arith.truncf %65 : vector<1x48xf32> to vector<1x48xbf16>
    %c0_44 = arith.constant 0 : index
    %c0_45 = arith.constant 0 : index
    %67 = vector.load %arg12[%c0_44, %c0_45] : memref<48x12xbf16, #tpu.memory_space<vmem>>, vector<48x12xbf16>
    %cst_46 = arith.constant dense<0.000000e+00> : vector<1x12xf32>
    %68 = tpu.matmul %66, %67, %cst_46 {dimension_numbers = #tpu.dot_dimension_numbers<[1], [0], [0], [1], [0, 0, 1, 1], [], []>} : vector<1x48xbf16>, vector<48x12xbf16>, vector<1x12xf32> -> vector<1x12xf32>
    %c0_47 = arith.constant 0 : index
    %c0_48 = arith.constant 0 : index
    %69 = vector.load %arg13[%c0_47, %c0_48] : memref<1x12xf32, #tpu.memory_space<vmem>>, vector<1x12xf32>
    %70 = arith.addf %68, %69 : vector<1x12xf32>
    %cst_49 = arith.constant 0.000000e+00 : f32
    %71 = vector.broadcast %cst_49 : f32 to vector<1x12xf32>
    %72 = arith.maximumf %70, %71 : vector<1x12xf32>
    %73 = arith.truncf %72 : vector<1x12xf32> to vector<1x12xbf16>
    %c0_50 = arith.constant 0 : index
    %c0_51 = arith.constant 0 : index
    %74 = vector.load %arg14[%c0_50, %c0_51] : memref<12x48xbf16, #tpu.memory_space<vmem>>, vector<12x48xbf16>
    %cst_52 = arith.constant dense<0.000000e+00> : vector<1x48xf32>
    %75 = tpu.matmul %73, %74, %cst_52 {dimension_numbers = #tpu.dot_dimension_numbers<[1], [0], [0], [1], [0, 0, 1, 1], [], []>} : vector<1x12xbf16>, vector<12x48xbf16>, vector<1x48xf32> -> vector<1x48xf32>
    %c0_53 = arith.constant 0 : index
    %c0_54 = arith.constant 0 : index
    %76 = vector.load %arg15[%c0_53, %c0_54] : memref<1x48xf32, #tpu.memory_space<vmem>>, vector<1x48xf32>
    %77 = arith.addf %75, %76 : vector<1x48xf32>
    %cst_55 = arith.constant 3.000000e+00 : f32
    %78 = vector.broadcast %cst_55 : f32 to vector<1x48xf32>
    %79 = arith.addf %77, %78 : vector<1x48xf32>
    %cst_56 = arith.constant 0.000000e+00 : f32
    %cst_57 = arith.constant 6.000000e+00 : f32
    %80 = vector.broadcast %cst_56 : f32 to vector<1x48xf32>
    %81 = arith.maximumf %80, %79 : vector<1x48xf32>
    %82 = vector.broadcast %cst_57 : f32 to vector<1x48xf32>
    %83 = arith.minimumf %82, %81 : vector<1x48xf32>
    %cst_58 = arith.constant 0.166666672 : f32
    %84 = vector.broadcast %cst_58 : f32 to vector<1x48xf32>
    %85 = arith.mulf %83, %84 : vector<1x48xf32>
    %86 = vector.broadcast %85 : vector<1x48xf32> to vector<16x48xf32>
    %87 = arith.mulf %61, %86 : vector<16x48xf32>
    %88 = arith.truncf %87 : vector<16x48xf32> to vector<16x48xbf16>
    %c0_59 = arith.constant 0 : index
    %c0_60 = arith.constant 0 : index
    %89 = vector.load %arg16[%c0_59, %c0_60] : memref<48x64xbf16, #tpu.memory_space<vmem>>, vector<48x64xbf16>
    %cst_61 = arith.constant dense<0.000000e+00> : vector<16x64xf32>
    %90 = tpu.matmul %88, %89, %cst_61 {dimension_numbers = #tpu.dot_dimension_numbers<[1], [0], [0], [1], [0, 0, 1, 1], [], []>} : vector<16x48xbf16>, vector<48x64xbf16>, vector<16x64xf32> -> vector<16x64xf32>
    %c0_62 = arith.constant 0 : index
    %c0_63 = arith.constant 0 : index
    %91 = vector.load %arg17[%c0_62, %c0_63] : memref<1x64xf32, #tpu.memory_space<vmem>>, vector<1x64xf32>
    %92 = vector.broadcast %91 : vector<1x64xf32> to vector<16x64xf32>
    %93 = arith.addf %90, %92 : vector<16x64xf32>
    %cst_64 = arith.constant 3.000000e+00 : f32
    %94 = vector.broadcast %cst_64 : f32 to vector<16x64xf32>
    %95 = arith.addf %93, %94 : vector<16x64xf32>
    %cst_65 = arith.constant 0.000000e+00 : f32
    %cst_66 = arith.constant 6.000000e+00 : f32
    %96 = vector.broadcast %cst_65 : f32 to vector<16x64xf32>
    %97 = arith.maximumf %96, %95 : vector<16x64xf32>
    %98 = vector.broadcast %cst_66 : f32 to vector<16x64xf32>
    %99 = arith.minimumf %98, %97 : vector<16x64xf32>
    %100 = arith.mulf %93, %99 : vector<16x64xf32>
    %cst_67 = arith.constant 0.166666672 : f32
    %101 = vector.broadcast %cst_67 : f32 to vector<16x64xf32>
    %102 = arith.mulf %100, %101 : vector<16x64xf32>
    %cst_68 = arith.constant dense<0.000000e+00> : vector<64xf32>
    %103 = vector.multi_reduction <add>, %102, %cst_68 [0] : vector<16x64xf32> to vector<64xf32>
    %104 = vector.shape_cast %103 : vector<64xf32> to vector<1x64xf32>
    %cst_69 = arith.constant 1.600000e+01 : f32
    %105 = vector.broadcast %cst_69 : f32 to vector<1x64xf32>
    %106 = arith.divf %104, %105 : vector<1x64xf32>
    %107 = arith.truncf %106 : vector<1x64xf32> to vector<1x64xbf16>
    %c0_70 = arith.constant 0 : index
    %c0_71 = arith.constant 0 : index
    %108 = vector.load %arg18[%c0_70, %c0_71] : memref<64x128xbf16, #tpu.memory_space<vmem>>, vector<64x128xbf16>
    %cst_72 = arith.constant dense<0.000000e+00> : vector<1x128xf32>
    %109 = tpu.matmul %107, %108, %cst_72 {dimension_numbers = #tpu.dot_dimension_numbers<[1], [0], [0], [1], [0, 0, 1, 1], [], []>} : vector<1x64xbf16>, vector<64x128xbf16>, vector<1x128xf32> -> vector<1x128xf32>
    %c0_73 = arith.constant 0 : index
    %c0_74 = arith.constant 0 : index
    %110 = vector.load %arg19[%c0_73, %c0_74] : memref<1x128xf32, #tpu.memory_space<vmem>>, vector<1x128xf32>
    %111 = arith.addf %109, %110 : vector<1x128xf32>
    %cst_75 = arith.constant 3.000000e+00 : f32
    %112 = vector.broadcast %cst_75 : f32 to vector<1x128xf32>
    %113 = arith.addf %111, %112 : vector<1x128xf32>
    %cst_76 = arith.constant 0.000000e+00 : f32
    %cst_77 = arith.constant 6.000000e+00 : f32
    %114 = vector.broadcast %cst_76 : f32 to vector<1x128xf32>
    %115 = arith.maximumf %114, %113 : vector<1x128xf32>
    %116 = vector.broadcast %cst_77 : f32 to vector<1x128xf32>
    %117 = arith.minimumf %116, %115 : vector<1x128xf32>
    %118 = arith.mulf %111, %117 : vector<1x128xf32>
    %cst_78 = arith.constant 0.166666672 : f32
    %119 = vector.broadcast %cst_78 : f32 to vector<1x128xf32>
    %120 = arith.mulf %118, %119 : vector<1x128xf32>
    %121 = arith.mulf %120, %120 : vector<1x128xf32>
    %cst_79 = arith.constant dense<0.000000e+00> : vector<1xf32>
    %122 = vector.multi_reduction <add>, %121, %cst_79 [1] : vector<1x128xf32> to vector<1xf32>
    %123 = vector.shape_cast %122 : vector<1xf32> to vector<1x1xf32>
    %cst_80 = arith.constant 1.000000e-24 : f32
    %124 = vector.broadcast %cst_80 : f32 to vector<1x1xf32>
    %125 = arith.maximumf %123, %124 : vector<1x1xf32>
    %126 = math.rsqrt %125 : vector<1x1xf32>
    %127 = vector.broadcast %126 : vector<1x1xf32> to vector<1x128xf32>
    %128 = arith.mulf %120, %127 : vector<1x128xf32>
    %c0_81 = arith.constant 0 : index
    %c0_82 = arith.constant 0 : index
    %c0_83 = arith.constant 0 : index
    %129 = vector.load %arg20[%c0_81, %c0_82, %c0_83] : memref<1x1x128xf32, #tpu.memory_space<vmem>>, vector<1x1x128xf32>
    %130 = vector.shape_cast %129 : vector<1x1x128xf32> to vector<1x128xf32>
    %131 = vector.shape_cast %128 : vector<1x128xf32> to vector<1x1x128xf32>
    tpu.vector_store %arg20[%c0_81, %c0_82, %c0_83], %131 {strides = array<i32>} : memref<1x1x128xf32, #tpu.memory_space<vmem>>, vector<1x1x128xf32>,
    return
  }
  func.func @transform_0(%arg0: i32) -> (i32, i32, i32) {
    %c0_i32 = arith.constant 0 : i32
    %c0_i32_0 = arith.constant 0 : i32
    %c0_i32_1 = arith.constant 0 : i32
    return %arg0, %c0_i32, %c0_i32_0 : i32, i32, i32
  }
  func.func @transform_1(%arg0: i32) -> (i32, i32) {
    %c0_i32 = arith.constant 0 : i32
    %c0_i32_0 = arith.constant 0 : i32
    %c0_i32_1 = arith.constant 0 : i32
    return %c0_i32, %c0_i32_0 : i32, i32
  }
  func.func @transform_2(%arg0: i32) -> (i32, i32) {
    %c0_i32 = arith.constant 0 : i32
    %c0_i32_0 = arith.constant 0 : i32
    %c0_i32_1 = arith.constant 0 : i32
    return %c0_i32, %c0_i32_0 : i32, i32
  }
  func.func @transform_3(%arg0: i32) -> (i32, i32) {
    %c0_i32 = arith.constant 0 : i32
    %c0_i32_0 = arith.constant 0 : i32
    %c0_i32_1 = arith.constant 0 : i32
    return %c0_i32, %c0_i32_0 : i32, i32
  }
  func.func @transform_4(%arg0: i32) -> (i32, i32, i32) {
    %c0_i32 = arith.constant 0 : i32
    %c0_i32_0 = arith.constant 0 : i32
    %c0_i32_1 = arith.constant 0 : i32
    %c0_i32_2 = arith.constant 0 : i32
    return %c0_i32, %c0_i32_0, %c0_i32_1 : i32, i32, i32
  }
  func.func @transform_5(%arg0: i32) -> (i32, i32) {
    %c0_i32 = arith.constant 0 : i32
    %c0_i32_0 = arith.constant 0 : i32
    %c0_i32_1 = arith.constant 0 : i32
    return %c0_i32, %c0_i32_0 : i32, i32
  }
  func.func @transform_6(%arg0: i32) -> (i32, i32) {
    %c0_i32 = arith.constant 0 : i32
    %c0_i32_0 = arith.constant 0 : i32
    %c0_i32_1 = arith.constant 0 : i32
    return %c0_i32, %c0_i32_0 : i32, i32
  }
  func.func @transform_7(%arg0: i32) -> (i32, i32) {
    %c0_i32 = arith.constant 0 : i32
    %c0_i32_0 = arith.constant 0 : i32
    %c0_i32_1 = arith.constant 0 : i32
    return %c0_i32, %c0_i32_0 : i32, i32
  }
  func.func @transform_8(%arg0: i32) -> (i32, i32) {
    %c0_i32 = arith.constant 0 : i32
    %c0_i32_0 = arith.constant 0 : i32
    %c0_i32_1 = arith.constant 0 : i32
    return %c0_i32, %c0_i32_0 : i32, i32
  }
  func.func @transform_9(%arg0: i32) -> (i32, i32, i32) {
    %c0_i32 = arith.constant 0 : i32
    %c0_i32_0 = arith.constant 0 : i32
    %c0_i32_1 = arith.constant 0 : i32
    %c0_i32_2 = arith.constant 0 : i32
    return %c0_i32, %c0_i32_0, %c0_i32_1 : i32, i32, i32
  }
  func.func @transform_10(%arg0: i32) -> (i32, i32) {
    %c0_i32 = arith.constant 0 : i32
    %c0_i32_0 = arith.constant 0 : i32
    %c0_i32_1 = arith.constant 0 : i32
    return %c0_i32, %c0_i32_0 : i32, i32
  }
  func.func @transform_11(%arg0: i32) -> (i32, i32) {
    %c0_i32 = arith.constant 0 : i32
    %c0_i32_0 = arith.constant 0 : i32
    %c0_i32_1 = arith.constant 0 : i32
    return %c0_i32, %c0_i32_0 : i32, i32
  }
  func.func @transform_12(%arg0: i32) -> (i32, i32) {
    %c0_i32 = arith.constant 0 : i32
    %c0_i32_0 = arith.constant 0 : i32
    %c0_i32_1 = arith.constant 0 : i32
    return %c0_i32, %c0_i32_0 : i32, i32
  }
  func.func @transform_13(%arg0: i32) -> (i32, i32) {
    %c0_i32 = arith.constant 0 : i32
    %c0_i32_0 = arith.constant 0 : i32
    %c0_i32_1 = arith.constant 0 : i32
    return %c0_i32, %c0_i32_0 : i32, i32
  }
  func.func @transform_14(%arg0: i32) -> (i32, i32) {
    %c0_i32 = arith.constant 0 : i32
    %c0_i32_0 = arith.constant 0 : i32
    %c0_i32_1 = arith.constant 0 : i32
    return %c0_i32, %c0_i32_0 : i32, i32
  }
  func.func @transform_15(%arg0: i32) -> (i32, i32) {
    %c0_i32 = arith.constant 0 : i32
    %c0_i32_0 = arith.constant 0 : i32
    %c0_i32_1 = arith.constant 0 : i32
    return %c0_i32, %c0_i32_0 : i32, i32
  }
  func.func @transform_16(%arg0: i32) -> (i32, i32) {
    %c0_i32 = arith.constant 0 : i32
    %c0_i32_0 = arith.constant 0 : i32
    %c0_i32_1 = arith.constant 0 : i32
    return %c0_i32, %c0_i32_0 : i32, i32
  }
  func.func @transform_17(%arg0: i32) -> (i32, i32) {
    %c0_i32 = arith.constant 0 : i32
    %c0_i32_0 = arith.constant 0 : i32
    %c0_i32_1 = arith.constant 0 : i32
    return %c0_i32, %c0_i32_0 : i32, i32
  }
  func.func @transform_18(%arg0: i32) -> (i32, i32) {
    %c0_i32 = arith.constant 0 : i32
    %c0_i32_0 = arith.constant 0 : i32
    %c0_i32_1 = arith.constant 0 : i32
    return %c0_i32, %c0_i32_0 : i32, i32
  }
  func.func @transform_19(%arg0: i32) -> (i32, i32, i32) {
    %c0_i32 = arith.constant 0 : i32
    %c0_i32_0 = arith.constant 0 : i32
    %c0_i32_1 = arith.constant 0 : i32
    return %arg0, %c0_i32, %c0_i32_0 : i32, i32, i32
  }
}

</mosaic_0001>

<llo_original>
// kernel: timm_mobilenet_forward.1
$region0: #{timm_mobilenet_forward.1}
  #allocation0 [shape = 'u32[]', space=smem, size = 0x4, offset = 0x4, fixed_abs, tag = 'smem constant byte address 0x4 - core index']
  #allocation1 [shape = 'u32[144,128]{1,0:T(1,128)}', space=vmem, size = 0x12000, scoped, tag = 'internal scratch']
  %s0 = inlined_call_operand.vmem [shape: bf16[2,256,32], index: 0, kind: input, shape index: {}]
  %s1 = inlined_call_operand.vmem [shape: bf16[32,16], index: 1, kind: input, shape index: {}]
  %s2 = inlined_call_operand.vmem [shape: f32[1,16], index: 2, kind: input, shape index: {}]
  %s3 = inlined_call_operand.vmem [shape: f32[576,256], index: 3, kind: input, shape index: {}]
  %s4 = inlined_call_operand.vmem [shape: f32[9,1,16], index: 4, kind: input, shape index: {}]
  %s5 = inlined_call_operand.vmem [shape: f32[1,16], index: 5, kind: input, shape index: {}]
  %s6 = inlined_call_operand.vmem [shape: bf16[16,48], index: 6, kind: input, shape index: {}]
  %s7 = inlined_call_operand.vmem [shape: f32[1,48], index: 7, kind: input, shape index: {}]
  %s8 = inlined_call_operand.vmem [shape: f32[144,64], index: 8, kind: input, shape index: {}]
  %s9 = inlined_call_operand.vmem [shape: f32[9,1,48], index: 9, kind: input, shape index: {}]
  %s10 = inlined_call_operand.vmem [shape: f32[1,48], index: 10, kind: input, shape index: {}]
  %s11 = inlined_call_operand.vmem [shape: bf16[48,12], index: 11, kind: input, shape index: {}]
  %s12 = inlined_call_operand.vmem [shape: f32[1,12], index: 12, kind: input, shape index: {}]
  %s13 = inlined_call_operand.vmem [shape: bf16[12,48], index: 13, kind: input, shape index: {}]
  %s14 = inlined_call_operand.vmem [shape: f32[1,48], index: 14, kind: input, shape index: {}]
  %s15 = inlined_call_operand.vmem [shape: bf16[48,64], index: 15, kind: input, shape index: {}]
  %s16 = inlined_call_operand.vmem [shape: f32[1,64], index: 16, kind: input, shape index: {}]
  %s17 = inlined_call_operand.vmem [shape: bf16[64,128], index: 17, kind: input, shape index: {}]
  %s18 = inlined_call_operand.vmem [shape: f32[1,128], index: 18, kind: input, shape index: {}]
  %s19 = inlined_call_operand.hbm [shape: f32[2,1,128], index: 19, kind: output, shape index: {}]
  %s20 = sld [smem:[#allocation0]]
  $region109: #{timm_mobilenet_forward.1} parent=0
    _
  %s22 = ssub.s32 1, %s20
  %s23 = scalar_select 0, %s22, %s20
  $region1: #{timm_mobilenet_forward.1} parent=0
    #allocation2 [shape = 'u8[1024]{0}', space=vmem, size = 0x400, scoped, tag = 'output window, operand 0']
    #allocation3 [shape = 's32[2]{0}', space=sflag, size = 0x8, scoped, tag = 'scoped memory for timm_mobilenet_forward.1']
    %24 = vsyncpa [#allocation3], 0
    %s25 = scalar_lea.sflag [#allocation3], 1
    %26 = vsyncpa %s25, 0
    loop: start=0, step=1, limit=4
    $region2: #{timm_mobilenet_forward.1} parent=1 // loop_pre_header
      _
    $region3: #{timm_mobilenet_forward.1} parent=1 // loop_header
      %s28 = sphi 0, %s32
      %p29 = scmp.ge.s32.totalorder %s28, 4
      %s38 = sphi 0, %s40
      %s41 = sphi 0, %s38
      %s42 = sphi 0, %s41
      %s58 = sphi 0, %s42
      %s62 = sphi 0, %s62
      %s64 = sphi 0, %s62
      %s65 = sphi 0, %s64
      %s79 = sphi 0, %s65
      %s83 = sphi 0, %s83
      %s85 = sphi 0, %s83
      %s86 = sphi 0, %s85
      %s100 = sphi 0, %s86
      %s104 = sphi 0, %s104
      %s106 = sphi 0, %s104
      %s107 = sphi 0, %s106
      %s121 = sphi 0, %s107
      %s125 = sphi 0, %s125
      %s127 = sphi 0, %s125
      %s128 = sphi 0, %s127
      %s142 = sphi 0, %s128
      %s146 = sphi 0, %s146
      %s148 = sphi 0, %s146
      %s149 = sphi 0, %s148
      %s163 = sphi 0, %s149
      %s167 = sphi 0, %s167
      %s169 = sphi 0, %s167
      %s170 = sphi 0, %s169
      %s184 = sphi 0, %s170
      %s188 = sphi 0, %s188
      %s190 = sphi 0, %s188
      %s191 = sphi 0, %s190
      %s205 = sphi 0, %s191
      %s209 = sphi 0, %s209
      %s211 = sphi 0, %s209
      %s212 = sphi 0, %s211
      %s226 = sphi 0, %s212
      %s230 = sphi 0, %s230
      %s232 = sphi 0, %s230
      %s233 = sphi 0, %s232
      %s247 = sphi 0, %s233
      %s251 = sphi 0, %s251
      %s253 = sphi 0, %s251
      %s254 = sphi 0, %s253
      %s268 = sphi 0, %s254
      %s272 = sphi 0, %s272
      %s274 = sphi 0, %s272
      %s275 = sphi 0, %s274
      %s289 = sphi 0, %s275
      %s293 = sphi 0, %s293
      %s295 = sphi 0, %s293
      %s296 = sphi 0, %s295
      %s310 = sphi 0, %s296
      %s314 = sphi 0, %s314
      %s316 = sphi 0, %s314
      %s317 = sphi 0, %s316
      %s331 = sphi 0, %s317
      %s335 = sphi 0, %s335
      %s337 = sphi 0, %s335
      %s338 = sphi 0, %s337
      %s352 = sphi 0, %s338
      %s356 = sphi 0, %s356
      %s358 = sphi 0, %s356
      %s359 = sphi 0, %s358
      %s373 = sphi 0, %s359
      %s377 = sphi 0, %s377
      %s379 = sphi 0, %s377
      %s380 = sphi 0, %s379
      %s394 = sphi 0, %s380
      %s398 = sphi 0, %s398
      %s400 = sphi 0, %s398
      %s401 = sphi 0, %s400
      %s415 = sphi 0, %s401
      %s419 = sphi 0, %s419
      %s421 = sphi 0, %s419
      %s422 = sphi 0, %s421
      %s436 = sphi 0, %s422
      %s442 = sphi 0, %s444
      %s445 = sphi 0, %s442
      %s446 = sphi 0, %s445
      %s462 = sphi 0, %s446
    $region4: #{timm_mobilenet_forward.1} parent=1 // loop_header_branch
      %31 = sbr.rel (%p29) target = $region8
    $region5: #{timm_mobilenet_forward.1} parent=1 // loop_body
      %s33 = ssub.s32 %s28, 1
      %s34 = ssub.s32 %s28, 2
      %s35 = sadd.s32 %s28, 1
      %s36 = ssub.s32 %s28, %s35
      %p37 = scmp.eq.s32.totalorder %s36, 0
      %s39 = sadd.s32 %s38, 1
      %s40 = scalar_select %p37, %s38, %s39
      %p43 = pneg %p37
      %p44 = scmp.eq.s32.totalorder %s28, 1
      %p45 = por %p43, %p44
      %p46 = scmp.ne.s32.totalorder %s38, %s41
      %p47 = scmp.eq.s32.totalorder %s28, 0
      %p48 = por %p46, %p47
      %p49 = scmp.ne.s32.totalorder %s38, %s41
      %p50 = scmp.eq.s32.totalorder %s33, 1
      %p51 = por %p49, %p50
      %p52 = scmp.ne.s32.totalorder %s41, %s42
      %p53 = scmp.eq.s32.totalorder %s33, 0
      %p54 = por %p52, %p53
      %p55 = scmp.ne.s32.totalorder %s41, %s42
      %p56 = scmp.eq.s32.totalorder %s34, 1
      %p57 = por %p55, %p56
      %p59 = scmp.ne.s32.totalorder %s42, %s58
      %p60 = scmp.eq.s32.totalorder %s34, 0
      %p61 = por %p59, %p60
      %s63 = sadd.s32 %s62, 1
      %p66 = scmp.eq.s32.totalorder %s28, 1
      %p67 = scmp.ne.s32.totalorder %s62, %s64
      %p68 = scmp.eq.s32.totalorder %s28, 0
      %p69 = por %p67, %p68
      %p70 = scmp.ne.s32.totalorder %s62, %s64
      %p71 = scmp.eq.s32.totalorder %s33, 1
      %p72 = por %p70, %p71
      %p73 = scmp.ne.s32.totalorder %s64, %s65
      %p74 = scmp.eq.s32.totalorder %s33, 0
      %p75 = por %p73, %p74
      %p76 = scmp.ne.s32.totalorder %s64, %s65
      %p77 = scmp.eq.s32.totalorder %s34, 1
      %p78 = por %p76, %p77
      %p80 = scmp.ne.s32.totalorder %s65, %s79
      %p81 = scmp.eq.s32.totalorder %s34, 0
      %p82 = por %p80, %p81
      %s84 = sadd.s32 %s83, 1
      %p87 = scmp.eq.s32.totalorder %s28, 1
      %p88 = scmp.ne.s32.totalorder %s83, %s85
      %p89 = scmp.eq.s32.totalorder %s28, 0
      %p90 = por %p88, %p89
      %p91 = scmp.ne.s32.totalorder %s83, %s85
      %p92 = scmp.eq.s32.totalorder %s33, 1
      %p93 = por %p91, %p92
      %p94 = scmp.ne.s32.totalorder %s85, %s86
      %p95 = scmp.eq.s32.totalorder %s33, 0
      %p96 = por %p94, %p95
      %p97 = scmp.ne.s32.totalorder %s85, %s86
      %p98 = scmp.eq.s32.totalorder %s34, 1
      %p99 = por %p97, %p98
      %p101 = scmp.ne.s32.totalorder %s86, %s100
      %p102 = scmp.eq.s32.totalorder %s34, 0
      %p103 = por %p101, %p102
      %s105 = sadd.s32 %s104, 1
      %p108 = scmp.eq.s32.totalorder %s28, 1
      %p109 = scmp.ne.s32.totalorder %s104, %s106
      %p110 = scmp.eq.s32.totalorder %s28, 0
      %p111 = por %p109, %p110
      %p112 = scmp.ne.s32.totalorder %s104, %s106
      %p113 = scmp.eq.s32.totalorder %s33, 1
      %p114 = por %p112, %p113
      %p115 = scmp.ne.s32.totalorder %s106, %s107
      %p116 = scmp.eq.s32.totalorder %s33, 0
      %p117 = por %p115, %p116
      %p118 = scmp.ne.s32.totalorder %s106, %s107
      %p119 = scmp.eq.s32.totalorder %s34, 1
      %p120 = por %p118, %p119
      %p122 = scmp.ne.s32.totalorder %s107, %s121
      %p123 = scmp.eq.s32.totalorder %s34, 0
      %p124 = por %p122, %p123
      %s126 = sadd.s32 %s125, 1
      %p129 = scmp.eq.s32.totalorder %s28, 1
      %p130 = scmp.ne.s32.totalorder %s125, %s127
      %p131 = scmp.eq.s32.totalorder %s28, 0
      %p132 = por %p130, %p131
      %p133 = scmp.ne.s32.totalorder %s125, %s127
      %p134 = scmp.eq.s32.totalorder %s33, 1
      %p135 = por %p133, %p134
      %p136 = scmp.ne.s32.totalorder %s127, %s128
      %p137 = scmp.eq.s32.totalorder %s33, 0
      %p138 = por %p136, %p137
      %p139 = scmp.ne.s32.totalorder %s127, %s128
      %p140 = scmp.eq.s32.totalorder %s34, 1
      %p141 = por %p139, %p140
      %p143 = scmp.ne.s32.totalorder %s128, %s142
      %p144 = scmp.eq.s32.totalorder %s34, 0
      %p145 = por %p143, %p144
      %s147 = sadd.s32 %s146, 1
      %p150 = scmp.eq.s32.totalorder %s28, 1
      %p151 = scmp.ne.s32.totalorder %s146, %s148
      %p152 = scmp.eq.s32.totalorder %s28, 0
      %p153 = por %p151, %p152
      %p154 = scmp.ne.s32.totalorder %s146, %s148
      %p155 = scmp.eq.s32.totalorder %s33, 1
      %p156 = por %p154, %p155
      %p157 = scmp.ne.s32.totalorder %s148, %s149
      %p158 = scmp.eq.s32.totalorder %s33, 0
      %p159 = por %p157, %p158
      %p160 = scmp.ne.s32.totalorder %s148, %s149
      %p161 = scmp.eq.s32.totalorder %s34, 1
      %p162 = por %p160, %p161
      %p164 = scmp.ne.s32.totalorder %s149, %s163
      %p165 = scmp.eq.s32.totalorder %s34, 0
      %p166 = por %p164, %p165
      %s168 = sadd.s32 %s167, 1
      %p171 = scmp.eq.s32.totalorder %s28, 1
      %p172 = scmp.ne.s32.totalorder %s167, %s169
      %p173 = scmp.eq.s32.totalorder %s28, 0
      %p174 = por %p172, %p173
      %p175 = scmp.ne.s32.totalorder %s167, %s169
      %p176 = scmp.eq.s32.totalorder %s33, 1
      %p177 = por %p175, %p176
      %p178 = scmp.ne.s32.totalorder %s169, %s170
      %p179 = scmp.eq.s32.totalorder %s33, 0
      %p180 = por %p178, %p179
      %p181 = scmp.ne.s32.totalorder %s169, %s170
      %p182 = scmp.eq.s32.totalorder %s34, 1
      %p183 = por %p181, %p182
      %p185 = scmp.ne.s32.totalorder %s170, %s184
      %p186 = scmp.eq.s32.totalorder %s34, 0
      %p187 = por %p185, %p186
      %s189 = sadd.s32 %s188, 1
      %p192 = scmp.eq.s32.totalorder %s28, 1
      %p193 = scmp.ne.s32.totalorder %s188, %s190
      %p194 = scmp.eq.s32.totalorder %s28, 0
      %p195 = por %p193, %p194
      %p196 = scmp.ne.s32.totalorder %s188, %s190
      %p197 = scmp.eq.s32.totalorder %s33, 1
      %p198 = por %p196, %p197
      %p199 = scmp.ne.s32.totalorder %s190, %s191
      %p200 = scmp.eq.s32.totalorder %s33, 0
      %p201 = por %p199, %p200
      %p202 = scmp.ne.s32.totalorder %s190, %s191
      %p203 = scmp.eq.s32.totalorder %s34, 1
      %p204 = por %p202, %p203
      %p206 = scmp.ne.s32.totalorder %s191, %s205
      %p207 = scmp.eq.s32.totalorder %s34, 0
      %p208 = por %p206, %p207
      %s210 = sadd.s32 %s209, 1
      %p213 = scmp.eq.s32.totalorder %s28, 1
      %p214 = scmp.ne.s32.totalorder %s209, %s211
      %p215 = scmp.eq.s32.totalorder %s28, 0
      %p216 = por %p214, %p215
      %p217 = scmp.ne.s32.totalorder %s209, %s211
      %p218 = scmp.eq.s32.totalorder %s33, 1
      %p219 = por %p217, %p218
      %p220 = scmp.ne.s32.totalorder %s211, %s212
      %p221 = scmp.eq.s32.totalorder %s33, 0
      %p222 = por %p220, %p221
      %p223 = scmp.ne.s32.totalorder %s211, %s212
      %p224 = scmp.eq.s32.totalorder %s34, 1
      %p225 = por %p223, %p224
      %p227 = scmp.ne.s32.totalorder %s212, %s226
      %p228 = scmp.eq.s32.totalorder %s34, 0
      %p229 = por %p227, %p228
      %s231 = sadd.s32 %s230, 1
      %p234 = scmp.eq.s32.totalorder %s28, 1
      %p235 = scmp.ne.s32.totalorder %s230, %s232
      %p236 = scmp.eq.s32.totalorder %s28, 0
      %p237 = por %p235, %p236
      %p238 = scmp.ne.s32.totalorder %s230, %s232
      %p239 = scmp.eq.s32.totalorder %s33, 1
      %p240 = por %p238, %p239
      %p241 = scmp.ne.s32.totalorder %s232, %s233
      %p242 = scmp.eq.s32.totalorder %s33, 0
      %p243 = por %p241, %p242
      %p244 = scmp.ne.s32.totalorder %s232, %s233
      %p245 = scmp.eq.s32.totalorder %s34, 1
      %p246 = por %p244, %p245
      %p248 = scmp.ne.s32.totalorder %s233, %s247
      %p249 = scmp.eq.s32.totalorder %s34, 0
      %p250 = por %p248, %p249
      %s252 = sadd.s32 %s251, 1
      %p255 = scmp.eq.s32.totalorder %s28, 1
      %p256 = scmp.ne.s32.totalorder %s251, %s253
      %p257 = scmp.eq.s32.totalorder %s28, 0
      %p258 = por %p256, %p257
      %p259 = scmp.ne.s32.totalorder %s251, %s253
      %p260 = scmp.eq.s32.totalorder %s33, 1
      %p261 = por %p259, %p260
      %p262 = scmp.ne.s32.totalorder %s253, %s254
      %p263 = scmp.eq.s32.totalorder %s33, 0
      %p264 = por %p262, %p263
      %p265 = scmp.ne.s32.totalorder %s253, %s254
      %p266 = scmp.eq.s32.totalorder %s34, 1
      %p267 = por %p265, %p266
      %p269 = scmp.ne.s32.totalorder %s254, %s268
      %p270 = scmp.eq.s32.totalorder %s34, 0
      %p271 = por %p269, %p270
      %s273 = sadd.s32 %s272, 1
      %p276 = scmp.eq.s32.totalorder %s28, 1
      %p277 = scmp.ne.s32.totalorder %s272, %s274
      %p278 = scmp.eq.s32.totalorder %s28, 0
      %p279 = por %p277, %p278
      %p280 = scmp.ne.s32.totalorder %s272, %s274
      %p281 = scmp.eq.s32.totalorder %s33, 1
      %p282 = por %p280, %p281
      %p283 = scmp.ne.s32.totalorder %s274, %s275
      %p284 = scmp.eq.s32.totalorder %s33, 0
      %p285 = por %p283, %p284
      %p286 = scmp.ne.s32.totalorder %s274, %s275
      %p287 = scmp.eq.s32.totalorder %s34, 1
      %p288 = por %p286, %p287
      %p290 = scmp.ne.s32.totalorder %s275, %s289
      %p291 = scmp.eq.s32.totalorder %s34, 0
      %p292 = por %p290, %p291
      %s294 = sadd.s32 %s293, 1
      %p297 = scmp.eq.s32.totalorder %s28, 1
      %p298 = scmp.ne.s32.totalorder %s293, %s295
      %p299 = scmp.eq.s32.totalorder %s28, 0
      %p300 = por %p298, %p299
      %p301 = scmp.ne.s32.totalorder %s293, %s295
      %p302 = scmp.eq.s32.totalorder %s33, 1
      %p303 = por %p301, %p302
      %p304 = scmp.ne.s32.totalorder %s295, %s296
      %p305 = scmp.eq.s32.totalorder %s33, 0
      %p306 = por %p304, %p305
      %p307 = scmp.ne.s32.totalorder %s295, %s296
      %p308 = scmp.eq.s32.totalorder %s34, 1
      %p309 = por %p307, %p308
      %p311 = scmp.ne.s32.totalorder %s296, %s310
      %p312 = scmp.eq.s32.totalorder %s34, 0
      %p313 = por %p311, %p312
      %s315 = sadd.s32 %s314, 1
      %p318 = scmp.eq.s32.totalorder %s28, 1
      %p319 = scmp.ne.s32.totalorder %s314, %s316
      %p320 = scmp.eq.s32.totalorder %s28, 0
      %p321 = por %p319, %p320
      %p322 = scmp.ne.s32.totalorder %s314, %s316
      %p323 = scmp.eq.s32.totalorder %s33, 1
      %p324 = por %p322, %p323
      %p325 = scmp.ne.s32.totalorder %s316, %s317
      %p326 = scmp.eq.s32.totalorder %s33, 0
      %p327 = por %p325, %p326
      %p328 = scmp.ne.s32.totalorder %s316, %s317
      %p329 = scmp.eq.s32.totalorder %s34, 1
      %p330 = por %p328, %p329
      %p332 = scmp.ne.s32.totalorder %s317, %s331
      %p333 = scmp.eq.s32.totalorder %s34, 0
      %p334 = por %p332, %p333
      %s336 = sadd.s32 %s335, 1
      %p339 = scmp.eq.s32.totalorder %s28, 1
      %p340 = scmp.ne.s32.totalorder %s335, %s337
      %p341 = scmp.eq.s32.totalorder %s28, 0
      %p342 = por %p340, %p341
      %p343 = scmp.ne.s32.totalorder %s335, %s337
      %p344 = scmp.eq.s32.totalorder %s33, 1
      %p345 = por %p343, %p344
      %p346 = scmp.ne.s32.totalorder %s337, %s338
      %p347 = scmp.eq.s32.totalorder %s33, 0
      %p348 = por %p346, %p347
      %p349 = scmp.ne.s32.totalorder %s337, %s338
      %p350 = scmp.eq.s32.totalorder %s34, 1
      %p351 = por %p349, %p350
      %p353 = scmp.ne.s32.totalorder %s338, %s352
      %p354 = scmp.eq.s32.totalorder %s34, 0
      %p355 = por %p353, %p354
      %s357 = sadd.s32 %s356, 1
      %p360 = scmp.eq.s32.totalorder %s28, 1
      %p361 = scmp.ne.s32.totalorder %s356, %s358
      %p362 = scmp.eq.s32.totalorder %s28, 0
      %p363 = por %p361, %p362
      %p364 = scmp.ne.s32.totalorder %s356, %s358
      %p365 = scmp.eq.s32.totalorder %s33, 1
      %p366 = por %p364, %p365
      %p367 = scmp.ne.s32.totalorder %s358, %s359
      %p368 = scmp.eq.s32.totalorder %s33, 0
      %p369 = por %p367, %p368
      %p370 = scmp.ne.s32.totalorder %s358, %s359
      %p371 = scmp.eq.s32.totalorder %s34, 1
      %p372 = por %p370, %p371
      %p374 = scmp.ne.s32.totalorder %s359, %s373
      %p375 = scmp.eq.s32.totalorder %s34, 0
      %p376 = por %p374, %p375
      %s378 = sadd.s32 %s377, 1
      %p381 = scmp.eq.s32.totalorder %s28, 1
      %p382 = scmp.ne.s32.totalorder %s377, %s379
      %p383 = scmp.eq.s32.totalorder %s28, 0
      %p384 = por %p382, %p383
      %p385 = scmp.ne.s32.totalorder %s377, %s379
      %p386 = scmp.eq.s32.totalorder %s33, 1
      %p387 = por %p385, %p386
      %p388 = scmp.ne.s32.totalorder %s379, %s380
      %p389 = scmp.eq.s32.totalorder %s33, 0
      %p390 = por %p388, %p389
      %p391 = scmp.ne.s32.totalorder %s379, %s380
      %p392 = scmp.eq.s32.totalorder %s34, 1
      %p393 = por %p391, %p392
      %p395 = scmp.ne.s32.totalorder %s380, %s394
      %p396 = scmp.eq.s32.totalorder %s34, 0
      %p397 = por %p395, %p396
      %s399 = sadd.s32 %s398, 1
      %p402 = scmp.eq.s32.totalorder %s28, 1
      %p403 = scmp.ne.s32.totalorder %s398, %s400
      %p404 = scmp.eq.s32.totalorder %s28, 0
      %p405 = por %p403, %p404
      %p406 = scmp.ne.s32.totalorder %s398, %s400
      %p407 = scmp.eq.s32.totalorder %s33, 1
      %p408 = por %p406, %p407
      %p409 = scmp.ne.s32.totalorder %s400, %s401
      %p410 = scmp.eq.s32.totalorder %s33, 0
      %p411 = por %p409, %p410
      %p412 = scmp.ne.s32.totalorder %s400, %s401
      %p413 = scmp.eq.s32.totalorder %s34, 1
      %p414 = por %p412, %p413
      %p416 = scmp.ne.s32.totalorder %s401, %s415
      %p417 = scmp.eq.s32.totalorder %s34, 0
      %p418 = por %p416, %p417
      %s420 = sadd.s32 %s419, 1
      %p423 = scmp.eq.s32.totalorder %s28, 1
      %p424 = scmp.ne.s32.totalorder %s419, %s421
      %p425 = scmp.eq.s32.totalorder %s28, 0
      %p426 = por %p424, %p425
      %p427 = scmp.ne.s32.totalorder %s419, %s421
      %p428 = scmp.eq.s32.totalorder %s33, 1
      %p429 = por %p427, %p428
      %p430 = scmp.ne.s32.totalorder %s421, %s422
      %p431 = scmp.eq.s32.totalorder %s33, 0
      %p432 = por %p430, %p431
      %p433 = scmp.ne.s32.totalorder %s421, %s422
      %p434 = scmp.eq.s32.totalorder %s34, 1
      %p435 = por %p433, %p434
      %p437 = scmp.ne.s32.totalorder %s422, %s436
      %p438 = scmp.eq.s32.totalorder %s34, 0
      %p439 = por %p437, %p438
      %s440 = ssub.s32 %s28, %s35
      %p441 = scmp.eq.s32.totalorder %s440, 0
      %s443 = sadd.s32 %s442, 1
      %s444 = scalar_select %p441, %s442, %s443
      %p447 = pneg %p441
      %p448 = scmp.eq.s32.totalorder %s28, 1
      %p449 = por %p447, %p448
      %p450 = scmp.ne.s32.totalorder %s442, %s445
      %p451 = scmp.eq.s32.totalorder %s28, 0
      %p452 = por %p450, %p451
      %p453 = scmp.ne.s32.totalorder %s442, %s445
      %p454 = scmp.eq.s32.totalorder %s33, 1
      %p455 = por %p453, %p454
      %p456 = scmp.ne.s32.totalorder %s445, %s446
      %p457 = scmp.eq.s32.totalorder %s33, 0
      %p458 = por %p456, %p457
      %p459 = scmp.ne.s32.totalorder %s445, %s446
      %p460 = scmp.eq.s32.totalorder %s34, 1
      %p461 = por %p459, %p460
      %p463 = scmp.ne.s32.totalorder %s446, %s462
      %p464 = scmp.eq.s32.totalorder %s34, 0
      %p465 = por %p463, %p464
      %p466 = scmp.le.s32.totalorder 1, %s28
      %p467 = scmp.lt.s32.totalorder %s28, 3
      %p468 = pnand %p466, %p467
      %p469 = pneg %p468
      // Predicated region
      $region9: #{timm_mobilenet_forward.1} parent=5 // pred_check
        _
      $region10: #{timm_mobilenet_forward.1} parent=5 // pred_check_branch
        %471 = sbr.rel (%p468) target = $region12
      $region11: #{timm_mobilenet_forward.1} parent=5 // pred_region
        %s472 = ssub.s32 %s28, 1
        // Predicated region
        $region13: #{timm_mobilenet_forward.1} parent=11 // pred_check
          %p473 = pneg %p75
        $region14: #{timm_mobilenet_forward.1} parent=11 // pred_check_branch
          %475 = sbr.rel (%p473) target = $region16
        $region15: #{timm_mobilenet_forward.1} parent=11 // pred_region
          _
        $region16: #{timm_mobilenet_forward.1} parent=11 // pred_fallthru
          _
        // Predicated region
        $region17: #{timm_mobilenet_forward.1} parent=11 // pred_check
          %p476 = pneg %p96
        $region18: #{timm_mobilenet_forward.1} parent=11 // pred_check_branch
          %478 = sbr.rel (%p476) target = $region20
        $region19: #{timm_mobilenet_forward.1} parent=11 // pred_region
          _
        $region20: #{timm_mobilenet_forward.1} parent=11 // pred_fallthru
          _
        // Predicated region
        $region21: #{timm_mobilenet_forward.1} parent=11 // pred_check
          %p479 = pneg %p117
        $region22: #{timm_mobilenet_forward.1} parent=11 // pred_check_branch
          %481 = sbr.rel (%p479) target = $region24
        $region23: #{timm_mobilenet_forward.1} parent=11 // pred_region
          _
        $region24: #{timm_mobilenet_forward.1} parent=11 // pred_fallthru
          _
        // Predicated region
        $region25: #{timm_mobilenet_forward.1} parent=11 // pred_check
          %p482 = pneg %p138
        $region26: #{timm_mobilenet_forward.1} parent=11 // pred_check_branch
          %484 = sbr.rel (%p482) target = $region28
        $region27: #{timm_mobilenet_forward.1} parent=11 // pred_region
          _
        $region28: #{timm_mobilenet_forward.1} parent=11 // pred_fallthru
          _
        // Predicated region
        $region29: #{timm_mobilenet_forward.1} parent=11 // pred_check
          %p485 = pneg %p159
        $region30: #{timm_mobilenet_forward.1} parent=11 // pred_check_branch
          %487 = sbr.rel (%p485) target = $region32
        $region31: #{timm_mobilenet_forward.1} parent=11 // pred_region
          _
        $region32: #{timm_mobilenet_forward.1} parent=11 // pred_fallthru
          _
        // Predicated region
        $region33: #{timm_mobilenet_forward.1} parent=11 // pred_check
          %p488 = pneg %p180
        $region34: #{timm_mobilenet_forward.1} parent=11 // pred_check_branch
          %490 = sbr.rel (%p488) target = $region36
        $region35: #{timm_mobilenet_forward.1} parent=11 // pred_region
          _
        $region36: #{timm_mobilenet_forward.1} parent=11 // pred_fallthru
          _
        // Predicated region
        $region37: #{timm_mobilenet_forward.1} parent=11 // pred_check
          %p491 = pneg %p201
        $region38: #{timm_mobilenet_forward.1} parent=11 // pred_check_branch
          %493 = sbr.rel (%p491) target = $region40
        $region39: #{timm_mobilenet_forward.1} parent=11 // pred_region
          _
        $region40: #{timm_mobilenet_forward.1} parent=11 // pred_fallthru
          _
        // Predicated region
        $region41: #{timm_mobilenet_forward.1} parent=11 // pred_check
          %p494 = pneg %p222
        $region42: #{timm_mobilenet_forward.1} parent=11 // pred_check_branch
          %496 = sbr.rel (%p494) target = $region44
        $region43: #{timm_mobilenet_forward.1} parent=11 // pred_region
          _
        $region44: #{timm_mobilenet_forward.1} parent=11 // pred_fallthru
          _
        // Predicated region
        $region45: #{timm_mobilenet_forward.1} parent=11 // pred_check
          %p497 = pneg %p243
        $region46: #{timm_mobilenet_forward.1} parent=11 // pred_check_branch
          %499 = sbr.rel (%p497) target = $region48
        $region47: #{timm_mobilenet_forward.1} parent=11 // pred_region
          _
        $region48: #{timm_mobilenet_forward.1} parent=11 // pred_fallthru
          _
        // Predicated region
        $region49: #{timm_mobilenet_forward.1} parent=11 // pred_check
          %p500 = pneg %p264
        $region50: #{timm_mobilenet_forward.1} parent=11 // pred_check_branch
          %502 = sbr.rel (%p500) target = $region52
        $region51: #{timm_mobilenet_forward.1} parent=11 // pred_region
          _
        $region52: #{timm_mobilenet_forward.1} parent=11 // pred_fallthru
          _
        // Predicated region
        $region53: #{timm_mobilenet_forward.1} parent=11 // pred_check
          %p503 = pneg %p285
        $region54: #{timm_mobilenet_forward.1} parent=11 // pred_check_branch
          %505 = sbr.rel (%p503) target = $region56
        $region55: #{timm_mobilenet_forward.1} parent=11 // pred_region
          _
        $region56: #{timm_mobilenet_forward.1} parent=11 // pred_fallthru
          _
        // Predicated region
        $region57: #{timm_mobilenet_forward.1} parent=11 // pred_check
          %p506 = pneg %p306
        $region58: #{timm_mobilenet_forward.1} parent=11 // pred_check_branch
          %508 = sbr.rel (%p506) target = $region60
        $region59: #{timm_mobilenet_forward.1} parent=11 // pred_region
          _
        $region60: #{timm_mobilenet_forward.1} parent=11 // pred_fallthru
          _
        // Predicated region
        $region61: #{timm_mobilenet_forward.1} parent=11 // pred_check
          %p509 = pneg %p327
        $region62: #{timm_mobilenet_forward.1} parent=11 // pred_check_branch
          %511 = sbr.rel (%p509) target = $region64
        $region63: #{timm_mobilenet_forward.1} parent=11 // pred_region
          _
        $region64: #{timm_mobilenet_forward.1} parent=11 // pred_fallthru
          _
        // Predicated region
        $region65: #{timm_mobilenet_forward.1} parent=11 // pred_check
          %p512 = pneg %p348
        $region66: #{timm_mobilenet_forward.1} parent=11 // pred_check_branch
          %514 = sbr.rel (%p512) target = $region68
        $region67: #{timm_mobilenet_forward.1} parent=11 // pred_region
          _
        $region68: #{timm_mobilenet_forward.1} parent=11 // pred_fallthru
          _
        // Predicated region
        $region69: #{timm_mobilenet_forward.1} parent=11 // pred_check
          %p515 = pneg %p369
        $region70: #{timm_mobilenet_forward.1} parent=11 // pred_check_branch
          %517 = sbr.rel (%p515) target = $region72
        $region71: #{timm_mobilenet_forward.1} parent=11 // pred_region
          _
        $region72: #{timm_mobilenet_forward.1} parent=11 // pred_fallthru
          _
        // Predicated region
        $region73: #{timm_mobilenet_forward.1} parent=11 // pred_check
          %p518 = pneg %p390
        $region74: #{timm_mobilenet_forward.1} parent=11 // pred_check_branch
          %520 = sbr.rel (%p518) target = $region76
        $region75: #{timm_mobilenet_forward.1} parent=11 // pred_region
          _
        $region76: #{timm_mobilenet_forward.1} parent=11 // pred_fallthru
          _
        // Predicated region
        $region77: #{timm_mobilenet_forward.1} parent=11 // pred_check
          %p521 = pneg %p411
        $region78: #{timm_mobilenet_forward.1} parent=11 // pred_check_branch
          %523 = sbr.rel (%p521) target = $region80
        $region79: #{timm_mobilenet_forward.1} parent=11 // pred_region
          _
        $region80: #{timm_mobilenet_forward.1} parent=11 // pred_fallthru
          _
        // Predicated region
        $region81: #{timm_mobilenet_forward.1} parent=11 // pred_check
          %p524 = pneg %p432
        $region82: #{timm_mobilenet_forward.1} parent=11 // pred_check_branch
          %526 = sbr.rel (%p524) target = $region84
        $region83: #{timm_mobilenet_forward.1} parent=11 // pred_region
          _
        $region84: #{timm_mobilenet_forward.1} parent=11 // pred_fallthru
          _
      $region12: #{timm_mobilenet_forward.1} parent=5 // pred_fallthru
        _
      %p527 = scmp.lt.s32.totalorder %s28, 2
      // Predicated region
      $region85: #{timm_mobilenet_forward.1} parent=5 // pred_check
        %p528 = pneg %p527
      $region86: #{timm_mobilenet_forward.1} parent=5 // pred_check_branch
        %530 = sbr.rel (%p528) target = $region88
      $region87: #{timm_mobilenet_forward.1} parent=5 // pred_region
        // Predicated region
        $region89: #{timm_mobilenet_forward.1} parent=87 // pred_check
          %p531 = pneg %p48
        $region90: #{timm_mobilenet_forward.1} parent=87 // pred_check_branch
          %533 = sbr.rel (%p531) target = $region92
        $region91: #{timm_mobilenet_forward.1} parent=87 // pred_region
          %p534 = scmp.lt.s32.totalorder %s28, 1
          %s535 = scalar_select %p534, %s28, 1
          %s536 = smul.addr %s535, 32
          %s537 = smul.addr %s536, 4
          %s538 = scalar_lea.vmem %s0, %s537
        $region92: #{timm_mobilenet_forward.1} parent=87 // pred_fallthru
          _
      $region88: #{timm_mobilenet_forward.1} parent=5 // pred_fallthru
        _
      %p539 = scmp.le.s32.totalorder 1, %s28
      %p540 = scmp.lt.s32.totalorder %s28, 3
      %p541 = pnand %p539, %p540
      %p542 = pneg %p541
      // Predicated region
      $region93: #{timm_mobilenet_forward.1} parent=5 // pred_check
        _
      $region94: #{timm_mobilenet_forward.1} parent=5 // pred_check_branch
        %544 = sbr.rel (%p541) target = $region96
      $region95: #{timm_mobilenet_forward.1} parent=5 // pred_region
        %s545 = ssub.s32 %s28, 1
        %p546 = scmp.lt.s32.totalorder %s33, 1
        %s547 = scalar_select %p546, %s33, 1
        %s548 = smul.addr %s547, 32
        %s549 = smul.addr %s548, 4
        %s550 = scalar_lea.vmem %s0, %s549
        %p551 = pneg %p54
        %p552 = pneg %p51
        %p553 = pneg %p75
        %p554 = pneg %p72
        %p555 = pneg %p96
        %p556 = pneg %p93
        %p557 = pneg %p117
        %p558 = pneg %p114
        %p559 = pneg %p138
        %p560 = pneg %p135
        %p561 = pneg %p159
        %p562 = pneg %p156
        %p563 = pneg %p180
        %p564 = pneg %p177
        %p565 = pneg %p201
        %p566 = pneg %p198
        %p567 = pneg %p222
        %p568 = pneg %p219
        %p569 = pneg %p243
        %p570 = pneg %p240
        %p571 = pneg %p264
        %p572 = pneg %p261
        %p573 = pneg %p285
        %p574 = pneg %p282
        %p575 = pneg %p306
        %p576 = pneg %p303
        %p577 = pneg %p327
        %p578 = pneg %p324
        %p579 = pneg %p348
        %p580 = pneg %p345
        %p581 = pneg %p369
        %p582 = pneg %p366
        %p583 = pneg %p390
        %p584 = pneg %p387
        %p585 = pneg %p411
        %p586 = pneg %p408
        %p587 = pneg %p432
        %p588 = pneg %p429
        %p589 = pneg %p458
        %p590 = pneg %p455
        %s591 = sand.u32 %s445, 1
        %s592 = scalar_lea.sflag [#allocation3], %s591
        %s593 = sand.u32 %s445, 1
        %s594 = scalar_lea.vmem [#allocation2], %s593
        %p595 = scmp.lt.s32.totalorder %s33, 1
        %s596 = scalar_select %p595, %s33, 1
        %s597 = smul.addr %s596, 32
        %s598 = smul.addr %s597, 4
        %s599 = scalar_lea.vmem %s0, %s598
        %v601 = vld [vmem:[%s599] sm:$0xf]
        %v602 = vld [vmem:[%s599 + $0x4] sm:$0xf]
        %v603 = vld [vmem:[%s599 + $0x8] sm:$0xf]
        %v604 = vld [vmem:[%s599 + $0xc] sm:$0xf]
        %v605 = vld [vmem:[%s599 + $0x10] sm:$0xf]
        %v606 = vld [vmem:[%s599 + $0x14] sm:$0xf]
        %v607 = vld [vmem:[%s599 + $0x18] sm:$0xf]
        %v608 = vld [vmem:[%s599 + $0x1c] sm:$0xf]
        %v609 = vld [vmem:[%s599 + $0x20] sm:$0xf]
        %v610 = vld [vmem:[%s599 + $0x24] sm:$0xf]
        %v611 = vld [vmem:[%s599 + $0x28] sm:$0xf]
        %v612 = vld [vmem:[%s599 + $0x2c] sm:$0xf]
        %v613 = vld [vmem:[%s599 + $0x30] sm:$0xf]
        %v614 = vld [vmem:[%s599 + $0x34] sm:$0xf]
        %v615 = vld [vmem:[%s599 + $0x38] sm:$0xf]
        %v616 = vld [vmem:[%s599 + $0x3c] sm:$0xf]
        %v617 = vld [vmem:[%s599 + $0x40] sm:$0xf]
        %v618 = vld [vmem:[%s599 + $0x44] sm:$0xf]
        %v619 = vld [vmem:[%s599 + $0x48] sm:$0xf]
        %v620 = vld [vmem:[%s599 + $0x4c] sm:$0xf]
        %v621 = vld [vmem:[%s599 + $0x50] sm:$0xf]
        %v622 = vld [vmem:[%s599 + $0x54] sm:$0xf]
        %v623 = vld [vmem:[%s599 + $0x58] sm:$0xf]
        %v624 = vld [vmem:[%s599 + $0x5c] sm:$0xf]
        %v625 = vld [vmem:[%s599 + $0x60] sm:$0xf]
        %v626 = vld [vmem:[%s599 + $0x64] sm:$0xf]
        %v627 = vld [vmem:[%s599 + $0x68] sm:$0xf]
        %v628 = vld [vmem:[%s599 + $0x6c] sm:$0xf]
        %v629 = vld [vmem:[%s599 + $0x70] sm:$0xf]
        %v630 = vld [vmem:[%s599 + $0x74] sm:$0xf]
        %v631 = vld [vmem:[%s599 + $0x78] sm:$0xf]
        %v632 = vld [vmem:[%s599 + $0x7c] sm:$0xf]
        %v633 = vld [vmem:[%s1] sm:$0xf]
        %v634 = vld [vmem:[%s1 + $0x4] sm:$0xf]
        %v635 = vld [vmem:[%s1 + $0x8] sm:$0xf]
        %v636 = vld [vmem:[%s1 + $0xc] sm:$0xf]
        %v637 = vld [vmem:[%s2] sm:$0x1]
        %v639 = vlaneseq
        %v640 = vshrl.u32 %v639, 7
        %v641 = vsub.s32 0, %v640
        %v642 = vrot.slane %v637, %v641
        %v676 = vunpack.c.l.b16 %v601
        %v677 = vunpack.c.l.b16 %v602
        %v678 = vunpack.c.l.b16 %v603
        %v679 = vunpack.c.l.b16 %v604
        %v680 = vunpack.c.l.b16 %v605
        %v681 = vunpack.c.l.b16 %v606
        %v682 = vunpack.c.l.b16 %v607
        %v683 = vunpack.c.l.b16 %v608
        %v684 = vunpack.c.l.b16 %v609
        %v685 = vunpack.c.l.b16 %v610
        %v686 = vunpack.c.l.b16 %v611
        %v687 = vunpack.c.l.b16 %v612
        %v688 = vunpack.c.l.b16 %v613
        %v689 = vunpack.c.l.b16 %v614
        %v690 = vunpack.c.l.b16 %v615
        %v691 = vunpack.c.l.b16 %v616
        %v692 = vunpack.c.l.b16 %v617
        %v693 = vunpack.c.l.b16 %v618
        %v694 = vunpack.c.l.b16 %v619
        %v695 = vunpack.c.l.b16 %v620
        %v696 = vunpack.c.l.b16 %v621
        %v697 = vunpack.c.l.b16 %v622
        %v698 = vunpack.c.l.b16 %v623
        %v699 = vunpack.c.l.b16 %v624
        %v700 = vunpack.c.l.b16 %v625
        %v701 = vunpack.c.l.b16 %v626
        %v702 = vunpack.c.l.b16 %v627
        %v703 = vunpack.c.l.b16 %v628
        %v704 = vunpack.c.l.b16 %v629
        %v705 = vunpack.c.l.b16 %v630
        %v706 = vunpack.c.l.b16 %v631
        %v707 = vunpack.c.l.b16 %v632
        %v708 = vpack.c.b16 %v677, %v676
        %v709 = vpack.c.b16 %v679, %v678
        %v710 = vpack.c.b16 %v681, %v680
        %v711 = vpack.c.b16 %v683, %v682
        %v712 = vpack.c.b16 %v685, %v684
        %v713 = vpack.c.b16 %v687, %v686
        %v714 = vpack.c.b16 %v689, %v688
        %v715 = vpack.c.b16 %v691, %v690
        %v716 = vpack.c.b16 %v693, %v692
        %v717 = vpack.c.b16 %v695, %v694
        %v718 = vpack.c.b16 %v697, %v696
        %v719 = vpack.c.b16 %v699, %v698
        %v720 = vpack.c.b16 %v701, %v700
        %v721 = vpack.c.b16 %v703, %v702
        %v722 = vpack.c.b16 %v705, %v704
        %v723 = vpack.c.b16 %v707, %v706
        %v728 = vunpack.c.l.b16 %v633
        %v729 = vunpack.c.l.b16 %v634
        %v730 = vunpack.c.l.b16 %v635
        %v731 = vunpack.c.l.b16 %v636
        %v732 = vpack.c.b16 %v729, %v728
        %v733 = vpack.c.b16 %v731, %v730
        %vm736 = vcmask 261120
        %v738 = vsel %vm736, %v708, 0
        %v741 = vsel %vm736, %v709, 0
        %v744 = vsel %vm736, %v710, 0
        %v747 = vsel %vm736, %v711, 0
        %v750 = vsel %vm736, %v712, 0
        %v753 = vsel %vm736, %v713, 0
        %v756 = vsel %vm736, %v714, 0
        %v759 = vsel %vm736, %v715, 0
        %v762 = vsel %vm736, %v716, 0
        %v765 = vsel %vm736, %v717, 0
        %v768 = vsel %vm736, %v718, 0
        %v771 = vsel %vm736, %v719, 0
        %v774 = vsel %vm736, %v720, 0
        %v777 = vsel %vm736, %v721, 0
        %v780 = vsel %vm736, %v722, 0
        %v783 = vsel %vm736, %v723, 0
        %785 = vmatprep.subr.bf16.mxu0 0
        %786 = vmatpush1.bf16.msra.mxu0 0
        %787 = vmatprep.subr.bf16.mxu0 0
        %788 = vmatpush1.bf16.msra.mxu0 0
        %789 = vmatprep.subr.bf16.mxu0 0
        %790 = vmatpush1.bf16.msra.mxu0 0
        %791 = vmatprep.subr.bf16.mxu0 0
        %792 = vmatpush1.bf16.msra.mxu0 0
        %793 = vmatprep.subr.bf16.mxu0 0
        %794 = vmatpush1.bf16.msra.mxu0 0
        %795 = vmatprep.subr.bf16.mxu0 0
        %796 = vmatpush1.bf16.msra.mxu0 0
        %797 = vmatprep.subr.bf16.mxu0 0
        %798 = vmatpush1.bf16.msra.mxu0 %v733
        %799 = vmatprep.subr.bf16.mxu0 0
        %800 = vmatpush1.bf16.msra.mxu0 %v732
        %801 = vmatprep.subr.bf16.mxu0 0
        %802 = vmatpush2.bf16.msra.mxu0 0
        %803 = vmatprep.subr.bf16.mxu0 0
        %804 = vmatpush2.bf16.msra.mxu0 0
        %805 = vmatprep.subr.bf16.mxu0 0
        %806 = vmatpush2.bf16.msra.mxu0 0
        %807 = vmatprep.subr.bf16.mxu0 0
        %808 = vmatpush2.bf16.msra.mxu0 0
        %809 = vmatprep.subr.bf16.mxu0 0
        %810 = vmatpush2.bf16.msra.mxu0 0
        %811 = vmatprep.subr.bf16.mxu0 0
        %812 = vmatpush2.bf16.msra.mxu0 0
        %813 = vmatprep.subr.bf16.mxu0 0
        %814 = vmatpush2.bf16.msra.mxu0 0
        %815 = vmatprep.subr.bf16.mxu0 0
        %816 = vmatpush2.bf16.msra.mxu0 0
        %817 = vmatprep.mubr.bf16.mxu0 0
        %818 = vmatmul.mubr.bf16.gmra.mxu0 %v738
        %v819 = vpop.f32.mrf.mxu0
        %v820 = vadd.f32 %v642, %v819
        %v821 = vpop.f32.mrf.mxu0
        %v822 = vpop.f32.mrf.mxu0
        %v823 = vadd.f32 %v642, %v822
        %v824 = vpop.f32.mrf.mxu0
        %825 = vmatprep.mubr.bf16.mxu0 0
        %826 = vmatmul.mubr.bf16.gmra.mxu0 %v741
        %v827 = vpop.f32.mrf.mxu0
        %v828 = vadd.f32 %v642, %v827
        %v829 = vpop.f32.mrf.mxu0
        %v830 = vpop.f32.mrf.mxu0
        %v831 = vadd.f32 %v642, %v830
        %v832 = vpop.f32.mrf.mxu0
        %833 = vmatprep.mubr.bf16.mxu0 0
        %834 = vmatmul.mubr.bf16.gmra.mxu0 %v744
        %v835 = vpop.f32.mrf.mxu0
        %v836 = vadd.f32 %v642, %v835
        %v837 = vpop.f32.mrf.mxu0
        %v838 = vpop.f32.mrf.mxu0
        %v839 = vadd.f32 %v642, %v838
        %v840 = vpop.f32.mrf.mxu0
        %841 = vmatprep.mubr.bf16.mxu0 0
        %842 = vmatmul.mubr.bf16.gmra.mxu0 %v747
        %v843 = vpop.f32.mrf.mxu0
        %v844 = vadd.f32 %v642, %v843
        %v845 = vpop.f32.mrf.mxu0
        %v846 = vpop.f32.mrf.mxu0
        %v847 = vadd.f32 %v642, %v846
        %v848 = vpop.f32.mrf.mxu0
        %849 = vmatprep.mubr.bf16.mxu0 0
        %850 = vmatmul.mubr.bf16.gmra.mxu0 %v750
        %v851 = vpop.f32.mrf.mxu0
        %v852 = vadd.f32 %v642, %v851
        %v853 = vpop.f32.mrf.mxu0
        %v854 = vpop.f32.mrf.mxu0
        %v855 = vadd.f32 %v642, %v854
        %v856 = vpop.f32.mrf.mxu0
        %857 = vmatprep.mubr.bf16.mxu0 0
        %858 = vmatmul.mubr.bf16.gmra.mxu0 %v753
        %v859 = vpop.f32.mrf.mxu0
        %v860 = vadd.f32 %v642, %v859
        %v861 = vpop.f32.mrf.mxu0
        %v862 = vpop.f32.mrf.mxu0
        %v863 = vadd.f32 %v642, %v862
        %v864 = vpop.f32.mrf.mxu0
        %865 = vmatprep.mubr.bf16.mxu0 0
        %866 = vmatmul.mubr.bf16.gmra.mxu0 %v756
        %v867 = vpop.f32.mrf.mxu0
        %v868 = vadd.f32 %v642, %v867
        %v869 = vpop.f32.mrf.mxu0
        %v870 = vpop.f32.mrf.mxu0
        %v871 = vadd.f32 %v642, %v870
        %v872 = vpop.f32.mrf.mxu0
        %873 = vmatprep.mubr.bf16.mxu0 0
        %874 = vmatmul.mubr.bf16.gmra.mxu0 %v759
        %v875 = vpop.f32.mrf.mxu0
        %v876 = vadd.f32 %v642, %v875
        %v877 = vpop.f32.mrf.mxu0
        %v878 = vpop.f32.mrf.mxu0
        %v879 = vadd.f32 %v642, %v878
        %v880 = vpop.f32.mrf.mxu0
        %881 = vmatprep.mubr.bf16.mxu0 0
        %882 = vmatmul.mubr.bf16.gmra.mxu0 %v762
        %v883 = vpop.f32.mrf.mxu0
        %v884 = vadd.f32 %v642, %v883
        %v885 = vpop.f32.mrf.mxu0
        %v886 = vpop.f32.mrf.mxu0
        %v887 = vadd.f32 %v642, %v886
        %v888 = vpop.f32.mrf.mxu0
        %889 = vmatprep.mubr.bf16.mxu0 0
        %890 = vmatmul.mubr.bf16.gmra.mxu0 %v765
        %v891 = vpop.f32.mrf.mxu0
        %v892 = vadd.f32 %v642, %v891
        %v893 = vpop.f32.mrf.mxu0
        %v894 = vpop.f32.mrf.mxu0
        %v895 = vadd.f32 %v642, %v894
        %v896 = vpop.f32.mrf.mxu0
        %897 = vmatprep.mubr.bf16.mxu0 0
        %898 = vmatmul.mubr.bf16.gmra.mxu0 %v768
        %v899 = vpop.f32.mrf.mxu0
        %v900 = vadd.f32 %v642, %v899
        %v901 = vpop.f32.mrf.mxu0
        %v902 = vpop.f32.mrf.mxu0
        %v903 = vadd.f32 %v642, %v902
        %v904 = vpop.f32.mrf.mxu0
        %905 = vmatprep.mubr.bf16.mxu0 0
        %906 = vmatmul.mubr.bf16.gmra.mxu0 %v771
        %v907 = vpop.f32.mrf.mxu0
        %v908 = vadd.f32 %v642, %v907
        %v909 = vpop.f32.mrf.mxu0
        %v910 = vpop.f32.mrf.mxu0
        %v911 = vadd.f32 %v642, %v910
        %v912 = vpop.f32.mrf.mxu0
        %913 = vmatprep.mubr.bf16.mxu0 0
        %914 = vmatmul.mubr.bf16.gmra.mxu0 %v774
        %v915 = vpop.f32.mrf.mxu0
        %v916 = vadd.f32 %v642, %v915
        %v917 = vpop.f32.mrf.mxu0
        %v918 = vpop.f32.mrf.mxu0
        %v919 = vadd.f32 %v642, %v918
        %v920 = vpop.f32.mrf.mxu0
        %921 = vmatprep.mubr.bf16.mxu0 0
        %922 = vmatmul.mubr.bf16.gmra.mxu0 %v777
        %v923 = vpop.f32.mrf.mxu0
        %v924 = vadd.f32 %v642, %v923
        %v925 = vpop.f32.mrf.mxu0
        %v926 = vpop.f32.mrf.mxu0
        %v927 = vadd.f32 %v642, %v926
        %v928 = vpop.f32.mrf.mxu0
        %929 = vmatprep.mubr.bf16.mxu0 0
        %930 = vmatmul.mubr.bf16.gmra.mxu0 %v780
        %v931 = vpop.f32.mrf.mxu0
        %v932 = vadd.f32 %v642, %v931
        %v933 = vpop.f32.mrf.mxu0
        %v934 = vpop.f32.mrf.mxu0
        %v935 = vadd.f32 %v642, %v934
        %v936 = vpop.f32.mrf.mxu0
        %937 = vmatprep.mubr.bf16.mxu0 0
        %938 = vmatmul.mubr.bf16.gmra.mxu0 %v783
        %v939 = vpop.f32.mrf.mxu0
        %v940 = vadd.f32 %v642, %v939
        %v941 = vpop.f32.mrf.mxu0
        %v942 = vpop.f32.mrf.mxu0
        %v943 = vadd.f32 %v642, %v942
        %v944 = vpop.f32.mrf.mxu0
        %945 = vdwg.mxu0
        %v946 = vadd.f32 %v820, 3.0
        %v947 = vadd.f32 %v823, 3.0
        %v948 = vadd.f32 %v828, 3.0
        %v949 = vadd.f32 %v831, 3.0
        %v950 = vadd.f32 %v836, 3.0
        %v951 = vadd.f32 %v839, 3.0
        %v952 = vadd.f32 %v844, 3.0
        %v953 = vadd.f32 %v847, 3.0
        %v954 = vadd.f32 %v852, 3.0
        %v955 = vadd.f32 %v855, 3.0
        %v956 = vadd.f32 %v860, 3.0
        %v957 = vadd.f32 %v863, 3.0
        %v958 = vadd.f32 %v868, 3.0
        %v959 = vadd.f32 %v871, 3.0
        %v960 = vadd.f32 %v876, 3.0
        %v961 = vadd.f32 %v879, 3.0
        %v962 = vadd.f32 %v884, 3.0
        %v963 = vadd.f32 %v887, 3.0
        %v964 = vadd.f32 %v892, 3.0
        %v965 = vadd.f32 %v895, 3.0
        %v966 = vadd.f32 %v900, 3.0
        %v967 = vadd.f32 %v903, 3.0
        %v968 = vadd.f32 %v908, 3.0
        %v969 = vadd.f32 %v911, 3.0
        %v970 = vadd.f32 %v916, 3.0
        %v971 = vadd.f32 %v919, 3.0
        %v972 = vadd.f32 %v924, 3.0
        %v973 = vadd.f32 %v927, 3.0
        %v974 = vadd.f32 %v932, 3.0
        %v975 = vadd.f32 %v935, 3.0
        %v976 = vadd.f32 %v940, 3.0
        %v977 = vadd.f32 %v943, 3.0
        %v978 = vmax.f32 %v946, 0.0
        %v979 = vmax.f32 %v947, 0.0
        %v980 = vmax.f32 %v948, 0.0
        %v981 = vmax.f32 %v949, 0.0
        %v982 = vmax.f32 %v950, 0.0
        %v983 = vmax.f32 %v951, 0.0
        %v984 = vmax.f32 %v952, 0.0
        %v985 = vmax.f32 %v953, 0.0
        %v986 = vmax.f32 %v954, 0.0
        %v987 = vmax.f32 %v955, 0.0
        %v988 = vmax.f32 %v956, 0.0
        %v989 = vmax.f32 %v957, 0.0
        %v990 = vmax.f32 %v958, 0.0
        %v991 = vmax.f32 %v959, 0.0
        %v992 = vmax.f32 %v960, 0.0
        %v993 = vmax.f32 %v961, 0.0
        %v994 = vmax.f32 %v962, 0.0
        %v995 = vmax.f32 %v963, 0.0
        %v996 = vmax.f32 %v964, 0.0
        %v997 = vmax.f32 %v965, 0.0
        %v998 = vmax.f32 %v966, 0.0
        %v999 = vmax.f32 %v967, 0.0
        %v1000 = vmax.f32 %v968, 0.0
        %v1001 = vmax.f32 %v969, 0.0
        %v1002 = vmax.f32 %v970, 0.0
        %v1003 = vmax.f32 %v971, 0.0
        %v1004 = vmax.f32 %v972, 0.0
        %v1005 = vmax.f32 %v973, 0.0
        %v1006 = vmax.f32 %v974, 0.0
        %v1007 = vmax.f32 %v975, 0.0
        %v1008 = vmax.f32 %v976, 0.0
        %v1009 = vmax.f32 %v977, 0.0
        %v1010 = vmin.f32 %v978, 6.0
        %v1011 = vmin.f32 %v979, 6.0
        %v1012 = vmin.f32 %v980, 6.0
        %v1013 = vmin.f32 %v981, 6.0
        %v1014 = vmin.f32 %v982, 6.0
        %v1015 = vmin.f32 %v983, 6.0
        %v1016 = vmin.f32 %v984, 6.0
        %v1017 = vmin.f32 %v985, 6.0
        %v1018 = vmin.f32 %v986, 6.0
        %v1019 = vmin.f32 %v987, 6.0
        %v1020 = vmin.f32 %v988, 6.0
        %v1021 = vmin.f32 %v989, 6.0
        %v1022 = vmin.f32 %v990, 6.0
        %v1023 = vmin.f32 %v991, 6.0
        %v1024 = vmin.f32 %v992, 6.0
        %v1025 = vmin.f32 %v993, 6.0
        %v1026 = vmin.f32 %v994, 6.0
        %v1027 = vmin.f32 %v995, 6.0
        %v1028 = vmin.f32 %v996, 6.0
        %v1029 = vmin.f32 %v997, 6.0
        %v1030 = vmin.f32 %v998, 6.0
        %v1031 = vmin.f32 %v999, 6.0
        %v1032 = vmin.f32 %v1000, 6.0
        %v1033 = vmin.f32 %v1001, 6.0
        %v1034 = vmin.f32 %v1002, 6.0
        %v1035 = vmin.f32 %v1003, 6.0
        %v1036 = vmin.f32 %v1004, 6.0
        %v1037 = vmin.f32 %v1005, 6.0
        %v1038 = vmin.f32 %v1006, 6.0
        %v1039 = vmin.f32 %v1007, 6.0
        %v1040 = vmin.f32 %v1008, 6.0
        %v1041 = vmin.f32 %v1009, 6.0
        %v1042 = vmul.f32 %v820, %v1010
        %v1043 = vmul.f32 %v823, %v1011
        %v1044 = vmul.f32 %v828, %v1012
        %v1045 = vmul.f32 %v831, %v1013
        %v1046 = vmul.f32 %v836, %v1014
        %v1047 = vmul.f32 %v839, %v1015
        %v1048 = vmul.f32 %v844, %v1016
        %v1049 = vmul.f32 %v847, %v1017
        %v1050 = vmul.f32 %v852, %v1018
        %v1051 = vmul.f32 %v855, %v1019
        %v1052 = vmul.f32 %v860, %v1020
        %v1053 = vmul.f32 %v863, %v1021
        %v1054 = vmul.f32 %v868, %v1022
        %v1055 = vmul.f32 %v871, %v1023
        %v1056 = vmul.f32 %v876, %v1024
        %v1057 = vmul.f32 %v879, %v1025
        %v1058 = vmul.f32 %v884, %v1026
        %v1059 = vmul.f32 %v887, %v1027
        %v1060 = vmul.f32 %v892, %v1028
        %v1061 = vmul.f32 %v895, %v1029
        %v1062 = vmul.f32 %v900, %v1030
        %v1063 = vmul.f32 %v903, %v1031
        %v1064 = vmul.f32 %v908, %v1032
        %v1065 = vmul.f32 %v911, %v1033
        %v1066 = vmul.f32 %v916, %v1034
        %v1067 = vmul.f32 %v919, %v1035
        %v1068 = vmul.f32 %v924, %v1036
        %v1069 = vmul.f32 %v927, %v1037
        %v1070 = vmul.f32 %v932, %v1038
        %v1071 = vmul.f32 %v935, %v1039
        %v1072 = vmul.f32 %v940, %v1040
        %v1073 = vmul.f32 %v943, %v1041
        %v1074 = vmul.f32 %v1042, 0.16666667
        %v1075 = vmul.f32 %v1043, 0.16666667
        %v1076 = vmul.f32 %v1044, 0.16666667
        %v1077 = vmul.f32 %v1045, 0.16666667
        %v1078 = vmul.f32 %v1046, 0.16666667
        %v1079 = vmul.f32 %v1047, 0.16666667
        %v1080 = vmul.f32 %v1048, 0.16666667
        %v1081 = vmul.f32 %v1049, 0.16666667
        %v1082 = vmul.f32 %v1050, 0.16666667
        %v1083 = vmul.f32 %v1051, 0.16666667
        %v1084 = vmul.f32 %v1052, 0.16666667
        %v1085 = vmul.f32 %v1053, 0.16666667
        %v1086 = vmul.f32 %v1054, 0.16666667
        %v1087 = vmul.f32 %v1055, 0.16666667
        %v1088 = vmul.f32 %v1056, 0.16666667
        %v1089 = vmul.f32 %v1057, 0.16666667
        %v1090 = vmul.f32 %v1058, 0.16666667
        %v1091 = vmul.f32 %v1059, 0.16666667
        %v1092 = vmul.f32 %v1060, 0.16666667
        %v1093 = vmul.f32 %v1061, 0.16666667
        %v1094 = vmul.f32 %v1062, 0.16666667
        %v1095 = vmul.f32 %v1063, 0.16666667
        %v1096 = vmul.f32 %v1064, 0.16666667
        %v1097 = vmul.f32 %v1065, 0.16666667
        %v1098 = vmul.f32 %v1066, 0.16666667
        %v1099 = vmul.f32 %v1067, 0.16666667
        %v1100 = vmul.f32 %v1068, 0.16666667
        %v1101 = vmul.f32 %v1069, 0.16666667
        %v1102 = vmul.f32 %v1070, 0.16666667
        %v1103 = vmul.f32 %v1071, 0.16666667
        %v1104 = vmul.f32 %v1072, 0.16666667
        %v1105 = vmul.f32 %v1073, 0.16666667
        %v1106 = vld [vmem:[%s3] sm:$0xff]
        %v1107 = vld [vmem:[%s3 + $0x8] sm:$0xff]
        %v1108 = vld [vmem:[%s3 + $0x10] sm:$0xff]
        %v1109 = vld [vmem:[%s3 + $0x18] sm:$0xff]
        %v1110 = vld [vmem:[%s3 + $0x20] sm:$0xff]
        %v1111 = vld [vmem:[%s3 + $0x28] sm:$0xff]
        %v1112 = vld [vmem:[%s3 + $0x30] sm:$0xff]
        %v1113 = vld [vmem:[%s3 + $0x38] sm:$0xff]
        %v1114 = vld [vmem:[%s3 + $0x40] sm:$0xff]
        %v1115 = vld [vmem:[%s3 + $0x48] sm:$0xff]
        %v1116 = vld [vmem:[%s3 + $0x50] sm:$0xff]
        %v1117 = vld [vmem:[%s3 + $0x58] sm:$0xff]
        %v1118 = vld [vmem:[%s3 + $0x60] sm:$0xff]
        %v1119 = vld [vmem:[%s3 + $0x68] sm:$0xff]
        %v1120 = vld [vmem:[%s3 + $0x70] sm:$0xff]
        %v1121 = vld [vmem:[%s3 + $0x78] sm:$0xff]
        %v1122 = vld [vmem:[%s3 + $0x80] sm:$0xff]
        %v1123 = vld [vmem:[%s3 + $0x88] sm:$0xff]
        %v1124 = vld [vmem:[%s3 + $0x90] sm:$0xff]
        %v1125 = vld [vmem:[%s3 + $0x98] sm:$0xff]
        %v1126 = vld [vmem:[%s3 + $0xa0] sm:$0xff]
        %v1127 = vld [vmem:[%s3 + $0xa8] sm:$0xff]
        %v1128 = vld [vmem:[%s3 + $0xb0] sm:$0xff]
        %v1129 = vld [vmem:[%s3 + $0xb8] sm:$0xff]
        %v1130 = vld [vmem:[%s3 + $0xc0] sm:$0xff]
        %v1131 = vld [vmem:[%s3 + $0xc8] sm:$0xff]
        %v1132 = vld [vmem:[%s3 + $0xd0] sm:$0xff]
        %v1133 = vld [vmem:[%s3 + $0xd8] sm:$0xff]
        %v1134 = vld [vmem:[%s3 + $0xe0] sm:$0xff]
        %v1135 = vld [vmem:[%s3 + $0xe8] sm:$0xff]
        %v1136 = vld [vmem:[%s3 + $0xf0] sm:$0xff]
        %v1137 = vld [vmem:[%s3 + $0xf8] sm:$0xff]
        %v1138 = vld [vmem:[%s3 + $0x100] sm:$0xff]
        %v1139 = vld [vmem:[%s3 + $0x108] sm:$0xff]
        %v1140 = vld [vmem:[%s3 + $0x110] sm:$0xff]
        %v1141 = vld [vmem:[%s3 + $0x118] sm:$0xff]
        %v1142 = vld [vmem:[%s3 + $0x120] sm:$0xff]
        %v1143 = vld [vmem:[%s3 + $0x128] sm:$0xff]
        %v1144 = vld [vmem:[%s3 + $0x130] sm:$0xff]
        %v1145 = vld [vmem:[%s3 + $0x138] sm:$0xff]
        %v1146 = vld [vmem:[%s3 + $0x140] sm:$0xff]
        %v1147 = vld [vmem:[%s3 + $0x148] sm:$0xff]
        %v1148 = vld [vmem:[%s3 + $0x150] sm:$0xff]
        %v1149 = vld [vmem:[%s3 + $0x158] sm:$0xff]
        %v1150 = vld [vmem:[%s3 + $0x160] sm:$0xff]
        %v1151 = vld [vmem:[%s3 + $0x168] sm:$0xff]
        %v1152 = vld [vmem:[%s3 + $0x170] sm:$0xff]
        %v1153 = vld [vmem:[%s3 + $0x178] sm:$0xff]
        %v1154 = vld [vmem:[%s3 + $0x180] sm:$0xff]
        %v1155 = vld [vmem:[%s3 + $0x188] sm:$0xff]
        %v1156 = vld [vmem:[%s3 + $0x190] sm:$0xff]
        %v1157 = vld [vmem:[%s3 + $0x198] sm:$0xff]
        %v1158 = vld [vmem:[%s3 + $0x1a0] sm:$0xff]
        %v1159 = vld [vmem:[%s3 + $0x1a8] sm:$0xff]
        %v1160 = vld [vmem:[%s3 + $0x1b0] sm:$0xff]
        %v1161 = vld [vmem:[%s3 + $0x1b8] sm:$0xff]
        %v1162 = vld [vmem:[%s3 + $0x1c0] sm:$0xff]
        %v1163 = vld [vmem:[%s3 + $0x1c8] sm:$0xff]
        %v1164 = vld [vmem:[%s3 + $0x1d0] sm:$0xff]
        %v1165 = vld [vmem:[%s3 + $0x1d8] sm:$0xff]
        %v1166 = vld [vmem:[%s3 + $0x1e0] sm:$0xff]
        %v1167 = vld [vmem:[%s3 + $0x1e8] sm:$0xff]
        %v1168 = vld [vmem:[%s3 + $0x1f0] sm:$0xff]
        %v1169 = vld [vmem:[%s3 + $0x1f8] sm:$0xff]
        %v1170 = vld [vmem:[%s3 + $0x200] sm:$0xff]
        %v1171 = vld [vmem:[%s3 + $0x208] sm:$0xff]
        %v1172 = vld [vmem:[%s3 + $0x210] sm:$0xff]
        %v1173 = vld [vmem:[%s3 + $0x218] sm:$0xff]
        %v1174 = vld [vmem:[%s3 + $0x220] sm:$0xff]
        %v1175 = vld [vmem:[%s3 + $0x228] sm:$0xff]
        %v1176 = vld [vmem:[%s3 + $0x230] sm:$0xff]
        %v1177 = vld [vmem:[%s3 + $0x238] sm:$0xff]
        %v1178 = vld [vmem:[%s3 + $0x240] sm:$0xff]
        %v1179 = vld [vmem:[%s3 + $0x248] sm:$0xff]
        %v1180 = vld [vmem:[%s3 + $0x250] sm:$0xff]
        %v1181 = vld [vmem:[%s3 + $0x258] sm:$0xff]
        %v1182 = vld [vmem:[%s3 + $0x260] sm:$0xff]
        %v1183 = vld [vmem:[%s3 + $0x268] sm:$0xff]
        %v1184 = vld [vmem:[%s3 + $0x270] sm:$0xff]
        %v1185 = vld [vmem:[%s3 + $0x278] sm:$0xff]
        %v1186 = vld [vmem:[%s3 + $0x280] sm:$0xff]
        %v1187 = vld [vmem:[%s3 + $0x288] sm:$0xff]
        %v1188 = vld [vmem:[%s3 + $0x290] sm:$0xff]
        %v1189 = vld [vmem:[%s3 + $0x298] sm:$0xff]
        %v1190 = vld [vmem:[%s3 + $0x2a0] sm:$0xff]
        %v1191 = vld [vmem:[%s3 + $0x2a8] sm:$0xff]
        %v1192 = vld [vmem:[%s3 + $0x2b0] sm:$0xff]
        %v1193 = vld [vmem:[%s3 + $0x2b8] sm:$0xff]
        %v1194 = vld [vmem:[%s3 + $0x2c0] sm:$0xff]
        %v1195 = vld [vmem:[%s3 + $0x2c8] sm:$0xff]
        %v1196 = vld [vmem:[%s3 + $0x2d0] sm:$0xff]
        %v1197 = vld [vmem:[%s3 + $0x2d8] sm:$0xff]
        %v1198 = vld [vmem:[%s3 + $0x2e0] sm:$0xff]
        %v1199 = vld [vmem:[%s3 + $0x2e8] sm:$0xff]
        %v1200 = vld [vmem:[%s3 + $0x2f0] sm:$0xff]
        %v1201 = vld [vmem:[%s3 + $0x2f8] sm:$0xff]
        %v1202 = vld [vmem:[%s3 + $0x300] sm:$0xff]
        %v1203 = vld [vmem:[%s3 + $0x308] sm:$0xff]
        %v1204 = vld [vmem:[%s3 + $0x310] sm:$0xff]
        %v1205 = vld [vmem:[%s3 + $0x318] sm:$0xff]
        %v1206 = vld [vmem:[%s3 + $0x320] sm:$0xff]
        %v1207 = vld [vmem:[%s3 + $0x328] sm:$0xff]
        %v1208 = vld [vmem:[%s3 + $0x330] sm:$0xff]
        %v1209 = vld [vmem:[%s3 + $0x338] sm:$0xff]
        %v1210 = vld [vmem:[%s3 + $0x340] sm:$0xff]
        %v1211 = vld [vmem:[%s3 + $0x348] sm:$0xff]
        %v1212 = vld [vmem:[%s3 + $0x350] sm:$0xff]
        %v1213 = vld [vmem:[%s3 + $0x358] sm:$0xff]
        %v1214 = vld [vmem:[%s3 + $0x360] sm:$0xff]
        %v1215 = vld [vmem:[%s3 + $0x368] sm:$0xff]
        %v1216 = vld [vmem:[%s3 + $0x370] sm:$0xff]
        %v1217 = vld [vmem:[%s3 + $0x378] sm:$0xff]
        %v1218 = vld [vmem:[%s3 + $0x380] sm:$0xff]
        %v1219 = vld [vmem:[%s3 + $0x388] sm:$0xff]
        %v1220 = vld [vmem:[%s3 + $0x390] sm:$0xff]
        %v1221 = vld [vmem:[%s3 + $0x398] sm:$0xff]
        %v1222 = vld [vmem:[%s3 + $0x3a0] sm:$0xff]
        %v1223 = vld [vmem:[%s3 + $0x3a8] sm:$0xff]
        %v1224 = vld [vmem:[%s3 + $0x3b0] sm:$0xff]
        %v1225 = vld [vmem:[%s3 + $0x3b8] sm:$0xff]
        %v1226 = vld [vmem:[%s3 + $0x3c0] sm:$0xff]
        %v1227 = vld [vmem:[%s3 + $0x3c8] sm:$0xff]
        %v1228 = vld [vmem:[%s3 + $0x3d0] sm:$0xff]
        %v1229 = vld [vmem:[%s3 + $0x3d8] sm:$0xff]
        %v1230 = vld [vmem:[%s3 + $0x3e0] sm:$0xff]
        %v1231 = vld [vmem:[%s3 + $0x3e8] sm:$0xff]
        %v1232 = vld [vmem:[%s3 + $0x3f0] sm:$0xff]
        %v1233 = vld [vmem:[%s3 + $0x3f8] sm:$0xff]
        %v1234 = vld [vmem:[%s3 + $0x400] sm:$0xff]
        %v1235 = vld [vmem:[%s3 + $0x408] sm:$0xff]
        %v1236 = vld [vmem:[%s3 + $0x410] sm:$0xff]
        %v1237 = vld [vmem:[%s3 + $0x418] sm:$0xff]
        %v1238 = vld [vmem:[%s3 + $0x420] sm:$0xff]
        %v1239 = vld [vmem:[%s3 + $0x428] sm:$0xff]
        %v1240 = vld [vmem:[%s3 + $0x430] sm:$0xff]
        %v1241 = vld [vmem:[%s3 + $0x438] sm:$0xff]
        %v1242 = vld [vmem:[%s3 + $0x440] sm:$0xff]
        %v1243 = vld [vmem:[%s3 + $0x448] sm:$0xff]
        %v1244 = vld [vmem:[%s3 + $0x450] sm:$0xff]
        %v1245 = vld [vmem:[%s3 + $0x458] sm:$0xff]
        %v1246 = vld [vmem:[%s3 + $0x460] sm:$0xff]
        %v1247 = vld [vmem:[%s3 + $0x468] sm:$0xff]
        %v1248 = vld [vmem:[%s3 + $0x470] sm:$0xff]
        %v1249 = vld [vmem:[%s3 + $0x478] sm:$0xff]
        %1250 = vmatprep.subr.mxu0 0.0
        %1251 = vmatpush1.msra.mxu0 %v1089
        %1252 = vmatprep.subr.mxu0 0.0
        %1253 = vmatpush1.msra.mxu0 %v1088
        %1254 = vmatprep.subr.mxu0 0.0
        %1255 = vmatpush1.msra.mxu0 %v1087
        %1256 = vmatprep.subr.mxu0 0.0
        %1257 = vmatpush1.msra.mxu0 %v1086
        %1258 = vmatprep.subr.mxu0 0.0
        %1259 = vmatpush1.msra.mxu0 %v1085
        %1260 = vmatprep.subr.mxu0 0.0
        %1261 = vmatpush1.msra.mxu0 %v1084
        %1262 = vmatprep.subr.mxu0 0.0
        %1263 = vmatpush1.msra.mxu0 %v1083
        %1264 = vmatprep.subr.mxu0 0.0
        %1265 = vmatpush1.msra.mxu0 %v1082
        %1266 = vmatprep.subr.mxu0 0.0
        %1267 = vmatpush1.msra.mxu0 %v1081
        %1268 = vmatprep.subr.mxu0 0.0
        %1269 = vmatpush1.msra.mxu0 %v1080
        %1270 = vmatprep.subr.mxu0 0.0
        %1271 = vmatpush1.msra.mxu0 %v1079
        %1272 = vmatprep.subr.mxu0 0.0
        %1273 = vmatpush1.msra.mxu0 %v1078
        %1274 = vmatprep.subr.mxu0 0.0
        %1275 = vmatpush1.msra.mxu0 %v1077
        %1276 = vmatprep.subr.mxu0 0.0
        %1277 = vmatpush1.msra.mxu0 %v1076
        %1278 = vmatprep.subr.mxu0 0.0
        %1279 = vmatpush1.msra.mxu0 %v1075
        %1280 = vmatprep.subr.mxu0 0.0
        %1281 = vmatpush1.msra.mxu0 %v1074
        %1282 = vmatprep.subr.mxu0 0.0
        %1283 = vmatpush2.msra.mxu0 %v1105
        %1284 = vmatprep.subr.mxu0 0.0
        %1285 = vmatpush2.msra.mxu0 %v1104
        %1286 = vmatprep.subr.mxu0 0.0
        %1287 = vmatpush2.msra.mxu0 %v1103
        %1288 = vmatprep.subr.mxu0 0.0
        %1289 = vmatpush2.msra.mxu0 %v1102
        %1290 = vmatprep.subr.mxu0 0.0
        %1291 = vmatpush2.msra.mxu0 %v1101
        %1292 = vmatprep.subr.mxu0 0.0
        %1293 = vmatpush2.msra.mxu0 %v1100
        %1294 = vmatprep.subr.mxu0 0.0
        %1295 = vmatpush2.msra.mxu0 %v1099
        %1296 = vmatprep.subr.mxu0 0.0
        %1297 = vmatpush2.msra.mxu0 %v1098
        %1298 = vmatprep.subr.mxu0 0.0
        %1299 = vmatpush2.msra.mxu0 %v1097
        %1300 = vmatprep.subr.mxu0 0.0
        %1301 = vmatpush2.msra.mxu0 %v1096
        %1302 = vmatprep.subr.mxu0 0.0
        %1303 = vmatpush2.msra.mxu0 %v1095
        %1304 = vmatprep.subr.mxu0 0.0
        %1305 = vmatpush2.msra.mxu0 %v1094
        %1306 = vmatprep.subr.mxu0 0.0
        %1307 = vmatpush2.msra.mxu0 %v1093
        %1308 = vmatprep.subr.mxu0 0.0
        %1309 = vmatpush2.msra.mxu0 %v1092
        %1310 = vmatprep.subr.mxu0 0.0
        %1311 = vmatpush2.msra.mxu0 %v1091
        %1312 = vmatprep.subr.mxu0 0.0
        %1313 = vmatpush2.msra.mxu0 %v1090
        %1314 = vmatprep.mubr.f32.mxu0 %v1107
        %1315 = vmatmul.mubr.f32.gmra.mxu0 %v1106
        %v1316 = vpop.f32.mrf.mxu0
        %v1317 = vadd.f32 0.0, %v1316
        %v1318 = vpop.f32.mrf.mxu0
        %1319 = vmatprep.mubr.f32.mxu0 %v1109
        %1320 = vmatmul.mubr.f32.gmra.mxu0 %v1108
        %v1321 = vpop.f32.mrf.mxu0
        %v1322 = vadd.f32 0.0, %v1321
        %v1323 = vpop.f32.mrf.mxu0
        %1324 = vmatprep.mubr.f32.mxu0 %v1111
        %1325 = vmatmul.mubr.f32.gmra.mxu0 %v1110
        %v1326 = vpop.f32.mrf.mxu0
        %v1327 = vadd.f32 0.0, %v1326
        %v1328 = vpop.f32.mrf.mxu0
        %1329 = vmatprep.mubr.f32.mxu0 %v1113
        %1330 = vmatmul.mubr.f32.gmra.mxu0 %v1112
        %v1331 = vpop.f32.mrf.mxu0
        %v1332 = vadd.f32 0.0, %v1331
        %v1333 = vpop.f32.mrf.mxu0
        %1334 = vmatprep.mubr.f32.mxu0 %v1115
        %1335 = vmatmul.mubr.f32.gmra.mxu0 %v1114
        %v1336 = vpop.f32.mrf.mxu0
        %v1337 = vadd.f32 0.0, %v1336
        %v1338 = vpop.f32.mrf.mxu0
        %1339 = vmatprep.mubr.f32.mxu0 %v1117
        %1340 = vmatmul.mubr.f32.gmra.mxu0 %v1116
        %v1341 = vpop.f32.mrf.mxu0
        %v1342 = vadd.f32 0.0, %v1341
        %v1343 = vpop.f32.mrf.mxu0
        %1344 = vmatprep.mubr.f32.mxu0 %v1119
        %1345 = vmatmul.mubr.f32.gmra.mxu0 %v1118
        %v1346 = vpop.f32.mrf.mxu0
        %v1347 = vadd.f32 0.0, %v1346
        %v1348 = vpop.f32.mrf.mxu0
        %1349 = vmatprep.mubr.f32.mxu0 %v1121
        %1350 = vmatmul.mubr.f32.gmra.mxu0 %v1120
        %v1351 = vpop.f32.mrf.mxu0
        %v1352 = vadd.f32 0.0, %v1351
        %v1353 = vpop.f32.mrf.mxu0
        %1354 = vmatprep.mubr.f32.mxu0 %v1123
        %1355 = vmatmul.mubr.f32.gmra.mxu0 %v1122
        %v1356 = vpop.f32.mrf.mxu0
        %v1357 = vadd.f32 0.0, %v1356
        %v1358 = vpop.f32.mrf.mxu0
        %1359 = vmatprep.mubr.f32.mxu0 %v1125
        %1360 = vmatmul.mubr.f32.gmra.mxu0 %v1124
        %v1361 = vpop.f32.mrf.mxu0
        %v1362 = vadd.f32 0.0, %v1361
        %v1363 = vpop.f32.mrf.mxu0
        %1364 = vmatprep.mubr.f32.mxu0 %v1127
        %1365 = vmatmul.mubr.f32.gmra.mxu0 %v1126
        %v1366 = vpop.f32.mrf.mxu0
        %v1367 = vadd.f32 0.0, %v1366
        %v1368 = vpop.f32.mrf.mxu0
        %1369 = vmatprep.mubr.f32.mxu0 %v1129
        %1370 = vmatmul.mubr.f32.gmra.mxu0 %v1128
        %v1371 = vpop.f32.mrf.mxu0
        %v1372 = vadd.f32 0.0, %v1371
        %v1373 = vpop.f32.mrf.mxu0
        %1374 = vmatprep.mubr.f32.mxu0 %v1131
        %1375 = vmatmul.mubr.f32.gmra.mxu0 %v1130
        %v1376 = vpop.f32.mrf.mxu0
        %v1377 = vadd.f32 0.0, %v1376
        %v1378 = vpop.f32.mrf.mxu0
        %1379 = vmatprep.mubr.f32.mxu0 %v1133
        %1380 = vmatmul.mubr.f32.gmra.mxu0 %v1132
        %v1381 = vpop.f32.mrf.mxu0
        %v1382 = vadd.f32 0.0, %v1381
        %v1383 = vpop.f32.mrf.mxu0
        %1384 = vmatprep.mubr.f32.mxu0 %v1135
        %1385 = vmatmul.mubr.f32.gmra.mxu0 %v1134
        %v1386 = vpop.f32.mrf.mxu0
        %v1387 = vadd.f32 0.0, %v1386
        %v1388 = vpop.f32.mrf.mxu0
        %1389 = vmatprep.mubr.f32.mxu0 %v1137
        %1390 = vmatmul.mubr.f32.gmra.mxu0 %v1136
        %v1391 = vpop.f32.mrf.mxu0
        %v1392 = vadd.f32 0.0, %v1391
        %v1393 = vpop.f32.mrf.mxu0
        %1394 = vmatprep.mubr.f32.mxu0 %v1139
        %1395 = vmatmul.mubr.f32.gmra.mxu0 %v1138
        %v1396 = vpop.f32.mrf.mxu0
        %v1397 = vadd.f32 0.0, %v1396
        %v1398 = vpop.f32.mrf.mxu0
        %1399 = vmatprep.mubr.f32.mxu0 %v1141
        %1400 = vmatmul.mubr.f32.gmra.mxu0 %v1140
        %v1401 = vpop.f32.mrf.mxu0
        %v1402 = vadd.f32 0.0, %v1401
        %v1403 = vpop.f32.mrf.mxu0
        %1404 = vmatprep.mubr.f32.mxu0 %v1143
        %1405 = vmatmul.mubr.f32.gmra.mxu0 %v1142
        %v1406 = vpop.f32.mrf.mxu0
        %v1407 = vadd.f32 0.0, %v1406
        %v1408 = vpop.f32.mrf.mxu0
        %1409 = vmatprep.mubr.f32.mxu0 %v1145
        %1410 = vmatmul.mubr.f32.gmra.mxu0 %v1144
        %v1411 = vpop.f32.mrf.mxu0
        %v1412 = vadd.f32 0.0, %v1411
        %v1413 = vpop.f32.mrf.mxu0
        %1414 = vmatprep.mubr.f32.mxu0 %v1147
        %1415 = vmatmul.mubr.f32.gmra.mxu0 %v1146
        %v1416 = vpop.f32.mrf.mxu0
        %v1417 = vadd.f32 0.0, %v1416
        %v1418 = vpop.f32.mrf.mxu0
        %1419 = vmatprep.mubr.f32.mxu0 %v1149
        %1420 = vmatmul.mubr.f32.gmra.mxu0 %v1148
        %v1421 = vpop.f32.mrf.mxu0
        %v1422 = vadd.f32 0.0, %v1421
        %v1423 = vpop.f32.mrf.mxu0
        %1424 = vmatprep.mubr.f32.mxu0 %v1151
        %1425 = vmatmul.mubr.f32.gmra.mxu0 %v1150
        %v1426 = vpop.f32.mrf.mxu0
        %v1427 = vadd.f32 0.0, %v1426
        %v1428 = vpop.f32.mrf.mxu0
        %1429 = vmatprep.mubr.f32.mxu0 %v1153
        %1430 = vmatmul.mubr.f32.gmra.mxu0 %v1152
        %v1431 = vpop.f32.mrf.mxu0
        %v1432 = vadd.f32 0.0, %v1431
        %v1433 = vpop.f32.mrf.mxu0
        %1434 = vmatprep.mubr.f32.mxu0 %v1155
        %1435 = vmatmul.mubr.f32.gmra.mxu0 %v1154
        %v1436 = vpop.f32.mrf.mxu0
        %v1437 = vadd.f32 0.0, %v1436
        %v1438 = vpop.f32.mrf.mxu0
        %1439 = vmatprep.mubr.f32.mxu0 %v1157
        %1440 = vmatmul.mubr.f32.gmra.mxu0 %v1156
        %v1441 = vpop.f32.mrf.mxu0
        %v1442 = vadd.f32 0.0, %v1441
        %v1443 = vpop.f32.mrf.mxu0
        %1444 = vmatprep.mubr.f32.mxu0 %v1159
        %1445 = vmatmul.mubr.f32.gmra.mxu0 %v1158
        %v1446 = vpop.f32.mrf.mxu0
        %v1447 = vadd.f32 0.0, %v1446
        %v1448 = vpop.f32.mrf.mxu0
        %1449 = vmatprep.mubr.f32.mxu0 %v1161
        %1450 = vmatmul.mubr.f32.gmra.mxu0 %v1160
        %v1451 = vpop.f32.mrf.mxu0
        %v1452 = vadd.f32 0.0, %v1451
        %v1453 = vpop.f32.mrf.mxu0
        %1454 = vmatprep.mubr.f32.mxu0 %v1163
        %1455 = vmatmul.mubr.f32.gmra.mxu0 %v1162
        %v1456 = vpop.f32.mrf.mxu0
        %v1457 = vadd.f32 0.0, %v1456
        %v1458 = vpop.f32.mrf.mxu0
        %1459 = vmatprep.mubr.f32.mxu0 %v1165
        %1460 = vmatmul.mubr.f32.gmra.mxu0 %v1164
        %v1461 = vpop.f32.mrf.mxu0
        %v1462 = vadd.f32 0.0, %v1461
        %v1463 = vpop.f32.mrf.mxu0
        %1464 = vmatprep.mubr.f32.mxu0 %v1167
        %1465 = vmatmul.mubr.f32.gmra.mxu0 %v1166
        %v1466 = vpop.f32.mrf.mxu0
        %v1467 = vadd.f32 0.0, %v1466
        %v1468 = vpop.f32.mrf.mxu0
        %1469 = vmatprep.mubr.f32.mxu0 %v1169
        %1470 = vmatmul.mubr.f32.gmra.mxu0 %v1168
        %v1471 = vpop.f32.mrf.mxu0
        %v1472 = vadd.f32 0.0, %v1471
        %v1473 = vpop.f32.mrf.mxu0
        %1474 = vmatprep.mubr.f32.mxu0 %v1171
        %1475 = vmatmul.mubr.f32.gmra.mxu0 %v1170
        %v1476 = vpop.f32.mrf.mxu0
        %v1477 = vadd.f32 0.0, %v1476
        %v1478 = vpop.f32.mrf.mxu0
        %1479 = vmatprep.mubr.f32.mxu0 %v1173
        %1480 = vmatmul.mubr.f32.gmra.mxu0 %v1172
        %v1481 = vpop.f32.mrf.mxu0
        %v1482 = vadd.f32 0.0, %v1481
        %v1483 = vpop.f32.mrf.mxu0
        %1484 = vmatprep.mubr.f32.mxu0 %v1175
        %1485 = vmatmul.mubr.f32.gmra.mxu0 %v1174
        %v1486 = vpop.f32.mrf.mxu0
        %v1487 = vadd.f32 0.0, %v1486
        %v1488 = vpop.f32.mrf.mxu0
        %1489 = vmatprep.mubr.f32.mxu0 %v1177
        %1490 = vmatmul.mubr.f32.gmra.mxu0 %v1176
        %v1491 = vpop.f32.mrf.mxu0
        %v1492 = vadd.f32 0.0, %v1491
        %v1493 = vpop.f32.mrf.mxu0
        %1494 = vmatprep.mubr.f32.mxu0 %v1179
        %1495 = vmatmul.mubr.f32.gmra.mxu0 %v1178
        %v1496 = vpop.f32.mrf.mxu0
        %v1497 = vadd.f32 0.0, %v1496
        %v1498 = vpop.f32.mrf.mxu0
        %1499 = vmatprep.mubr.f32.mxu0 %v1181
        %1500 = vmatmul.mubr.f32.gmra.mxu0 %v1180
        %v1501 = vpop.f32.mrf.mxu0
        %v1502 = vadd.f32 0.0, %v1501
        %v1503 = vpop.f32.mrf.mxu0
        %1504 = vmatprep.mubr.f32.mxu0 %v1183
        %1505 = vmatmul.mubr.f32.gmra.mxu0 %v1182
        %v1506 = vpop.f32.mrf.mxu0
        %v1507 = vadd.f32 0.0, %v1506
        %v1508 = vpop.f32.mrf.mxu0
        %1509 = vmatprep.mubr.f32.mxu0 %v1185
        %1510 = vmatmul.mubr.f32.gmra.mxu0 %v1184
        %v1511 = vpop.f32.mrf.mxu0
        %v1512 = vadd.f32 0.0, %v1511
        %v1513 = vpop.f32.mrf.mxu0
        %1514 = vmatprep.mubr.f32.mxu0 %v1187
        %1515 = vmatmul.mubr.f32.gmra.mxu0 %v1186
        %v1516 = vpop.f32.mrf.mxu0
        %v1517 = vadd.f32 0.0, %v1516
        %v1518 = vpop.f32.mrf.mxu0
        %1519 = vmatprep.mubr.f32.mxu0 %v1189
        %1520 = vmatmul.mubr.f32.gmra.mxu0 %v1188
        %v1521 = vpop.f32.mrf.mxu0
        %v1522 = vadd.f32 0.0, %v1521
        %v1523 = vpop.f32.mrf.mxu0
        %1524 = vmatprep.mubr.f32.mxu0 %v1191
        %1525 = vmatmul.mubr.f32.gmra.mxu0 %v1190
        %v1526 = vpop.f32.mrf.mxu0
        %v1527 = vadd.f32 0.0, %v1526
        %v1528 = vpop.f32.mrf.mxu0
        %1529 = vmatprep.mubr.f32.mxu0 %v1193
        %1530 = vmatmul.mubr.f32.gmra.mxu0 %v1192
        %v1531 = vpop.f32.mrf.mxu0
        %v1532 = vadd.f32 0.0, %v1531
        %v1533 = vpop.f32.mrf.mxu0
        %1534 = vmatprep.mubr.f32.mxu0 %v1195
        %1535 = vmatmul.mubr.f32.gmra.mxu0 %v1194
        %v1536 = vpop.f32.mrf.mxu0
        %v1537 = vadd.f32 0.0, %v1536
        %v1538 = vpop.f32.mrf.mxu0
        %1539 = vmatprep.mubr.f32.mxu0 %v1197
        %1540 = vmatmul.mubr.f32.gmra.mxu0 %v1196
        %v1541 = vpop.f32.mrf.mxu0
        %v1542 = vadd.f32 0.0, %v1541
        %v1543 = vpop.f32.mrf.mxu0
        %1544 = vmatprep.mubr.f32.mxu0 %v1199
        %1545 = vmatmul.mubr.f32.gmra.mxu0 %v1198
        %v1546 = vpop.f32.mrf.mxu0
        %v1547 = vadd.f32 0.0, %v1546
        %v1548 = vpop.f32.mrf.mxu0
        %1549 = vmatprep.mubr.f32.mxu0 %v1201
        %1550 = vmatmul.mubr.f32.gmra.mxu0 %v1200
        %v1551 = vpop.f32.mrf.mxu0
        %v1552 = vadd.f32 0.0, %v1551
        %v1553 = vpop.f32.mrf.mxu0
        %1554 = vmatprep.mubr.f32.mxu0 %v1203
        %1555 = vmatmul.mubr.f32.gmra.mxu0 %v1202
        %v1556 = vpop.f32.mrf.mxu0
        %v1557 = vadd.f32 0.0, %v1556
        %v1558 = vpop.f32.mrf.mxu0
        %1559 = vmatprep.mubr.f32.mxu0 %v1205
        %1560 = vmatmul.mubr.f32.gmra.mxu0 %v1204
        %v1561 = vpop.f32.mrf.mxu0
        %v1562 = vadd.f32 0.0, %v1561
        %v1563 = vpop.f32.mrf.mxu0
        %1564 = vmatprep.mubr.f32.mxu0 %v1207
        %1565 = vmatmul.mubr.f32.gmra.mxu0 %v1206
        %v1566 = vpop.f32.mrf.mxu0
        %v1567 = vadd.f32 0.0, %v1566
        %v1568 = vpop.f32.mrf.mxu0
        %1569 = vmatprep.mubr.f32.mxu0 %v1209
        %1570 = vmatmul.mubr.f32.gmra.mxu0 %v1208
        %v1571 = vpop.f32.mrf.mxu0
        %v1572 = vadd.f32 0.0, %v1571
        %v1573 = vpop.f32.mrf.mxu0
        %1574 = vmatprep.mubr.f32.mxu0 %v1211
        %1575 = vmatmul.mubr.f32.gmra.mxu0 %v1210
        %v1576 = vpop.f32.mrf.mxu0
        %v1577 = vadd.f32 0.0, %v1576
        %v1578 = vpop.f32.mrf.mxu0
        %1579 = vmatprep.mubr.f32.mxu0 %v1213
        %1580 = vmatmul.mubr.f32.gmra.mxu0 %v1212
        %v1581 = vpop.f32.mrf.mxu0
        %v1582 = vadd.f32 0.0, %v1581
        %v1583 = vpop.f32.mrf.mxu0
        %1584 = vmatprep.mubr.f32.mxu0 %v1215
        %1585 = vmatmul.mubr.f32.gmra.mxu0 %v1214
        %v1586 = vpop.f32.mrf.mxu0
        %v1587 = vadd.f32 0.0, %v1586
        %v1588 = vpop.f32.mrf.mxu0
        %1589 = vmatprep.mubr.f32.mxu0 %v1217
        %1590 = vmatmul.mubr.f32.gmra.mxu0 %v1216
        %v1591 = vpop.f32.mrf.mxu0
        %v1592 = vadd.f32 0.0, %v1591
        %v1593 = vpop.f32.mrf.mxu0
        %1594 = vmatprep.mubr.f32.mxu0 %v1219
        %1595 = vmatmul.mubr.f32.gmra.mxu0 %v1218
        %v1596 = vpop.f32.mrf.mxu0
        %v1597 = vadd.f32 0.0, %v1596
        %v1598 = vpop.f32.mrf.mxu0
        %1599 = vmatprep.mubr.f32.mxu0 %v1221
        %1600 = vmatmul.mubr.f32.gmra.mxu0 %v1220
        %v1601 = vpop.f32.mrf.mxu0
        %v1602 = vadd.f32 0.0, %v1601
        %v1603 = vpop.f32.mrf.mxu0
        %1604 = vmatprep.mubr.f32.mxu0 %v1223
        %1605 = vmatmul.mubr.f32.gmra.mxu0 %v1222
        %v1606 = vpop.f32.mrf.mxu0
        %v1607 = vadd.f32 0.0, %v1606
        %v1608 = vpop.f32.mrf.mxu0
        %1609 = vmatprep.mubr.f32.mxu0 %v1225
        %1610 = vmatmul.mubr.f32.gmra.mxu0 %v1224
        %v1611 = vpop.f32.mrf.mxu0
        %v1612 = vadd.f32 0.0, %v1611
        %v1613 = vpop.f32.mrf.mxu0
        %1614 = vmatprep.mubr.f32.mxu0 %v1227
        %1615 = vmatmul.mubr.f32.gmra.mxu0 %v1226
        %v1616 = vpop.f32.mrf.mxu0
        %v1617 = vadd.f32 0.0, %v1616
        %v1618 = vpop.f32.mrf.mxu0
        %1619 = vmatprep.mubr.f32.mxu0 %v1229
        %1620 = vmatmul.mubr.f32.gmra.mxu0 %v1228
        %v1621 = vpop.f32.mrf.mxu0
        %v1622 = vadd.f32 0.0, %v1621
        %v1623 = vpop.f32.mrf.mxu0
        %1624 = vmatprep.mubr.f32.mxu0 %v1231
        %1625 = vmatmul.mubr.f32.gmra.mxu0 %v1230
        %v1626 = vpop.f32.mrf.mxu0
        %v1627 = vadd.f32 0.0, %v1626
        %v1628 = vpop.f32.mrf.mxu0
        %1629 = vmatprep.mubr.f32.mxu0 %v1233
        %1630 = vmatmul.mubr.f32.gmra.mxu0 %v1232
        %v1631 = vpop.f32.mrf.mxu0
        %v1632 = vadd.f32 0.0, %v1631
        %v1633 = vpop.f32.mrf.mxu0
        %1634 = vmatprep.mubr.f32.mxu0 %v1235
        %1635 = vmatmul.mubr.f32.gmra.mxu0 %v1234
        %v1636 = vpop.f32.mrf.mxu0
        %v1637 = vadd.f32 0.0, %v1636
        %v1638 = vpop.f32.mrf.mxu0
        %1639 = vmatprep.mubr.f32.mxu0 %v1237
        %1640 = vmatmul.mubr.f32.gmra.mxu0 %v1236
        %v1641 = vpop.f32.mrf.mxu0
        %v1642 = vadd.f32 0.0, %v1641
        %v1643 = vpop.f32.mrf.mxu0
        %1644 = vmatprep.mubr.f32.mxu0 %v1239
        %1645 = vmatmul.mubr.f32.gmra.mxu0 %v1238
        %v1646 = vpop.f32.mrf.mxu0
        %v1647 = vadd.f32 0.0, %v1646
        %v1648 = vpop.f32.mrf.mxu0
        %1649 = vmatprep.mubr.f32.mxu0 %v1241
        %1650 = vmatmul.mubr.f32.gmra.mxu0 %v1240
        %v1651 = vpop.f32.mrf.mxu0
        %v1652 = vadd.f32 0.0, %v1651
        %v1653 = vpop.f32.mrf.mxu0
        %1654 = vmatprep.mubr.f32.mxu0 %v1243
        %1655 = vmatmul.mubr.f32.gmra.mxu0 %v1242
        %v1656 = vpop.f32.mrf.mxu0
        %v1657 = vadd.f32 0.0, %v1656
        %v1658 = vpop.f32.mrf.mxu0
        %1659 = vmatprep.mubr.f32.mxu0 %v1245
        %1660 = vmatmul.mubr.f32.gmra.mxu0 %v1244
        %v1661 = vpop.f32.mrf.mxu0
        %v1662 = vadd.f32 0.0, %v1661
        %v1663 = vpop.f32.mrf.mxu0
        %1664 = vmatprep.mubr.f32.mxu0 %v1247
        %1665 = vmatmul.mubr.f32.gmra.mxu0 %v1246
        %v1666 = vpop.f32.mrf.mxu0
        %v1667 = vadd.f32 0.0, %v1666
        %v1668 = vpop.f32.mrf.mxu0
        %1669 = vmatprep.mubr.f32.mxu0 %v1249
        %1670 = vmatmul.mubr.f32.gmra.mxu0 %v1248
        %v1671 = vpop.f32.mrf.mxu0
        %v1672 = vadd.f32 0.0, %v1671
        %v1673 = vpop.f32.mrf.mxu0
        %1674 = vdwg.mxu0
        %v1675 = vld [vmem:[%s4] sm:$0x1]
        %v1676 = vld [vmem:[%s4 + $0x1] sm:$0x1]
        %v1677 = vld [vmem:[%s4 + $0x2] sm:$0x1]
        %v1678 = vld [vmem:[%s4 + $0x3] sm:$0x1]
        %v1679 = vld [vmem:[%s4 + $0x4] sm:$0x1]
        %v1680 = vld [vmem:[%s4 + $0x5] sm:$0x1]
        %v1681 = vld [vmem:[%s4 + $0x6] sm:$0x1]
        %v1682 = vld [vmem:[%s4 + $0x7] sm:$0x1]
        %v1683 = vld [vmem:[%s4 + $0x8] sm:$0x1]
        %v1693 = vlaneseq
        %v1694 = vshrl.u32 %v1693, 7
        %v1695 = vsub.s32 0, %v1694
        %v1696 = vrot.slane %v1675, %v1695
        %v1697 = vlaneseq
        %v1698 = vshrl.u32 %v1697, 7
        %v1699 = vsub.s32 0, %v1698
        %v1700 = vrot.slane %v1676, %v1699
        %v1701 = vlaneseq
        %v1702 = vshrl.u32 %v1701, 7
        %v1703 = vsub.s32 0, %v1702
        %v1704 = vrot.slane %v1677, %v1703
        %v1705 = vlaneseq
        %v1706 = vshrl.u32 %v1705, 7
        %v1707 = vsub.s32 0, %v1706
        %v1708 = vrot.slane %v1678, %v1707
        %v1709 = vlaneseq
        %v1710 = vshrl.u32 %v1709, 7
        %v1711 = vsub.s32 0, %v1710
        %v1712 = vrot.slane %v1679, %v1711
        %v1713 = vlaneseq
        %v1714 = vshrl.u32 %v1713, 7
        %v1715 = vsub.s32 0, %v1714
        %v1716 = vrot.slane %v1680, %v1715
        %v1717 = vlaneseq
        %v1718 = vshrl.u32 %v1717, 7
        %v1719 = vsub.s32 0, %v1718
        %v1720 = vrot.slane %v1681, %v1719
        %v1721 = vlaneseq
        %v1722 = vshrl.u32 %v1721, 7
        %v1723 = vsub.s32 0, %v1722
        %v1724 = vrot.slane %v1682, %v1723
        %v1725 = vlaneseq
        %v1726 = vshrl.u32 %v1725, 7
        %v1727 = vsub.s32 0, %v1726
        %v1728 = vrot.slane %v1683, %v1727
        %v1738 = vmul.f32 %v1317, %v1696
        %v1739 = vmul.f32 %v1322, %v1696
        %v1740 = vmul.f32 %v1327, %v1696
        %v1741 = vmul.f32 %v1332, %v1696
        %v1742 = vmul.f32 %v1337, %v1696
        %v1743 = vmul.f32 %v1342, %v1696
        %v1744 = vmul.f32 %v1347, %v1696
        %v1745 = vmul.f32 %v1352, %v1696
        %v1746 = vmul.f32 %v1357, %v1700
        %v1747 = vmul.f32 %v1362, %v1700
        %v1748 = vmul.f32 %v1367, %v1700
        %v1749 = vmul.f32 %v1372, %v1700
        %v1750 = vmul.f32 %v1377, %v1700
        %v1751 = vmul.f32 %v1382, %v1700
        %v1752 = vmul.f32 %v1387, %v1700
        %v1753 = vmul.f32 %v1392, %v1700
        %v1754 = vmul.f32 %v1397, %v1704
        %v1755 = vmul.f32 %v1402, %v1704
        %v1756 = vmul.f32 %v1407, %v1704
        %v1757 = vmul.f32 %v1412, %v1704
        %v1758 = vmul.f32 %v1417, %v1704
        %v1759 = vmul.f32 %v1422, %v1704
        %v1760 = vmul.f32 %v1427, %v1704
        %v1761 = vmul.f32 %v1432, %v1704
        %v1762 = vmul.f32 %v1437, %v1708
        %v1763 = vmul.f32 %v1442, %v1708
        %v1764 = vmul.f32 %v1447, %v1708
        %v1765 = vmul.f32 %v1452, %v1708
        %v1766 = vmul.f32 %v1457, %v1708
        %v1767 = vmul.f32 %v1462, %v1708
        %v1768 = vmul.f32 %v1467, %v1708
        %v1769 = vmul.f32 %v1472, %v1708
        %v1770 = vmul.f32 %v1477, %v1712
        %v1771 = vmul.f32 %v1482, %v1712
        %v1772 = vmul.f32 %v1487, %v1712
        %v1773 = vmul.f32 %v1492, %v1712
        %v1774 = vmul.f32 %v1497, %v1712
        %v1775 = vmul.f32 %v1502, %v1712
        %v1776 = vmul.f32 %v1507, %v1712
        %v1777 = vmul.f32 %v1512, %v1712
        %v1778 = vmul.f32 %v1517, %v1716
        %v1779 = vmul.f32 %v1522, %v1716
        %v1780 = vmul.f32 %v1527, %v1716
        %v1781 = vmul.f32 %v1532, %v1716
        %v1782 = vmul.f32 %v1537, %v1716
        %v1783 = vmul.f32 %v1542, %v1716
        %v1784 = vmul.f32 %v1547, %v1716
        %v1785 = vmul.f32 %v1552, %v1716
        %v1786 = vmul.f32 %v1557, %v1720
        %v1787 = vmul.f32 %v1562, %v1720
        %v1788 = vmul.f32 %v1567, %v1720
        %v1789 = vmul.f32 %v1572, %v1720
        %v1790 = vmul.f32 %v1577, %v1720
        %v1791 = vmul.f32 %v1582, %v1720
        %v1792 = vmul.f32 %v1587, %v1720
        %v1793 = vmul.f32 %v1592, %v1720
        %v1794 = vmul.f32 %v1597, %v1724
        %v1795 = vmul.f32 %v1602, %v1724
        %v1796 = vmul.f32 %v1607, %v1724
        %v1797 = vmul.f32 %v1612, %v1724
        %v1798 = vmul.f32 %v1617, %v1724
        %v1799 = vmul.f32 %v1622, %v1724
        %v1800 = vmul.f32 %v1627, %v1724
        %v1801 = vmul.f32 %v1632, %v1724
        %v1802 = vmul.f32 %v1637, %v1728
        %v1803 = vmul.f32 %v1642, %v1728
        %v1804 = vmul.f32 %v1647, %v1728
        %v1805 = vmul.f32 %v1652, %v1728
        %v1806 = vmul.f32 %v1657, %v1728
        %v1807 = vmul.f32 %v1662, %v1728
        %v1808 = vmul.f32 %v1667, %v1728
        %v1809 = vmul.f32 %v1672, %v1728
        %vm1810 = vcmask 130048
        %v1811 = vsel %vm1810, %v1738, 0.0
        %v1812 = vsel %vm1810, %v1746, 0.0
        %v1813 = vadd.f32 %v1811, %v1812
        %v1814 = vsel %vm1810, %v1754, 0.0
        %v1815 = vadd.f32 %v1813, %v1814
        %v1816 = vsel %vm1810, %v1762, 0.0
        %v1817 = vadd.f32 %v1815, %v1816
        %v1818 = vsel %vm1810, %v1770, 0.0
        %v1819 = vadd.f32 %v1817, %v1818
        %v1820 = vsel %vm1810, %v1778, 0.0
        %v1821 = vadd.f32 %v1819, %v1820
        %v1822 = vsel %vm1810, %v1786, 0.0
        %v1823 = vadd.f32 %v1821, %v1822
        %v1824 = vsel %vm1810, %v1794, 0.0
        %v1825 = vadd.f32 %v1823, %v1824
        %v1826 = vsel %vm1810, %v1802, 0.0
        %v1827 = vadd.f32 %v1825, %v1826
        %v1828 = vsel %vm1810, %v1739, 0.0
        %v1829 = vsel %vm1810, %v1747, 0.0
        %v1830 = vadd.f32 %v1828, %v1829
        %v1831 = vsel %vm1810, %v1755, 0.0
        %v1832 = vadd.f32 %v1830, %v1831
        %v1833 = vsel %vm1810, %v1763, 0.0
        %v1834 = vadd.f32 %v1832, %v1833
        %v1835 = vsel %vm1810, %v1771, 0.0
        %v1836 = vadd.f32 %v1834, %v1835
        %v1837 = vsel %vm1810, %v1779, 0.0
        %v1838 = vadd.f32 %v1836, %v1837
        %v1839 = vsel %vm1810, %v1787, 0.0
        %v1840 = vadd.f32 %v1838, %v1839
        %v1841 = vsel %vm1810, %v1795, 0.0
        %v1842 = vadd.f32 %v1840, %v1841
        %v1843 = vsel %vm1810, %v1803, 0.0
        %v1844 = vadd.f32 %v1842, %v1843
        %v1845 = vsel %vm1810, %v1740, 0.0
        %v1846 = vsel %vm1810, %v1748, 0.0
        %v1847 = vadd.f32 %v1845, %v1846
        %v1848 = vsel %vm1810, %v1756, 0.0
        %v1849 = vadd.f32 %v1847, %v1848
        %v1850 = vsel %vm1810, %v1764, 0.0
        %v1851 = vadd.f32 %v1849, %v1850
        %v1852 = vsel %vm1810, %v1772, 0.0
        %v1853 = vadd.f32 %v1851, %v1852
        %v1854 = vsel %vm1810, %v1780, 0.0
        %v1855 = vadd.f32 %v1853, %v1854
        %v1856 = vsel %vm1810, %v1788, 0.0
        %v1857 = vadd.f32 %v1855, %v1856
        %v1858 = vsel %vm1810, %v1796, 0.0
        %v1859 = vadd.f32 %v1857, %v1858
        %v1860 = vsel %vm1810, %v1804, 0.0
        %v1861 = vadd.f32 %v1859, %v1860
        %v1862 = vsel %vm1810, %v1741, 0.0
        %v1863 = vsel %vm1810, %v1749, 0.0
        %v1864 = vadd.f32 %v1862, %v1863
        %v1865 = vsel %vm1810, %v1757, 0.0
        %v1866 = vadd.f32 %v1864, %v1865
        %v1867 = vsel %vm1810, %v1765, 0.0
        %v1868 = vadd.f32 %v1866, %v1867
        %v1869 = vsel %vm1810, %v1773, 0.0
        %v1870 = vadd.f32 %v1868, %v1869
        %v1871 = vsel %vm1810, %v1781, 0.0
        %v1872 = vadd.f32 %v1870, %v1871
        %v1873 = vsel %vm1810, %v1789, 0.0
        %v1874 = vadd.f32 %v1872, %v1873
        %v1875 = vsel %vm1810, %v1797, 0.0
        %v1876 = vadd.f32 %v1874, %v1875
        %v1877 = vsel %vm1810, %v1805, 0.0
        %v1878 = vadd.f32 %v1876, %v1877
        %v1879 = vsel %vm1810, %v1742, 0.0
        %v1880 = vsel %vm1810, %v1750, 0.0
        %v1881 = vadd.f32 %v1879, %v1880
        %v1882 = vsel %vm1810, %v1758, 0.0
        %v1883 = vadd.f32 %v1881, %v1882
        %v1884 = vsel %vm1810, %v1766, 0.0
        %v1885 = vadd.f32 %v1883, %v1884
        %v1886 = vsel %vm1810, %v1774, 0.0
        %v1887 = vadd.f32 %v1885, %v1886
        %v1888 = vsel %vm1810, %v1782, 0.0
        %v1889 = vadd.f32 %v1887, %v1888
        %v1890 = vsel %vm1810, %v1790, 0.0
        %v1891 = vadd.f32 %v1889, %v1890
        %v1892 = vsel %vm1810, %v1798, 0.0
        %v1893 = vadd.f32 %v1891, %v1892
        %v1894 = vsel %vm1810, %v1806, 0.0
        %v1895 = vadd.f32 %v1893, %v1894
        %v1896 = vsel %vm1810, %v1743, 0.0
        %v1897 = vsel %vm1810, %v1751, 0.0
        %v1898 = vadd.f32 %v1896, %v1897
        %v1899 = vsel %vm1810, %v1759, 0.0
        %v1900 = vadd.f32 %v1898, %v1899
        %v1901 = vsel %vm1810, %v1767, 0.0
        %v1902 = vadd.f32 %v1900, %v1901
        %v1903 = vsel %vm1810, %v1775, 0.0
        %v1904 = vadd.f32 %v1902, %v1903
        %v1905 = vsel %vm1810, %v1783, 0.0
        %v1906 = vadd.f32 %v1904, %v1905
        %v1907 = vsel %vm1810, %v1791, 0.0
        %v1908 = vadd.f32 %v1906, %v1907
        %v1909 = vsel %vm1810, %v1799, 0.0
        %v1910 = vadd.f32 %v1908, %v1909
        %v1911 = vsel %vm1810, %v1807, 0.0
        %v1912 = vadd.f32 %v1910, %v1911
        %v1913 = vsel %vm1810, %v1744, 0.0
        %v1914 = vsel %vm1810, %v1752, 0.0
        %v1915 = vadd.f32 %v1913, %v1914
        %v1916 = vsel %vm1810, %v1760, 0.0
        %v1917 = vadd.f32 %v1915, %v1916
        %v1918 = vsel %vm1810, %v1768, 0.0
        %v1919 = vadd.f32 %v1917, %v1918
        %v1920 = vsel %vm1810, %v1776, 0.0
        %v1921 = vadd.f32 %v1919, %v1920
        %v1922 = vsel %vm1810, %v1784, 0.0
        %v1923 = vadd.f32 %v1921, %v1922
        %v1924 = vsel %vm1810, %v1792, 0.0
        %v1925 = vadd.f32 %v1923, %v1924
        %v1926 = vsel %vm1810, %v1800, 0.0
        %v1927 = vadd.f32 %v1925, %v1926
        %v1928 = vsel %vm1810, %v1808, 0.0
        %v1929 = vadd.f32 %v1927, %v1928
        %v1930 = vsel %vm1810, %v1745, 0.0
        %v1931 = vsel %vm1810, %v1753, 0.0
        %v1932 = vadd.f32 %v1930, %v1931
        %v1933 = vsel %vm1810, %v1761, 0.0
        %v1934 = vadd.f32 %v1932, %v1933
        %v1935 = vsel %vm1810, %v1769, 0.0
        %v1936 = vadd.f32 %v1934, %v1935
        %v1937 = vsel %vm1810, %v1777, 0.0
        %v1938 = vadd.f32 %v1936, %v1937
        %v1939 = vsel %vm1810, %v1785, 0.0
        %v1940 = vadd.f32 %v1938, %v1939
        %v1941 = vsel %vm1810, %v1793, 0.0
        %v1942 = vadd.f32 %v1940, %v1941
        %v1943 = vsel %vm1810, %v1801, 0.0
        %v1944 = vadd.f32 %v1942, %v1943
        %v1945 = vsel %vm1810, %v1809, 0.0
        %v1946 = vadd.f32 %v1944, %v1945
        %v1947 = vld [vmem:[%s5] sm:$0x1]
        %v1949 = vlaneseq
        %v1950 = vshrl.u32 %v1949, 7
        %v1951 = vsub.s32 0, %v1950
        %v1952 = vrot.slane %v1947, %v1951
        %v1954 = vadd.f32 %v1827, %v1952
        %v1955 = vadd.f32 %v1844, %v1952
        %v1956 = vadd.f32 %v1861, %v1952
        %v1957 = vadd.f32 %v1878, %v1952
        %v1958 = vadd.f32 %v1895, %v1952
        %v1959 = vadd.f32 %v1912, %v1952
        %v1960 = vadd.f32 %v1929, %v1952
        %v1961 = vadd.f32 %v1946, %v1952
        %v1962 = vmax.f32 %v1954, 0.0
        %v1963 = vmax.f32 %v1955, 0.0
        %v1964 = vmax.f32 %v1956, 0.0
        %v1965 = vmax.f32 %v1957, 0.0
        %v1966 = vmax.f32 %v1958, 0.0
        %v1967 = vmax.f32 %v1959, 0.0
        %v1968 = vmax.f32 %v1960, 0.0
        %v1969 = vmax.f32 %v1961, 0.0
        %v1970 = vpack.c.bf16 %v1963, %v1962
        %v1971 = vpack.c.bf16 %v1965, %v1964
        %v1972 = vpack.c.bf16 %v1967, %v1966
        %v1973 = vpack.c.bf16 %v1969, %v1968
        %v1974 = vld [vmem:[%s6] sm:$0xf]
        %v1975 = vld [vmem:[%s6 + $0x4] sm:$0xf]
        %v1976 = vld [vmem:[%s7] sm:$0x1]
        %v1978 = vlaneseq
        %v1979 = vshrl.u32 %v1978, 7
        %v1980 = vsub.s32 0, %v1979
        %v1981 = vrot.slane %v1976, %v1980
        %v1985 = vunpack.c.l.b16 %v1974
        %v1986 = vunpack.c.l.b16 %v1975
        %v1987 = vpack.c.b16 %v1986, %v1985
        %v1990 = vsel %vm1810, %v1970, 0
        %v1993 = vsel %vm1810, %v1971, 0
        %v1996 = vsel %vm1810, %v1972, 0
        %v1999 = vsel %vm1810, %v1973, 0
        %2001 = vmatprep.subr.bf16.mxu0 0
        %2002 = vmatpush1.bf16.msra.mxu0 0
        %2003 = vmatprep.subr.bf16.mxu0 0
        %2004 = vmatpush1.bf16.msra.mxu0 0
        %2005 = vmatprep.subr.bf16.mxu0 0
        %2006 = vmatpush1.bf16.msra.mxu0 0
        %2007 = vmatprep.subr.bf16.mxu0 0
        %2008 = vmatpush1.bf16.msra.mxu0 0
        %2009 = vmatprep.subr.bf16.mxu0 0
        %2010 = vmatpush1.bf16.msra.mxu0 0
        %2011 = vmatprep.subr.bf16.mxu0 0
        %2012 = vmatpush1.bf16.msra.mxu0 0
        %2013 = vmatprep.subr.bf16.mxu0 0
        %2014 = vmatpush1.bf16.msra.mxu0 0
        %2015 = vmatprep.subr.bf16.mxu0 0
        %2016 = vmatpush1.bf16.msra.mxu0 %v1987
        %2017 = vmatprep.subr.bf16.mxu0 0
        %2018 = vmatpush2.bf16.msra.mxu0 0
        %2019 = vmatprep.subr.bf16.mxu0 0
        %2020 = vmatpush2.bf16.msra.mxu0 0
        %2021 = vmatprep.subr.bf16.mxu0 0
        %2022 = vmatpush2.bf16.msra.mxu0 0
        %2023 = vmatprep.subr.bf16.mxu0 0
        %2024 = vmatpush2.bf16.msra.mxu0 0
        %2025 = vmatprep.subr.bf16.mxu0 0
        %2026 = vmatpush2.bf16.msra.mxu0 0
        %2027 = vmatprep.subr.bf16.mxu0 0
        %2028 = vmatpush2.bf16.msra.mxu0 0
        %2029 = vmatprep.subr.bf16.mxu0 0
        %2030 = vmatpush2.bf16.msra.mxu0 0
        %2031 = vmatprep.subr.bf16.mxu0 0
        %2032 = vmatpush2.bf16.msra.mxu0 0
        %2033 = vmatprep.mubr.bf16.mxu0 0
        %2034 = vmatmul.mubr.bf16.gmra.mxu0 %v1990
        %v2035 = vpop.f32.mrf.mxu0
        %v2036 = vadd.f32 %v1981, %v2035
        %v2037 = vpop.f32.mrf.mxu0
        %v2038 = vpop.f32.mrf.mxu0
        %v2039 = vadd.f32 %v1981, %v2038
        %v2040 = vpop.f32.mrf.mxu0
        %2041 = vmatprep.mubr.bf16.mxu0 0
        %2042 = vmatmul.mubr.bf16.gmra.mxu0 %v1993
        %v2043 = vpop.f32.mrf.mxu0
        %v2044 = vadd.f32 %v1981, %v2043
        %v2045 = vpop.f32.mrf.mxu0
        %v2046 = vpop.f32.mrf.mxu0
        %v2047 = vadd.f32 %v1981, %v2046
        %v2048 = vpop.f32.mrf.mxu0
        %2049 = vmatprep.mubr.bf16.mxu0 0
        %2050 = vmatmul.mubr.bf16.gmra.mxu0 %v1996
        %v2051 = vpop.f32.mrf.mxu0
        %v2052 = vadd.f32 %v1981, %v2051
        %v2053 = vpop.f32.mrf.mxu0
        %v2054 = vpop.f32.mrf.mxu0
        %v2055 = vadd.f32 %v1981, %v2054
        %v2056 = vpop.f32.mrf.mxu0
        %2057 = vmatprep.mubr.bf16.mxu0 0
        %2058 = vmatmul.mubr.bf16.gmra.mxu0 %v1999
        %v2059 = vpop.f32.mrf.mxu0
        %v2060 = vadd.f32 %v1981, %v2059
        %v2061 = vpop.f32.mrf.mxu0
        %v2062 = vpop.f32.mrf.mxu0
        %v2063 = vadd.f32 %v1981, %v2062
        %v2064 = vpop.f32.mrf.mxu0
        %2065 = vdwg.mxu0
        %v2066 = vadd.f32 %v2036, 3.0
        %v2067 = vadd.f32 %v2039, 3.0
        %v2068 = vadd.f32 %v2044, 3.0
        %v2069 = vadd.f32 %v2047, 3.0
        %v2070 = vadd.f32 %v2052, 3.0
        %v2071 = vadd.f32 %v2055, 3.0
        %v2072 = vadd.f32 %v2060, 3.0
        %v2073 = vadd.f32 %v2063, 3.0
        %v2074 = vmax.f32 %v2066, 0.0
        %v2075 = vmax.f32 %v2067, 0.0
        %v2076 = vmax.f32 %v2068, 0.0
        %v2077 = vmax.f32 %v2069, 0.0
        %v2078 = vmax.f32 %v2070, 0.0
        %v2079 = vmax.f32 %v2071, 0.0
        %v2080 = vmax.f32 %v2072, 0.0
        %v2081 = vmax.f32 %v2073, 0.0
        %v2082 = vmin.f32 %v2074, 6.0
        %v2083 = vmin.f32 %v2075, 6.0
        %v2084 = vmin.f32 %v2076, 6.0
        %v2085 = vmin.f32 %v2077, 6.0
        %v2086 = vmin.f32 %v2078, 6.0
        %v2087 = vmin.f32 %v2079, 6.0
        %v2088 = vmin.f32 %v2080, 6.0
        %v2089 = vmin.f32 %v2081, 6.0
        %v2090 = vmul.f32 %v2036, %v2082
        %v2091 = vmul.f32 %v2039, %v2083
        %v2092 = vmul.f32 %v2044, %v2084
        %v2093 = vmul.f32 %v2047, %v2085
        %v2094 = vmul.f32 %v2052, %v2086
        %v2095 = vmul.f32 %v2055, %v2087
        %v2096 = vmul.f32 %v2060, %v2088
        %v2097 = vmul.f32 %v2063, %v2089
        %v2098 = vmul.f32 %v2090, 0.16666667
        %v2099 = vmul.f32 %v2091, 0.16666667
        %v2100 = vmul.f32 %v2092, 0.16666667
        %v2101 = vmul.f32 %v2093, 0.16666667
        %v2102 = vmul.f32 %v2094, 0.16666667
        %v2103 = vmul.f32 %v2095, 0.16666667
        %v2104 = vmul.f32 %v2096, 0.16666667
        %v2105 = vmul.f32 %v2097, 0.16666667
        %v2106 = vld [vmem:[%s8] sm:$0xff]
        %v2107 = vld [vmem:[%s8 + $0x8] sm:$0xff]
        %v2108 = vld [vmem:[%s8 + $0x10] sm:$0xff]
        %v2109 = vld [vmem:[%s8 + $0x18] sm:$0xff]
        %v2110 = vld [vmem:[%s8 + $0x20] sm:$0xff]
        %v2111 = vld [vmem:[%s8 + $0x28] sm:$0xff]
        %v2112 = vld [vmem:[%s8 + $0x30] sm:$0xff]
        %v2113 = vld [vmem:[%s8 + $0x38] sm:$0xff]
        %v2114 = vld [vmem:[%s8 + $0x40] sm:$0xff]
        %v2115 = vld [vmem:[%s8 + $0x48] sm:$0xff]
        %v2116 = vld [vmem:[%s8 + $0x50] sm:$0xff]
        %v2117 = vld [vmem:[%s8 + $0x58] sm:$0xff]
        %v2118 = vld [vmem:[%s8 + $0x60] sm:$0xff]
        %v2119 = vld [vmem:[%s8 + $0x68] sm:$0xff]
        %v2120 = vld [vmem:[%s8 + $0x70] sm:$0xff]
        %v2121 = vld [vmem:[%s8 + $0x78] sm:$0xff]
        %v2122 = vld [vmem:[%s8 + $0x80] sm:$0xff]
        %v2123 = vld [vmem:[%s8 + $0x88] sm:$0xff]
        %vm2124 = vcmask 523264
        %v2126 = vsel %vm2124, %v2106, 0
        %v2129 = vsel %vm2124, %v2107, 0
        %v2132 = vsel %vm2124, %v2108, 0
        %v2135 = vsel %vm2124, %v2109, 0
        %v2138 = vsel %vm2124, %v2110, 0
        %v2141 = vsel %vm2124, %v2111, 0
        %v2144 = vsel %vm2124, %v2112, 0
        %v2147 = vsel %vm2124, %v2113, 0
        %v2150 = vsel %vm2124, %v2114, 0
        %v2153 = vsel %vm2124, %v2115, 0
        %v2156 = vsel %vm2124, %v2116, 0
        %v2159 = vsel %vm2124, %v2117, 0
        %v2162 = vsel %vm2124, %v2118, 0
        %v2165 = vsel %vm2124, %v2119, 0
        %v2168 = vsel %vm2124, %v2120, 0
        %v2171 = vsel %vm2124, %v2121, 0
        %v2174 = vsel %vm2124, %v2122, 0
        %v2177 = vsel %vm2124, %v2123, 0
        %2179 = vmatprep.subr.mxu0 0.0
        %2180 = vmatpush1.msra.mxu0 0.0
        %2181 = vmatprep.subr.mxu0 0.0
        %2182 = vmatpush1.msra.mxu0 0.0
        %2183 = vmatprep.subr.mxu0 0.0
        %2184 = vmatpush1.msra.mxu0 0.0
        %2185 = vmatprep.subr.mxu0 0.0
        %2186 = vmatpush1.msra.mxu0 0.0
        %2187 = vmatprep.subr.mxu0 0.0
        %2188 = vmatpush1.msra.mxu0 0.0
        %2189 = vmatprep.subr.mxu0 0.0
        %2190 = vmatpush1.msra.mxu0 0.0
        %2191 = vmatprep.subr.mxu0 0.0
        %2192 = vmatpush1.msra.mxu0 0.0
        %2193 = vmatprep.subr.mxu0 0.0
        %2194 = vmatpush1.msra.mxu0 0.0
        %2195 = vmatprep.subr.mxu0 0.0
        %2196 = vmatpush1.msra.mxu0 %v2105
        %2197 = vmatprep.subr.mxu0 0.0
        %2198 = vmatpush1.msra.mxu0 %v2104
        %2199 = vmatprep.subr.mxu0 0.0
        %2200 = vmatpush1.msra.mxu0 %v2103
        %2201 = vmatprep.subr.mxu0 0.0
        %2202 = vmatpush1.msra.mxu0 %v2102
        %2203 = vmatprep.subr.mxu0 0.0
        %2204 = vmatpush1.msra.mxu0 %v2101
        %2205 = vmatprep.subr.mxu0 0.0
        %2206 = vmatpush1.msra.mxu0 %v2100
        %2207 = vmatprep.subr.mxu0 0.0
        %2208 = vmatpush1.msra.mxu0 %v2099
        %2209 = vmatprep.subr.mxu0 0.0
        %2210 = vmatpush1.msra.mxu0 %v2098
        %2211 = vmatprep.subr.mxu0 0.0
        %2212 = vmatpush2.msra.mxu0 0.0
        %2213 = vmatprep.subr.mxu0 0.0
        %2214 = vmatpush2.msra.mxu0 0.0
        %2215 = vmatprep.subr.mxu0 0.0
        %2216 = vmatpush2.msra.mxu0 0.0
        %2217 = vmatprep.subr.mxu0 0.0
        %2218 = vmatpush2.msra.mxu0 0.0
        %2219 = vmatprep.subr.mxu0 0.0
        %2220 = vmatpush2.msra.mxu0 0.0
        %2221 = vmatprep.subr.mxu0 0.0
        %2222 = vmatpush2.msra.mxu0 0.0
        %2223 = vmatprep.subr.mxu0 0.0
        %2224 = vmatpush2.msra.mxu0 0.0
        %2225 = vmatprep.subr.mxu0 0.0
        %2226 = vmatpush2.msra.mxu0 0.0
        %2227 = vmatprep.subr.mxu0 0.0
        %2228 = vmatpush2.msra.mxu0 0.0
        %2229 = vmatprep.subr.mxu0 0.0
        %2230 = vmatpush2.msra.mxu0 0.0
        %2231 = vmatprep.subr.mxu0 0.0
        %2232 = vmatpush2.msra.mxu0 0.0
        %2233 = vmatprep.subr.mxu0 0.0
        %2234 = vmatpush2.msra.mxu0 0.0
        %2235 = vmatprep.subr.mxu0 0.0
        %2236 = vmatpush2.msra.mxu0 0.0
        %2237 = vmatprep.subr.mxu0 0.0
        %2238 = vmatpush2.msra.mxu0 0.0
        %2239 = vmatprep.subr.mxu0 0.0
        %2240 = vmatpush2.msra.mxu0 0.0
        %2241 = vmatprep.subr.mxu0 0.0
        %2242 = vmatpush2.msra.mxu0 0.0
        %2243 = vmatprep.mubr.f32.mxu0 0.0
        %2244 = vmatmul.mubr.f32.gmra.mxu0 %v2126
        %v2245 = vpop.f32.mrf.mxu0
        %v2246 = vadd.f32 0.0, %v2245
        %v2247 = vpop.f32.mrf.mxu0
        %2248 = vmatprep.mubr.f32.mxu0 0.0
        %2249 = vmatmul.mubr.f32.gmra.mxu0 %v2129
        %v2250 = vpop.f32.mrf.mxu0
        %v2251 = vadd.f32 0.0, %v2250
        %v2252 = vpop.f32.mrf.mxu0
        %2253 = vmatprep.mubr.f32.mxu0 0.0
        %2254 = vmatmul.mubr.f32.gmra.mxu0 %v2132
        %v2255 = vpop.f32.mrf.mxu0
        %v2256 = vadd.f32 0.0, %v2255
        %v2257 = vpop.f32.mrf.mxu0
        %2258 = vmatprep.mubr.f32.mxu0 0.0
        %2259 = vmatmul.mubr.f32.gmra.mxu0 %v2135
        %v2260 = vpop.f32.mrf.mxu0
        %v2261 = vadd.f32 0.0, %v2260
        %v2262 = vpop.f32.mrf.mxu0
        %2263 = vmatprep.mubr.f32.mxu0 0.0
        %2264 = vmatmul.mubr.f32.gmra.mxu0 %v2138
        %v2265 = vpop.f32.mrf.mxu0
        %v2266 = vadd.f32 0.0, %v2265
        %v2267 = vpop.f32.mrf.mxu0
        %2268 = vmatprep.mubr.f32.mxu0 0.0
        %2269 = vmatmul.mubr.f32.gmra.mxu0 %v2141
        %v2270 = vpop.f32.mrf.mxu0
        %v2271 = vadd.f32 0.0, %v2270
        %v2272 = vpop.f32.mrf.mxu0
        %2273 = vmatprep.mubr.f32.mxu0 0.0
        %2274 = vmatmul.mubr.f32.gmra.mxu0 %v2144
        %v2275 = vpop.f32.mrf.mxu0
        %v2276 = vadd.f32 0.0, %v2275
        %v2277 = vpop.f32.mrf.mxu0
        %2278 = vmatprep.mubr.f32.mxu0 0.0
        %2279 = vmatmul.mubr.f32.gmra.mxu0 %v2147
        %v2280 = vpop.f32.mrf.mxu0
        %v2281 = vadd.f32 0.0, %v2280
        %v2282 = vpop.f32.mrf.mxu0
        %2283 = vmatprep.mubr.f32.mxu0 0.0
        %2284 = vmatmul.mubr.f32.gmra.mxu0 %v2150
        %v2285 = vpop.f32.mrf.mxu0
        %v2286 = vadd.f32 0.0, %v2285
        %v2287 = vpop.f32.mrf.mxu0
        %2288 = vmatprep.mubr.f32.mxu0 0.0
        %2289 = vmatmul.mubr.f32.gmra.mxu0 %v2153
        %v2290 = vpop.f32.mrf.mxu0
        %v2291 = vadd.f32 0.0, %v2290
        %v2292 = vpop.f32.mrf.mxu0
        %2293 = vmatprep.mubr.f32.mxu0 0.0
        %2294 = vmatmul.mubr.f32.gmra.mxu0 %v2156
        %v2295 = vpop.f32.mrf.mxu0
        %v2296 = vadd.f32 0.0, %v2295
        %v2297 = vpop.f32.mrf.mxu0
        %2298 = vmatprep.mubr.f32.mxu0 0.0
        %2299 = vmatmul.mubr.f32.gmra.mxu0 %v2159
        %v2300 = vpop.f32.mrf.mxu0
        %v2301 = vadd.f32 0.0, %v2300
        %v2302 = vpop.f32.mrf.mxu0
        %2303 = vmatprep.mubr.f32.mxu0 0.0
        %2304 = vmatmul.mubr.f32.gmra.mxu0 %v2162
        %v2305 = vpop.f32.mrf.mxu0
        %v2306 = vadd.f32 0.0, %v2305
        %v2307 = vpop.f32.mrf.mxu0
        %2308 = vmatprep.mubr.f32.mxu0 0.0
        %2309 = vmatmul.mubr.f32.gmra.mxu0 %v2165
        %v2310 = vpop.f32.mrf.mxu0
        %v2311 = vadd.f32 0.0, %v2310
        %v2312 = vpop.f32.mrf.mxu0
        %2313 = vmatprep.mubr.f32.mxu0 0.0
        %2314 = vmatmul.mubr.f32.gmra.mxu0 %v2168
        %v2315 = vpop.f32.mrf.mxu0
        %v2316 = vadd.f32 0.0, %v2315
        %v2317 = vpop.f32.mrf.mxu0
        %2318 = vmatprep.mubr.f32.mxu0 0.0
        %2319 = vmatmul.mubr.f32.gmra.mxu0 %v2171
        %v2320 = vpop.f32.mrf.mxu0
        %v2321 = vadd.f32 0.0, %v2320
        %v2322 = vpop.f32.mrf.mxu0
        %2323 = vmatprep.mubr.f32.mxu0 0.0
        %2324 = vmatmul.mubr.f32.gmra.mxu0 %v2174
        %v2325 = vpop.f32.mrf.mxu0
        %v2326 = vadd.f32 0.0, %v2325
        %v2327 = vpop.f32.mrf.mxu0
        %2328 = vmatprep.mubr.f32.mxu0 0.0
        %2329 = vmatmul.mubr.f32.gmra.mxu0 %v2177
        %v2330 = vpop.f32.mrf.mxu0
        %v2331 = vadd.f32 0.0, %v2330
        %v2332 = vpop.f32.mrf.mxu0
        %2333 = vdwg.mxu0
        %v2334 = vld [vmem:[%s9] sm:$0x1]
        %v2335 = vld [vmem:[%s9 + $0x1] sm:$0x1]
        %v2336 = vld [vmem:[%s9 + $0x2] sm:$0x1]
        %v2337 = vld [vmem:[%s9 + $0x3] sm:$0x1]
        %v2338 = vld [vmem:[%s9 + $0x4] sm:$0x1]
        %v2339 = vld [vmem:[%s9 + $0x5] sm:$0x1]
        %v2340 = vld [vmem:[%s9 + $0x6] sm:$0x1]
        %v2341 = vld [vmem:[%s9 + $0x7] sm:$0x1]
        %v2342 = vld [vmem:[%s9 + $0x8] sm:$0x1]
        %v2352 = vlaneseq
        %v2353 = vshrl.u32 %v2352, 7
        %v2354 = vsub.s32 0, %v2353
        %v2355 = vrot.slane %v2334, %v2354
        %v2356 = vlaneseq
        %v2357 = vshrl.u32 %v2356, 7
        %v2358 = vsub.s32 0, %v2357
        %v2359 = vrot.slane %v2335, %v2358
        %v2360 = vlaneseq
        %v2361 = vshrl.u32 %v2360, 7
        %v2362 = vsub.s32 0, %v2361
        %v2363 = vrot.slane %v2336, %v2362
        %v2364 = vlaneseq
        %v2365 = vshrl.u32 %v2364, 7
        %v2366 = vsub.s32 0, %v2365
        %v2367 = vrot.slane %v2337, %v2366
        %v2368 = vlaneseq
        %v2369 = vshrl.u32 %v2368, 7
        %v2370 = vsub.s32 0, %v2369
        %v2371 = vrot.slane %v2338, %v2370
        %v2372 = vlaneseq
        %v2373 = vshrl.u32 %v2372, 7
        %v2374 = vsub.s32 0, %v2373
        %v2375 = vrot.slane %v2339, %v2374
        %v2376 = vlaneseq
        %v2377 = vshrl.u32 %v2376, 7
        %v2378 = vsub.s32 0, %v2377
        %v2379 = vrot.slane %v2340, %v2378
        %v2380 = vlaneseq
        %v2381 = vshrl.u32 %v2380, 7
        %v2382 = vsub.s32 0, %v2381
        %v2383 = vrot.slane %v2341, %v2382
        %v2384 = vlaneseq
        %v2385 = vshrl.u32 %v2384, 7
        %v2386 = vsub.s32 0, %v2385
        %v2387 = vrot.slane %v2342, %v2386
        %v2397 = vmul.f32 %v2246, %v2355
        %v2398 = vmul.f32 %v2251, %v2355
        %v2399 = vmul.f32 %v2256, %v2359
        %v2400 = vmul.f32 %v2261, %v2359
        %v2401 = vmul.f32 %v2266, %v2363
        %v2402 = vmul.f32 %v2271, %v2363
        %v2403 = vmul.f32 %v2276, %v2367
        %v2404 = vmul.f32 %v2281, %v2367
        %v2405 = vmul.f32 %v2286, %v2371
        %v2406 = vmul.f32 %v2291, %v2371
        %v2407 = vmul.f32 %v2296, %v2375
        %v2408 = vmul.f32 %v2301, %v2375
        %v2409 = vmul.f32 %v2306, %v2379
        %v2410 = vmul.f32 %v2311, %v2379
        %v2411 = vmul.f32 %v2316, %v2383
        %v2412 = vmul.f32 %v2321, %v2383
        %v2413 = vmul.f32 %v2326, %v2387
        %v2414 = vmul.f32 %v2331, %v2387
        %vm2415 = vcmask 392192
        %v2416 = vsel %vm2415, %v2397, 0.0
        %v2417 = vsel %vm2415, %v2399, 0.0
        %v2418 = vadd.f32 %v2416, %v2417
        %v2419 = vsel %vm2415, %v2401, 0.0
        %v2420 = vadd.f32 %v2418, %v2419
        %v2421 = vsel %vm2415, %v2403, 0.0
        %v2422 = vadd.f32 %v2420, %v2421
        %v2423 = vsel %vm2415, %v2405, 0.0
        %v2424 = vadd.f32 %v2422, %v2423
        %v2425 = vsel %vm2415, %v2407, 0.0
        %v2426 = vadd.f32 %v2424, %v2425
        %v2427 = vsel %vm2415, %v2409, 0.0
        %v2428 = vadd.f32 %v2426, %v2427
        %v2429 = vsel %vm2415, %v2411, 0.0
        %v2430 = vadd.f32 %v2428, %v2429
        %v2431 = vsel %vm2415, %v2413, 0.0
        %v2432 = vadd.f32 %v2430, %v2431
        %v2433 = vsel %vm2415, %v2398, 0.0
        %v2434 = vsel %vm2415, %v2400, 0.0
        %v2435 = vadd.f32 %v2433, %v2434
        %v2436 = vsel %vm2415, %v2402, 0.0
        %v2437 = vadd.f32 %v2435, %v2436
        %v2438 = vsel %vm2415, %v2404, 0.0
        %v2439 = vadd.f32 %v2437, %v2438
        %v2440 = vsel %vm2415, %v2406, 0.0
        %v2441 = vadd.f32 %v2439, %v2440
        %v2442 = vsel %vm2415, %v2408, 0.0
        %v2443 = vadd.f32 %v2441, %v2442
        %v2444 = vsel %vm2415, %v2410, 0.0
        %v2445 = vadd.f32 %v2443, %v2444
        %v2446 = vsel %vm2415, %v2412, 0.0
        %v2447 = vadd.f32 %v2445, %v2446
        %v2448 = vsel %vm2415, %v2414, 0.0
        %v2449 = vadd.f32 %v2447, %v2448
        %v2450 = vld [vmem:[%s10] sm:$0x1]
        %v2452 = vlaneseq
        %v2453 = vshrl.u32 %v2452, 7
        %v2454 = vsub.s32 0, %v2453
        %v2455 = vrot.slane %v2450, %v2454
        %v2457 = vadd.f32 %v2432, %v2455
        %v2458 = vadd.f32 %v2449, %v2455
        %v2459 = vadd.f32 %v2457, 3.0
        %v2460 = vadd.f32 %v2458, 3.0
        %v2461 = vmax.f32 %v2459, 0.0
        %v2462 = vmax.f32 %v2460, 0.0
        %v2463 = vmin.f32 %v2461, 6.0
        %v2464 = vmin.f32 %v2462, 6.0
        %v2465 = vmul.f32 %v2457, %v2463
        %v2466 = vmul.f32 %v2458, %v2464
        %v2467 = vmul.f32 %v2465, 0.16666667
        %v2468 = vmul.f32 %v2466, 0.16666667
        %v2469 = vsel %vm2415, %v2467, 0.0
        %v2470 = vsel %vm2415, %v2468, 0.0
        %v2471 = vadd.f32 %v2469, %v2470
        %v2472 = vrot.slane %v2471, 4
        %v2473 = vadd.f32 %v2471, %v2472
        %v2474 = vrot.slane %v2473, 2
        %v2475 = vadd.f32 %v2473, %v2474
        %v2476 = vrot.slane %v2475, 1
        %v2477 = vadd.f32 %v2475, %v2476
        %v2478 = vrcp.pop 16.0
        %v2479 = vmul.f32 %v2477, %v2478
        %v2480 = vpack.c.bf16 %v2479, %v2479
        %v2481 = vld [vmem:[%s11] sm:$0xf]
        %v2482 = vld [vmem:[%s11 + $0x4] sm:$0xf]
        %v2483 = vld [vmem:[%s11 + $0x8] sm:$0xf]
        %v2484 = vld [vmem:[%s11 + $0xc] sm:$0xf]
        %v2485 = vld [vmem:[%s11 + $0x10] sm:$0xf]
        %v2486 = vld [vmem:[%s11 + $0x14] sm:$0xf]
        %v2487 = vld [vmem:[%s12] sm:$0x1]
        %v2494 = vunpack.c.l.b16 %v2481
        %v2495 = vunpack.c.l.b16 %v2482
        %v2496 = vunpack.c.l.b16 %v2483
        %v2497 = vunpack.c.l.b16 %v2484
        %v2498 = vunpack.c.l.b16 %v2485
        %v2499 = vunpack.c.l.b16 %v2486
        %v2500 = vpack.c.b16 %v2495, %v2494
        %v2501 = vpack.c.b16 %v2497, %v2496
        %v2502 = vpack.c.b16 %v2499, %v2498
        %v2507 = vsel %vm2415, %v2480, 0
        %2509 = vmatprep.subr.bf16.mxu0 0
        %2510 = vmatpush1.bf16.msra.mxu0 0
        %2511 = vmatprep.subr.bf16.mxu0 0
        %2512 = vmatpush1.bf16.msra.mxu0 0
        %2513 = vmatprep.subr.bf16.mxu0 0
        %2514 = vmatpush1.bf16.msra.mxu0 0
        %2515 = vmatprep.subr.bf16.mxu0 0
        %2516 = vmatpush1.bf16.msra.mxu0 0
        %2517 = vmatprep.subr.bf16.mxu0 0
        %2518 = vmatpush1.bf16.msra.mxu0 0
        %2519 = vmatprep.subr.bf16.mxu0 0
        %2520 = vmatpush1.bf16.msra.mxu0 %v2502
        %2521 = vmatprep.subr.bf16.mxu0 0
        %2522 = vmatpush1.bf16.msra.mxu0 %v2501
        %2523 = vmatprep.subr.bf16.mxu0 0
        %2524 = vmatpush1.bf16.msra.mxu0 %v2500
        %2525 = vmatprep.subr.bf16.mxu0 0
        %2526 = vmatpush2.bf16.msra.mxu0 0
        %2527 = vmatprep.subr.bf16.mxu0 0
        %2528 = vmatpush2.bf16.msra.mxu0 0
        %2529 = vmatprep.subr.bf16.mxu0 0
        %2530 = vmatpush2.bf16.msra.mxu0 0
        %2531 = vmatprep.subr.bf16.mxu0 0
        %2532 = vmatpush2.bf16.msra.mxu0 0
        %2533 = vmatprep.subr.bf16.mxu0 0
        %2534 = vmatpush2.bf16.msra.mxu0 0
        %2535 = vmatprep.subr.bf16.mxu0 0
        %2536 = vmatpush2.bf16.msra.mxu0 0
        %2537 = vmatprep.subr.bf16.mxu0 0
        %2538 = vmatpush2.bf16.msra.mxu0 0
        %2539 = vmatprep.subr.bf16.mxu0 0
        %2540 = vmatpush2.bf16.msra.mxu0 0
        %2541 = vmatprep.mubr.bf16.mxu0 0
        %2542 = vmatmul.mubr.bf16.gmra.mxu0 %v2507
        %v2543 = vpop.f32.mrf.mxu0
        %v2544 = vadd.f32 %v2487, %v2543
        %v2545 = vpop.f32.mrf.mxu0
        %v2546 = vpop.f32.mrf.mxu0
        %v2547 = vpop.f32.mrf.mxu0
        %2548 = vdwg.mxu0
        %v2549 = vmax.f32 %v2544, 0.0
        %v2550 = vpack.c.bf16 %v2549, %v2549
        %v2551 = vld [vmem:[%s13] sm:$0xf]
        %v2552 = vld [vmem:[%s13 + $0x4] sm:$0x3]
        %v2553 = vld [vmem:[%s14] sm:$0x1]
        %v2556 = vunpack.c.l.b16 %v2551
        %v2557 = vunpack.c.l.b16 %v2552
        %v2558 = vpack.c.b16 %v2557, %v2556
        %vm2559 = vcmask 97280
        %v2561 = vsel %vm2559, %v2550, 0
        %vm2563 = vcmask 1045504
        %v2565 = vsel %vm2563, %v2558, 0
        %2567 = vmatprep.subr.bf16.mxu0 0
        %2568 = vmatpush1.bf16.msra.mxu0 0
        %2569 = vmatprep.subr.bf16.mxu0 0
        %2570 = vmatpush1.bf16.msra.mxu0 0
        %2571 = vmatprep.subr.bf16.mxu0 0
        %2572 = vmatpush1.bf16.msra.mxu0 0
        %2573 = vmatprep.subr.bf16.mxu0 0
        %2574 = vmatpush1.bf16.msra.mxu0 0
        %2575 = vmatprep.subr.bf16.mxu0 0
        %2576 = vmatpush1.bf16.msra.mxu0 0
        %2577 = vmatprep.subr.bf16.mxu0 0
        %2578 = vmatpush1.bf16.msra.mxu0 0
        %2579 = vmatprep.subr.bf16.mxu0 0
        %2580 = vmatpush1.bf16.msra.mxu0 0
        %2581 = vmatprep.subr.bf16.mxu0 0
        %2582 = vmatpush1.bf16.msra.mxu0 %v2565
        %2583 = vmatprep.subr.bf16.mxu0 0
        %2584 = vmatpush2.bf16.msra.mxu0 0
        %2585 = vmatprep.subr.bf16.mxu0 0
        %2586 = vmatpush2.bf16.msra.mxu0 0
        %2587 = vmatprep.subr.bf16.mxu0 0
        %2588 = vmatpush2.bf16.msra.mxu0 0
        %2589 = vmatprep.subr.bf16.mxu0 0
        %2590 = vmatpush2.bf16.msra.mxu0 0
        %2591 = vmatprep.subr.bf16.mxu0 0
        %2592 = vmatpush2.bf16.msra.mxu0 0
        %2593 = vmatprep.subr.bf16.mxu0 0
        %2594 = vmatpush2.bf16.msra.mxu0 0
        %2595 = vmatprep.subr.bf16.mxu0 0
        %2596 = vmatpush2.bf16.msra.mxu0 0
        %2597 = vmatprep.subr.bf16.mxu0 0
        %2598 = vmatpush2.bf16.msra.mxu0 0
        %2599 = vmatprep.mubr.bf16.mxu0 0
        %2600 = vmatmul.mubr.bf16.gmra.mxu0 %v2561
        %v2601 = vpop.f32.mrf.mxu0
        %v2602 = vadd.f32 %v2553, %v2601
        %v2603 = vpop.f32.mrf.mxu0
        %v2604 = vpop.f32.mrf.mxu0
        %v2605 = vpop.f32.mrf.mxu0
        %2606 = vdwg.mxu0
        %v2607 = vadd.f32 %v2602, 3.0
        %v2608 = vmax.f32 %v2607, 0.0
        %v2609 = vmin.f32 %v2608, 6.0
        %v2610 = vmul.f32 %v2609, 0.16666667
        %v2611 = vlaneseq
        %v2612 = vshrl.u32 %v2611, 7
        %v2613 = vsub.s32 0, %v2612
        %v2614 = vrot.slane %v2610, %v2613
        %v2615 = vmul.f32 %v2467, %v2614
        %v2616 = vmul.f32 %v2468, %v2614
        %v2617 = vpack.c.bf16 %v2616, %v2615
        %v2618 = vld [vmem:[%s15] sm:$0xf]
        %v2619 = vld [vmem:[%s15 + $0x4] sm:$0xf]
        %v2620 = vld [vmem:[%s15 + $0x8] sm:$0xf]
        %v2621 = vld [vmem:[%s15 + $0xc] sm:$0xf]
        %v2622 = vld [vmem:[%s15 + $0x10] sm:$0xf]
        %v2623 = vld [vmem:[%s15 + $0x14] sm:$0xf]
        %v2624 = vld [vmem:[%s16] sm:$0x1]
        %v2626 = vlaneseq
        %v2627 = vshrl.u32 %v2626, 7
        %v2628 = vsub.s32 0, %v2627
        %v2629 = vrot.slane %v2624, %v2628
        %v2637 = vunpack.c.l.b16 %v2618
        %v2638 = vunpack.c.l.b16 %v2619
        %v2639 = vunpack.c.l.b16 %v2620
        %v2640 = vunpack.c.l.b16 %v2621
        %v2641 = vunpack.c.l.b16 %v2622
        %v2642 = vunpack.c.l.b16 %v2623
        %v2643 = vpack.c.b16 %v2638, %v2637
        %v2644 = vpack.c.b16 %v2640, %v2639
        %v2645 = vpack.c.b16 %v2642, %v2641
        %v2650 = vsel %vm2415, %v2617, 0
        %2652 = vmatprep.subr.bf16.mxu0 0
        %2653 = vmatpush1.bf16.msra.mxu0 0
        %2654 = vmatprep.subr.bf16.mxu0 0
        %2655 = vmatpush1.bf16.msra.mxu0 0
        %2656 = vmatprep.subr.bf16.mxu0 0
        %2657 = vmatpush1.bf16.msra.mxu0 0
        %2658 = vmatprep.subr.bf16.mxu0 0
        %2659 = vmatpush1.bf16.msra.mxu0 0
        %2660 = vmatprep.subr.bf16.mxu0 0
        %2661 = vmatpush1.bf16.msra.mxu0 0
        %2662 = vmatprep.subr.bf16.mxu0 0
        %2663 = vmatpush1.bf16.msra.mxu0 %v2645
        %2664 = vmatprep.subr.bf16.mxu0 0
        %2665 = vmatpush1.bf16.msra.mxu0 %v2644
        %2666 = vmatprep.subr.bf16.mxu0 0
        %2667 = vmatpush1.bf16.msra.mxu0 %v2643
        %2668 = vmatprep.subr.bf16.mxu0 0
        %2669 = vmatpush2.bf16.msra.mxu0 0
        %2670 = vmatprep.subr.bf16.mxu0 0
        %2671 = vmatpush2.bf16.msra.mxu0 0
        %2672 = vmatprep.subr.bf16.mxu0 0
        %2673 = vmatpush2.bf16.msra.mxu0 0
        %2674 = vmatprep.subr.bf16.mxu0 0
        %2675 = vmatpush2.bf16.msra.mxu0 0
        %2676 = vmatprep.subr.bf16.mxu0 0
        %2677 = vmatpush2.bf16.msra.mxu0 0
        %2678 = vmatprep.subr.bf16.mxu0 0
        %2679 = vmatpush2.bf16.msra.mxu0 0
        %2680 = vmatprep.subr.bf16.mxu0 0
        %2681 = vmatpush2.bf16.msra.mxu0 0
        %2682 = vmatprep.subr.bf16.mxu0 0
        %2683 = vmatpush2.bf16.msra.mxu0 0
        %2684 = vmatprep.mubr.bf16.mxu0 0
        %2685 = vmatmul.mubr.bf16.gmra.mxu0 %v2650
        %v2686 = vpop.f32.mrf.mxu0
        %v2687 = vadd.f32 %v2629, %v2686
        %v2688 = vpop.f32.mrf.mxu0
        %v2689 = vpop.f32.mrf.mxu0
        %v2690 = vadd.f32 %v2629, %v2689
        %v2691 = vpop.f32.mrf.mxu0
        %2692 = vdwg.mxu0
        %v2693 = vadd.f32 %v2687, 3.0
        %v2694 = vadd.f32 %v2690, 3.0
        %v2695 = vmax.f32 %v2693, 0.0
        %v2696 = vmax.f32 %v2694, 0.0
        %v2697 = vmin.f32 %v2695, 6.0
        %v2698 = vmin.f32 %v2696, 6.0
        %v2699 = vmul.f32 %v2687, %v2697
        %v2700 = vmul.f32 %v2690, %v2698
        %v2701 = vmul.f32 %v2699, 0.16666667
        %v2702 = vmul.f32 %v2700, 0.16666667
        %v2703 = vsel %vm2124, %v2701, 0.0
        %v2704 = vsel %vm2124, %v2702, 0.0
        %v2705 = vadd.f32 %v2703, %v2704
        %v2706 = vrot.slane %v2705, 4
        %v2707 = vadd.f32 %v2705, %v2706
        %v2708 = vrot.slane %v2707, 2
        %v2709 = vadd.f32 %v2707, %v2708
        %v2710 = vrot.slane %v2709, 1
        %v2711 = vadd.f32 %v2709, %v2710
        %v2712 = vmul.f32 %v2711, %v2478
        %v2713 = vpack.c.bf16 %v2712, %v2712
        %v2714 = vld [vmem:[%s17] sm:$0xf]
        %v2715 = vld [vmem:[%s17 + $0x4] sm:$0xf]
        %v2716 = vld [vmem:[%s17 + $0x8] sm:$0xf]
        %v2717 = vld [vmem:[%s17 + $0xc] sm:$0xf]
        %v2718 = vld [vmem:[%s17 + $0x10] sm:$0xf]
        %v2719 = vld [vmem:[%s17 + $0x14] sm:$0xf]
        %v2720 = vld [vmem:[%s17 + $0x18] sm:$0xf]
        %v2721 = vld [vmem:[%s17 + $0x1c] sm:$0xf]
        %v2722 = vld [vmem:[%s18] sm:$0x1]
        %v2731 = vunpack.c.l.b16 %v2714
        %v2732 = vunpack.c.l.b16 %v2715
        %v2733 = vunpack.c.l.b16 %v2716
        %v2734 = vunpack.c.l.b16 %v2717
        %v2735 = vunpack.c.l.b16 %v2718
        %v2736 = vunpack.c.l.b16 %v2719
        %v2737 = vunpack.c.l.b16 %v2720
        %v2738 = vunpack.c.l.b16 %v2721
        %v2739 = vpack.c.b16 %v2732, %v2731
        %v2740 = vpack.c.b16 %v2734, %v2733
        %v2741 = vpack.c.b16 %v2736, %v2735
        %v2742 = vpack.c.b16 %v2738, %v2737
        %v2748 = vsel %vm2124, %v2713, 0
        %2750 = vmatprep.subr.bf16.mxu0 0
        %2751 = vmatpush1.bf16.msra.mxu0 0
        %2752 = vmatprep.subr.bf16.mxu0 0
        %2753 = vmatpush1.bf16.msra.mxu0 0
        %2754 = vmatprep.subr.bf16.mxu0 0
        %2755 = vmatpush1.bf16.msra.mxu0 0
        %2756 = vmatprep.subr.bf16.mxu0 0
        %2757 = vmatpush1.bf16.msra.mxu0 0
        %2758 = vmatprep.subr.bf16.mxu0 0
        %2759 = vmatpush1.bf16.msra.mxu0 %v2742
        %2760 = vmatprep.subr.bf16.mxu0 0
        %2761 = vmatpush1.bf16.msra.mxu0 %v2741
        %2762 = vmatprep.subr.bf16.mxu0 0
        %2763 = vmatpush1.bf16.msra.mxu0 %v2740
        %2764 = vmatprep.subr.bf16.mxu0 0
        %2765 = vmatpush1.bf16.msra.mxu0 %v2739
        %2766 = vmatprep.subr.bf16.mxu0 0
        %2767 = vmatpush2.bf16.msra.mxu0 0
        %2768 = vmatprep.subr.bf16.mxu0 0
        %2769 = vmatpush2.bf16.msra.mxu0 0
        %2770 = vmatprep.subr.bf16.mxu0 0
        %2771 = vmatpush2.bf16.msra.mxu0 0
        %2772 = vmatprep.subr.bf16.mxu0 0
        %2773 = vmatpush2.bf16.msra.mxu0 0
        %2774 = vmatprep.subr.bf16.mxu0 0
        %2775 = vmatpush2.bf16.msra.mxu0 0
        %2776 = vmatprep.subr.bf16.mxu0 0
        %2777 = vmatpush2.bf16.msra.mxu0 0
        %2778 = vmatprep.subr.bf16.mxu0 0
        %2779 = vmatpush2.bf16.msra.mxu0 0
        %2780 = vmatprep.subr.bf16.mxu0 0
        %2781 = vmatpush2.bf16.msra.mxu0 0
        %2782 = vmatprep.mubr.bf16.mxu0 0
        %2783 = vmatmul.mubr.bf16.gmra.mxu0 %v2748
        %v2784 = vpop.f32.mrf.mxu0
        %v2785 = vadd.f32 %v2722, %v2784
        %v2786 = vpop.f32.mrf.mxu0
        %v2787 = vpop.f32.mrf.mxu0
        %v2788 = vpop.f32.mrf.mxu0
        %2789 = vdwg.mxu0
        %v2790 = vadd.f32 %v2785, 3.0
        %v2791 = vmax.f32 %v2790, 0.0
        %v2792 = vmin.f32 %v2791, 6.0
        %v2793 = vmul.f32 %v2785, %v2792
        %v2794 = vmul.f32 %v2793, 0.16666667
        %v2795 = vmul.f32 %v2794, %v2794
        %vm2796 = vcmask 1040384
        %v2797 = vsel %vm2796, %v2795, 0.0
        %2798 = vadd.xlane.f32.xlu0 %v2797
        %v2799 = vpop.xlane.xlu0 %2798
        %v2800 = vmax.f32 %v2799, 1e-24
        %v2801 = vrsqrt.pop %v2800
        %v2802 = vmul.f32 %v2794, %v2801
        %2803 = vst [vmem:[%s594] sm:$0x1] %v2802
        %s2804 = sand.u32 %s445, 1
        %s2805 = scalar_lea.sflag [#allocation3], %s2804
        %s2806 = sand.u32 %s445, 1
        %s2807 = scalar_lea.vmem [#allocation2], %s2806
        // Predicated region
        $region97: #{timm_mobilenet_forward.1} parent=95 // pred_check
          %p2808 = pneg %p455
        $region98: #{timm_mobilenet_forward.1} parent=95 // pred_check_branch
          %2810 = sbr.rel (%p2808) target = $region100
        $region99: #{timm_mobilenet_forward.1} parent=95 // pred_region
          %s2812 = ssub.s32 16, 16
          %2813 = vsyncadd %s2805, %s2812
          %s2814 = smul.addr %s33, 16
          %s2815 = scalar_lea.hbm %s19, %s2814
          %s2817 = sshll.u32 %s2807, 4
          %s2818 = int_to_ptr.vmem [resolvable:$true] %s2817
          %2820 = dma.vmem_to_hbm [thread:$0]  %s2818, 16, %s2815, %s2805
        $region100: #{timm_mobilenet_forward.1} parent=95 // pred_fallthru
          _
      $region96: #{timm_mobilenet_forward.1} parent=5 // pred_fallthru
        _
      %p2821 = scmp.le.s32.totalorder 2, %s28
      // Predicated region
      $region101: #{timm_mobilenet_forward.1} parent=5 // pred_check
        %p2822 = pneg %p2821
      $region102: #{timm_mobilenet_forward.1} parent=5 // pred_check_branch
        %2824 = sbr.rel (%p2822) target = $region104
      $region103: #{timm_mobilenet_forward.1} parent=5 // pred_region
        %s2825 = ssub.s32 %s28, 2
        // Predicated region
        $region105: #{timm_mobilenet_forward.1} parent=103 // pred_check
          %p2826 = pneg %p461
        $region106: #{timm_mobilenet_forward.1} parent=103 // pred_check_branch
          %2828 = sbr.rel (%p2826) target = $region108
        $region107: #{timm_mobilenet_forward.1} parent=103 // pred_region
          %s2829 = sand.u32 %s446, 1
          %s2830 = scalar_lea.sflag [#allocation3], %s2829
          %s2831 = sand.u32 %s446, 1
          %s2832 = scalar_lea.vmem [#allocation2], %s2831
          %2833 = dma.done %s2830, 16
        $region108: #{timm_mobilenet_forward.1} parent=103 // pred_fallthru
          _
      $region104: #{timm_mobilenet_forward.1} parent=5 // pred_fallthru
        _
    $region6: #{timm_mobilenet_forward.1} parent=1 // loop_footer
      %s32 = sadd.s32 1, %s28
    $region7: #{timm_mobilenet_forward.1} parent=1 // loop_footer_branch
      %27 = sbr.rel target = $region3
    $region8: #{timm_mobilenet_forward.1} parent=1 // loop_exit
      _
    %2834 = vsyncpa [#allocation3], 1
    %s2835 = scalar_lea.sflag [#allocation3], 1
    %2836 = vsyncpa %s2835, 1

</llo_original>
